<compile_context>
chip_gen: v7x
topology: tpu7x:2x2x1
jax: 0.10.0
libtpu: 0.0.40
codegen_flags: <defaults>
</compile_context>

<pallas_src>
from functools import partial

import jax
import jax.numpy as jnp
from jax.experimental import pallas as pl
from jax.experimental.pallas import tpu as pltpu


def _residual_block_kernel(alpha_ref, x_ref, w1_ref, b1_ref, w2_ref, b2_ref, o_ref,
                           mid_ref, patch_ref, *, H, W, KH, KW, C, pad):
    # x_ref     : (1, H+2p, W+2p, C) padded f32 input for one batch element (VMEM)
    # w{1,2}_ref: (KH*KW*C, C)       im2col-ordered, BN-folded weights (bf16, VMEM)
    # b{1,2}_ref: (1, C)             BN-folded bias (f32, VMEM)
    # alpha_ref : (1,)               PReLU slope (f32, SMEM)
    # o_ref     : (1, H, W, C)       block output (f32)
    # mid_ref   : (H+2p, W+2p, C)    zero-padded conv1 activation (f32 scratch)
    # patch_ref : (H*W, KH*KW*C)     lane-dense im2col patch buffer (bf16 scratch, reused by both convs)
    taps = [(kh, kw) for kh in range(KH) for kw in range(KW)]

    def conv(src_hwc_3d, w_ref, b_ref):
        """In-kernel im2col -> single K = KH*KW*C MXU matmul -> (H*W, C) f32 + bias."""
        for t, (kh, kw) in enumerate(taps):
            tap = src_hwc_3d[kh:kh + H, kw:kw + W, :].reshape(H * W, C)
            patch_ref[:, t * C:(t + 1) * C] = tap.astype(patch_ref.dtype)
        acc = jnp.dot(patch_ref[...], w_ref[...], preferred_element_type=jnp.float32)
        return acc + b_ref[...]                             # conv bias + folded BN bias (f32)

    # ---- conv1 + BN1 + PReLU ----
    acc1 = conv(x_ref[0], w1_ref, b1_ref)
    alpha = alpha_ref[0]
    act1 = jnp.where(acc1 > 0, acc1, alpha * acc1)          # PReLU (single shared alpha)

    # ---- padded intermediate kept on-chip: border zeros == 'same' padding for conv2 ----
    mid_ref[...] = jnp.zeros_like(mid_ref)
    mid_ref[pad:pad + H, pad:pad + W, :] = act1.reshape(H, W, C).astype(mid_ref.dtype)

    # ---- conv2 + BN2 (same shared patch buffer; act1 is already safely in mid_ref) ----
    acc2 = conv(mid_ref[...], w2_ref, b2_ref)

    # ---- residual add (exact f32: x_ref is kept in f32) ----
    res = x_ref[0, pad:pad + H, pad:pad + W, :].reshape(H * W, C)
    o_ref[...] = (acc2 + res).reshape(1, H, W, C).astype(o_ref.dtype)


# TODO(synk): BatchNorm2d is implemented in inference (eval) mode — running stats folded into the
# convolutions; training-mode batch statistics are not computed in-kernel.
def _fold_bn(w, b, gamma, beta, mean, var, eps=1e-5):
    """Fold eval-mode BatchNorm2d into the preceding conv's weight/bias (exact in f32)."""
    scale = gamma / jnp.sqrt(var + eps)                     # (Cout,)
    w_f = w * scale[:, None, None, None]                    # (Cout, Cin, KH, KW)
    b_f = (b - mean) * scale + beta
    return w_f, b_f


def residual_block(x_nchw, w1, b1, bn1, w2, b2, bn2, alpha, *,
                   kernel_size=3, compute_dtype=jnp.bfloat16):
    """Forward pass of ResidualBlock. Input/output NCHW (PyTorch convention). bn = (gamma, beta, mean, var)."""
    N, C, H, W = x_nchw.shape
    KH = KW = kernel_size
    pad = kernel_size // 2
    Hp, Wp = H + 2 * pad, W + 2 * pad

    # Fold BN and reorder weights to the in-kernel im2col layout:
    # (Cout, Cin, KH, KW) -> (KH, KW, Cin, Cout) -> (KH*KW*Cin, Cout), matching tap order (kh, kw, cin).
    def prep_w(w):
        return jnp.transpose(w, (2, 3, 1, 0)).reshape(KH * KW * C, C).astype(compute_dtype)

    w1f, b1f = _fold_bn(w1, b1, *bn1)
    w2f, b2f = _fold_bn(w2, b2, *bn2)
    w1m, w2m = prep_w(w1f), prep_w(w2f)
    b1v = b1f.reshape(1, C).astype(jnp.float32)
    b2v = b2f.reshape(1, C).astype(jnp.float32)
    alpha_arr = jnp.asarray(alpha, jnp.float32).reshape(1)

    # NCHW -> NHWC (channels on lanes) + explicit same-padding. Kept f32 so the residual path is exact;
    # activations are cast to bf16 inside the kernel when the im2col patches are built.
    # TODO(synk): in a full SRResNet, keep NHWC end-to-end to drop these boundary transposes.
    xh = jnp.transpose(x_nchw, (0, 2, 3, 1))
    x_p = jnp.pad(xh, ((0, 0), (pad, pad), (pad, pad), (0, 0)))

    kernel = partial(_residual_block_kernel, H=H, W=W, KH=KH, KW=KW, C=C, pad=pad)

    out_nhwc = pl.pallas_call(
        kernel,
        out_shape=jax.ShapeDtypeStruct((N, H, W, C), x_nchw.dtype),
        grid_spec=pltpu.PrefetchScalarGridSpec(
            num_scalar_prefetch=0,
            grid=(N,),
            in_specs=[
                pl.BlockSpec(memory_space=pltpu.MemorySpace.SMEM),          # alpha (scalar)
                pl.BlockSpec((1, Hp, Wp, C), lambda n: (n, 0, 0, 0)),       # padded input, per batch
                pl.BlockSpec((KH * KW * C, C), lambda n: (0, 0)),           # w1 (im2col, BN-folded)
                pl.BlockSpec((1, C), lambda n: (0, 0)),                     # b1
                pl.BlockSpec((KH * KW * C, C), lambda n: (0, 0)),           # w2
                pl.BlockSpec((1, C), lambda n: (0, 0)),                     # b2
            ],
            out_specs=pl.BlockSpec((1, H, W, C), lambda n: (n, 0, 0, 0)),
            scratch_shapes=[
                pltpu.VMEM((Hp, Wp, C), jnp.float32),                       # padded conv1 activation
                pltpu.VMEM((H * W, KH * KW * C), compute_dtype),            # shared im2col patch buffer
            ],
        ),
        compiler_params=pltpu.CompilerParams(
            dimension_semantics=("parallel",),        # batch axis shards across TCs on v7x
            vmem_limit_bytes=32 * 1024 * 1024,
        ),
    )(alpha_arr, x_p, w1m, b1v, w2m, b2v)

    return jnp.transpose(out_nhwc, (0, 3, 1, 2))      # back to NCHW


def _reference(x, w1, b1, bn1, w2, b2, bn2, alpha, eps=1e-5):
    """Pure-JAX f32 reference of the PyTorch forward (eval-mode BN), NCHW throughout."""
    def conv(z, w, b):
        y = jax.lax.conv_general_dilated(z, w, (1, 1), "SAME",
                                         dimension_numbers=("NCHW", "OIHW", "NCHW"))
        return y + b.reshape(1, -1, 1, 1)

    def bn(z, p):
        g, be, m, v = p
        inv = 1.0 / jnp.sqrt(v + eps)
        return (z - m.reshape(1, -1, 1, 1)) * (g * inv).reshape(1, -1, 1, 1) + be.reshape(1, -1, 1, 1)

    out = bn(conv(x, w1, b1), bn1)
    out = jnp.where(out > 0, out, alpha * out)        # PReLU
    out = bn(conv(out, w2, b2), bn2)
    return out + x


if __name__ == "__main__":
    # Small deterministic config matching the module defaults: kernel_size=3, n_channels=64.
    kernel_size, n_channels = 3, 64
    N, H, W = 2, 16, 16

    key = jax.random.PRNGKey(0)
    ks = jax.random.split(key, 13)
    x  = jax.random.normal(ks[0], (N, n_channels, H, W), jnp.float32)
    w1 = 0.05 * jax.random.normal(ks[1], (n_channels, n_channels, kernel_size, kernel_size), jnp.float32)
    b1 = 0.10 * jax.random.normal(ks[2], (n_channels,), jnp.float32)
    w2 = 0.05 * jax.random.normal(ks[3], (n_channels, n_channels, kernel_size, kernel_size), jnp.float32)
    b2 = 0.10 * jax.random.normal(ks[4], (n_channels,), jnp.float32)
    bn1 = (1.0 + 0.1 * jax.random.normal(ks[5], (n_channels,), jnp.float32),   # gamma
           0.1 * jax.random.normal(ks[6], (n_channels,), jnp.float32),         # beta
           0.1 * jax.random.normal(ks[7], (n_channels,), jnp.float32),         # running_mean
           0.5 + jax.random.uniform(ks[8], (n_channels,), jnp.float32))        # running_var
    bn2 = (1.0 + 0.1 * jax.random.normal(ks[9], (n_channels,), jnp.float32),
           0.1 * jax.random.normal(ks[10], (n_channels,), jnp.float32),
           0.1 * jax.random.normal(ks[11], (n_channels,), jnp.float32),
           0.5 + jax.random.uniform(ks[12], (n_channels,), jnp.float32))
    alpha = jnp.float32(0.25)                          # nn.PReLU() default init

    out = residual_block(x, w1, b1, bn1, w2, b2, bn2, alpha, kernel_size=kernel_size)
    out = jax.block_until_ready(out)

    ref = _reference(x, w1, b1, bn1, w2, b2, bn2, alpha)
    assert out.shape == x.shape
    err = float(jnp.max(jnp.abs(out - ref)))
    assert err < 1e-1, f"max abs error too large: {err}"   # bf16 matmul inputs, f32 accumulation

    print("KERNEL_OK")
</pallas_src>

<mosaic_0001>
module attributes {stable_mosaic.version = 11 : i64} {
  func.func @_residual_block_kernel(%arg0: i32, %arg1: memref<1xf32, #tpu.memory_space<smem>>, %arg2: memref<1x18x18x64xf32, #tpu.memory_space<vmem>>, %arg3: memref<576x64xbf16, #tpu.memory_space<vmem>>, %arg4: memref<1x64xf32, #tpu.memory_space<vmem>>, %arg5: memref<576x64xbf16, #tpu.memory_space<vmem>>, %arg6: memref<1x64xf32, #tpu.memory_space<vmem>>, %arg7: memref<1x16x16x64xf32, #tpu.memory_space<vmem>>, %arg8: memref<18x18x64xf32, #tpu.memory_space<vmem>>, %arg9: memref<256x576xbf16, #tpu.memory_space<vmem>>) attributes {dimension_semantics = [#tpu.dimension_semantics<parallel>], iteration_bounds = array<i64: 2>, scalar_prefetch = 0 : i64, scratch_operands = 2 : i64, tpu.core_type = #tpu.core_type<tc>, window_params = [{transform_indices = @transform_0, window_bounds = array<i64: 1>}, {transform_indices = @transform_1, window_bounds = array<i64: 1, 18, 18, 64>}, {pipeline_mode = #tpu.pipeline_mode<synchronous>, transform_indices = @transform_2, window_bounds = array<i64: 576, 64>}, {pipeline_mode = #tpu.pipeline_mode<synchronous>, transform_indices = @transform_3, window_bounds = array<i64: 1, 64>}, {pipeline_mode = #tpu.pipeline_mode<synchronous>, transform_indices = @transform_4, window_bounds = array<i64: 576, 64>}, {pipeline_mode = #tpu.pipeline_mode<synchronous>, transform_indices = @transform_5, window_bounds = array<i64: 1, 64>}, {transform_indices = @transform_6, window_bounds = array<i64: 1, 16, 16, 64>}]} {
    %c0 = arith.constant 0 : index
    %c0_0 = arith.constant 0 : index
    %c0_1 = arith.constant 0 : index
    %c0_2 = arith.constant 0 : index
    %0 = vector.load %arg2[%c0, %c0_0, %c0_1, %c0_2] : memref<1x18x18x64xf32, #tpu.memory_space<vmem>>, vector<1x18x18x64xf32>
    %1 = vector.shape_cast %0 : vector<1x18x18x64xf32> to vector<18x18x64xf32>
    %2 = vector.extract_strided_slice %1 {offsets = [0, 0, 0], sizes = [16, 16, 64], strides = [1, 1, 1]} : vector<18x18x64xf32> to vector<16x16x64xf32>
    %3 = vector.shape_cast %2 : vector<16x16x64xf32> to vector<256x64xf32>
    %4 = arith.truncf %3 : vector<256x64xf32> to vector<256x64xbf16>
    %c0_3 = arith.constant 0 : index
    %c0_4 = arith.constant 0 : index
    %5 = vector.load %arg9[%c0_3, %c0_4] : memref<256x576xbf16, #tpu.memory_space<vmem>>, vector<256x64xbf16>
    tpu.vector_store %arg9[%c0_3, %c0_4], %4 {strides = array<i32>} : memref<256x576xbf16, #tpu.memory_space<vmem>>, vector<256x64xbf16>,
    %6 = vector.extract_strided_slice %1 {offsets = [0, 1, 0], sizes = [16, 16, 64], strides = [1, 1, 1]} : vector<18x18x64xf32> to vector<16x16x64xf32>
    %7 = vector.shape_cast %6 : vector<16x16x64xf32> to vector<256x64xf32>
    %8 = arith.truncf %7 : vector<256x64xf32> to vector<256x64xbf16>
    %c0_5 = arith.constant 0 : index
    %c64 = arith.constant 64 : index
    %9 = vector.load %arg9[%c0_5, %c64] : memref<256x576xbf16, #tpu.memory_space<vmem>>, vector<256x64xbf16>
    tpu.vector_store %arg9[%c0_5, %c64], %8 {strides = array<i32>} : memref<256x576xbf16, #tpu.memory_space<vmem>>, vector<256x64xbf16>,
    %10 = vector.extract_strided_slice %1 {offsets = [0, 2, 0], sizes = [16, 16, 64], strides = [1, 1, 1]} : vector<18x18x64xf32> to vector<16x16x64xf32>
    %11 = vector.shape_cast %10 : vector<16x16x64xf32> to vector<256x64xf32>
    %12 = arith.truncf %11 : vector<256x64xf32> to vector<256x64xbf16>
    %c0_6 = arith.constant 0 : index
    %c128 = arith.constant 128 : index
    %13 = vector.load %arg9[%c0_6, %c128] : memref<256x576xbf16, #tpu.memory_space<vmem>>, vector<256x64xbf16>
    tpu.vector_store %arg9[%c0_6, %c128], %12 {strides = array<i32>} : memref<256x576xbf16, #tpu.memory_space<vmem>>, vector<256x64xbf16>,
    %14 = vector.extract_strided_slice %1 {offsets = [1, 0, 0], sizes = [16, 16, 64], strides = [1, 1, 1]} : vector<18x18x64xf32> to vector<16x16x64xf32>
    %15 = vector.shape_cast %14 : vector<16x16x64xf32> to vector<256x64xf32>
    %16 = arith.truncf %15 : vector<256x64xf32> to vector<256x64xbf16>
    %c0_7 = arith.constant 0 : index
    %c192 = arith.constant 192 : index
    %17 = vector.load %arg9[%c0_7, %c192] : memref<256x576xbf16, #tpu.memory_space<vmem>>, vector<256x64xbf16>
    tpu.vector_store %arg9[%c0_7, %c192], %16 {strides = array<i32>} : memref<256x576xbf16, #tpu.memory_space<vmem>>, vector<256x64xbf16>,
    %18 = vector.extract_strided_slice %1 {offsets = [1, 1, 0], sizes = [16, 16, 64], strides = [1, 1, 1]} : vector<18x18x64xf32> to vector<16x16x64xf32>
    %19 = vector.shape_cast %18 : vector<16x16x64xf32> to vector<256x64xf32>
    %20 = arith.truncf %19 : vector<256x64xf32> to vector<256x64xbf16>
    %c0_8 = arith.constant 0 : index
    %c256 = arith.constant 256 : index
    %21 = vector.load %arg9[%c0_8, %c256] : memref<256x576xbf16, #tpu.memory_space<vmem>>, vector<256x64xbf16>
    tpu.vector_store %arg9[%c0_8, %c256], %20 {strides = array<i32>} : memref<256x576xbf16, #tpu.memory_space<vmem>>, vector<256x64xbf16>,
    %22 = vector.extract_strided_slice %1 {offsets = [1, 2, 0], sizes = [16, 16, 64], strides = [1, 1, 1]} : vector<18x18x64xf32> to vector<16x16x64xf32>
    %23 = vector.shape_cast %22 : vector<16x16x64xf32> to vector<256x64xf32>
    %24 = arith.truncf %23 : vector<256x64xf32> to vector<256x64xbf16>
    %c0_9 = arith.constant 0 : index
    %c320 = arith.constant 320 : index
    %25 = vector.load %arg9[%c0_9, %c320] : memref<256x576xbf16, #tpu.memory_space<vmem>>, vector<256x64xbf16>
    tpu.vector_store %arg9[%c0_9, %c320], %24 {strides = array<i32>} : memref<256x576xbf16, #tpu.memory_space<vmem>>, vector<256x64xbf16>,
    %26 = vector.extract_strided_slice %1 {offsets = [2, 0, 0], sizes = [16, 16, 64], strides = [1, 1, 1]} : vector<18x18x64xf32> to vector<16x16x64xf32>
    %27 = vector.shape_cast %26 : vector<16x16x64xf32> to vector<256x64xf32>
    %28 = arith.truncf %27 : vector<256x64xf32> to vector<256x64xbf16>
    %c0_10 = arith.constant 0 : index
    %c384 = arith.constant 384 : index
    %29 = vector.load %arg9[%c0_10, %c384] : memref<256x576xbf16, #tpu.memory_space<vmem>>, vector<256x64xbf16>
    tpu.vector_store %arg9[%c0_10, %c384], %28 {strides = array<i32>} : memref<256x576xbf16, #tpu.memory_space<vmem>>, vector<256x64xbf16>,
    %30 = vector.extract_strided_slice %1 {offsets = [2, 1, 0], sizes = [16, 16, 64], strides = [1, 1, 1]} : vector<18x18x64xf32> to vector<16x16x64xf32>
    %31 = vector.shape_cast %30 : vector<16x16x64xf32> to vector<256x64xf32>
    %32 = arith.truncf %31 : vector<256x64xf32> to vector<256x64xbf16>
    %c0_11 = arith.constant 0 : index
    %c448 = arith.constant 448 : index
    %33 = vector.load %arg9[%c0_11, %c448] : memref<256x576xbf16, #tpu.memory_space<vmem>>, vector<256x64xbf16>
    tpu.vector_store %arg9[%c0_11, %c448], %32 {strides = array<i32>} : memref<256x576xbf16, #tpu.memory_space<vmem>>, vector<256x64xbf16>,
    %34 = vector.extract_strided_slice %1 {offsets = [2, 2, 0], sizes = [16, 16, 64], strides = [1, 1, 1]} : vector<18x18x64xf32> to vector<16x16x64xf32>
    %35 = vector.shape_cast %34 : vector<16x16x64xf32> to vector<256x64xf32>
    %36 = arith.truncf %35 : vector<256x64xf32> to vector<256x64xbf16>
    %c0_12 = arith.constant 0 : index
    %c512 = arith.constant 512 : index
    %37 = vector.load %arg9[%c0_12, %c512] : memref<256x576xbf16, #tpu.memory_space<vmem>>, vector<256x64xbf16>
    tpu.vector_store %arg9[%c0_12, %c512], %36 {strides = array<i32>} : memref<256x576xbf16, #tpu.memory_space<vmem>>, vector<256x64xbf16>,
    %c0_13 = arith.constant 0 : index
    %c0_14 = arith.constant 0 : index
    %38 = vector.load %arg9[%c0_13, %c0_14] : memref<256x576xbf16, #tpu.memory_space<vmem>>, vector<256x576xbf16>
    %c0_15 = arith.constant 0 : index
    %c0_16 = arith.constant 0 : index
    %39 = vector.load %arg3[%c0_15, %c0_16] : memref<576x64xbf16, #tpu.memory_space<vmem>>, vector<576x64xbf16>
    %cst = arith.constant dense<0.000000e+00> : vector<256x64xf32>
    %40 = tpu.matmul %38, %39, %cst {dimension_numbers = #tpu.dot_dimension_numbers<[1], [0], [0], [1], [0, 0, 1, 1], [], []>} : vector<256x576xbf16>, vector<576x64xbf16>, vector<256x64xf32> -> vector<256x64xf32>
    %c0_17 = arith.constant 0 : index
    %c0_18 = arith.constant 0 : index
    %41 = vector.load %arg4[%c0_17, %c0_18] : memref<1x64xf32, #tpu.memory_space<vmem>>, vector<1x64xf32>
    %42 = vector.broadcast %41 : vector<1x64xf32> to vector<256x64xf32>
    %43 = arith.addf %40, %42 : vector<256x64xf32>
    %c0_19 = arith.constant 0 : index
    %44 = memref.load %arg1[%c0_19] : memref<1xf32, #tpu.memory_space<smem>>
    %cst_20 = arith.constant 0.000000e+00 : f32
    %45 = vector.broadcast %cst_20 : f32 to vector<256x64xf32>
    %46 = arith.cmpf ogt, %43, %45 : vector<256x64xf32>
    %47 = vector.broadcast %44 : f32 to vector<256x64xf32>
    %48 = arith.mulf %47, %43 : vector<256x64xf32>
    %49 = arith.select %46, %43, %48 : vector<256x64xi1>, vector<256x64xf32>
    %cst_21 = arith.constant 0.000000e+00 : f32
    %50 = vector.broadcast %cst_21 : f32 to vector<18x18x64xf32>
    %c0_22 = arith.constant 0 : index
    %c0_23 = arith.constant 0 : index
    %c0_24 = arith.constant 0 : index
    %51 = vector.load %arg8[%c0_22, %c0_23, %c0_24] : memref<18x18x64xf32, #tpu.memory_space<vmem>>, vector<18x18x64xf32>
    tpu.vector_store %arg8[%c0_22, %c0_23, %c0_24], %50 {strides = array<i32>} : memref<18x18x64xf32, #tpu.memory_space<vmem>>, vector<18x18x64xf32>,
    %52 = vector.shape_cast %49 : vector<256x64xf32> to vector<16x16x64xf32>
    %c1 = arith.constant 1 : index
    %c1_25 = arith.constant 1 : index
    %c0_26 = arith.constant 0 : index
    %53 = vector.load %arg8[%c1, %c1_25, %c0_26] : memref<18x18x64xf32, #tpu.memory_space<vmem>>, vector<16x16x64xf32>
    tpu.vector_store %arg8[%c1, %c1_25, %c0_26], %52 {strides = array<i32>} : memref<18x18x64xf32, #tpu.memory_space<vmem>>, vector<16x16x64xf32>,
    %c0_27 = arith.constant 0 : index
    %c0_28 = arith.constant 0 : index
    %c0_29 = arith.constant 0 : index
    %54 = vector.load %arg8[%c0_27, %c0_28, %c0_29] : memref<18x18x64xf32, #tpu.memory_space<vmem>>, vector<18x18x64xf32>
    %55 = vector.extract_strided_slice %54 {offsets = [0, 0, 0], sizes = [16, 16, 64], strides = [1, 1, 1]} : vector<18x18x64xf32> to vector<16x16x64xf32>
    %56 = vector.shape_cast %55 : vector<16x16x64xf32> to vector<256x64xf32>
    %57 = arith.truncf %56 : vector<256x64xf32> to vector<256x64xbf16>
    %c0_30 = arith.constant 0 : index
    %c0_31 = arith.constant 0 : index
    %58 = vector.load %arg9[%c0_30, %c0_31] : memref<256x576xbf16, #tpu.memory_space<vmem>>, vector<256x64xbf16>
    tpu.vector_store %arg9[%c0_30, %c0_31], %57 {strides = array<i32>} : memref<256x576xbf16, #tpu.memory_space<vmem>>, vector<256x64xbf16>,
    %59 = vector.extract_strided_slice %54 {offsets = [0, 1, 0], sizes = [16, 16, 64], strides = [1, 1, 1]} : vector<18x18x64xf32> to vector<16x16x64xf32>
    %60 = vector.shape_cast %59 : vector<16x16x64xf32> to vector<256x64xf32>
    %61 = arith.truncf %60 : vector<256x64xf32> to vector<256x64xbf16>
    %c0_32 = arith.constant 0 : index
    %c64_33 = arith.constant 64 : index
    %62 = vector.load %arg9[%c0_32, %c64_33] : memref<256x576xbf16, #tpu.memory_space<vmem>>, vector<256x64xbf16>
    tpu.vector_store %arg9[%c0_32, %c64_33], %61 {strides = array<i32>} : memref<256x576xbf16, #tpu.memory_space<vmem>>, vector<256x64xbf16>,
    %63 = vector.extract_strided_slice %54 {offsets = [0, 2, 0], sizes = [16, 16, 64], strides = [1, 1, 1]} : vector<18x18x64xf32> to vector<16x16x64xf32>
    %64 = vector.shape_cast %63 : vector<16x16x64xf32> to vector<256x64xf32>
    %65 = arith.truncf %64 : vector<256x64xf32> to vector<256x64xbf16>
    %c0_34 = arith.constant 0 : index
    %c128_35 = arith.constant 128 : index
    %66 = vector.load %arg9[%c0_34, %c128_35] : memref<256x576xbf16, #tpu.memory_space<vmem>>, vector<256x64xbf16>
    tpu.vector_store %arg9[%c0_34, %c128_35], %65 {strides = array<i32>} : memref<256x576xbf16, #tpu.memory_space<vmem>>, vector<256x64xbf16>,
    %67 = vector.extract_strided_slice %54 {offsets = [1, 0, 0], sizes = [16, 16, 64], strides = [1, 1, 1]} : vector<18x18x64xf32> to vector<16x16x64xf32>
    %68 = vector.shape_cast %67 : vector<16x16x64xf32> to vector<256x64xf32>
    %69 = arith.truncf %68 : vector<256x64xf32> to vector<256x64xbf16>
    %c0_36 = arith.constant 0 : index
    %c192_37 = arith.constant 192 : index
    %70 = vector.load %arg9[%c0_36, %c192_37] : memref<256x576xbf16, #tpu.memory_space<vmem>>, vector<256x64xbf16>
    tpu.vector_store %arg9[%c0_36, %c192_37], %69 {strides = array<i32>} : memref<256x576xbf16, #tpu.memory_space<vmem>>, vector<256x64xbf16>,
    %71 = vector.extract_strided_slice %54 {offsets = [1, 1, 0], sizes = [16, 16, 64], strides = [1, 1, 1]} : vector<18x18x64xf32> to vector<16x16x64xf32>
    %72 = vector.shape_cast %71 : vector<16x16x64xf32> to vector<256x64xf32>
    %73 = arith.truncf %72 : vector<256x64xf32> to vector<256x64xbf16>
    %c0_38 = arith.constant 0 : index
    %c256_39 = arith.constant 256 : index
    %74 = vector.load %arg9[%c0_38, %c256_39] : memref<256x576xbf16, #tpu.memory_space<vmem>>, vector<256x64xbf16>
    tpu.vector_store %arg9[%c0_38, %c256_39], %73 {strides = array<i32>} : memref<256x576xbf16, #tpu.memory_space<vmem>>, vector<256x64xbf16>,
    %75 = vector.extract_strided_slice %54 {offsets = [1, 2, 0], sizes = [16, 16, 64], strides = [1, 1, 1]} : vector<18x18x64xf32> to vector<16x16x64xf32>
    %76 = vector.shape_cast %75 : vector<16x16x64xf32> to vector<256x64xf32>
    %77 = arith.truncf %76 : vector<256x64xf32> to vector<256x64xbf16>
    %c0_40 = arith.constant 0 : index
    %c320_41 = arith.constant 320 : index
    %78 = vector.load %arg9[%c0_40, %c320_41] : memref<256x576xbf16, #tpu.memory_space<vmem>>, vector<256x64xbf16>
    tpu.vector_store %arg9[%c0_40, %c320_41], %77 {strides = array<i32>} : memref<256x576xbf16, #tpu.memory_space<vmem>>, vector<256x64xbf16>,
    %79 = vector.extract_strided_slice %54 {offsets = [2, 0, 0], sizes = [16, 16, 64], strides = [1, 1, 1]} : vector<18x18x64xf32> to vector<16x16x64xf32>
    %80 = vector.shape_cast %79 : vector<16x16x64xf32> to vector<256x64xf32>
    %81 = arith.truncf %80 : vector<256x64xf32> to vector<256x64xbf16>
    %c0_42 = arith.constant 0 : index
    %c384_43 = arith.constant 384 : index
    %82 = vector.load %arg9[%c0_42, %c384_43] : memref<256x576xbf16, #tpu.memory_space<vmem>>, vector<256x64xbf16>
    tpu.vector_store %arg9[%c0_42, %c384_43], %81 {strides = array<i32>} : memref<256x576xbf16, #tpu.memory_space<vmem>>, vector<256x64xbf16>,
    %83 = vector.extract_strided_slice %54 {offsets = [2, 1, 0], sizes = [16, 16, 64], strides = [1, 1, 1]} : vector<18x18x64xf32> to vector<16x16x64xf32>
    %84 = vector.shape_cast %83 : vector<16x16x64xf32> to vector<256x64xf32>
    %85 = arith.truncf %84 : vector<256x64xf32> to vector<256x64xbf16>
    %c0_44 = arith.constant 0 : index
    %c448_45 = arith.constant 448 : index
    %86 = vector.load %arg9[%c0_44, %c448_45] : memref<256x576xbf16, #tpu.memory_space<vmem>>, vector<256x64xbf16>
    tpu.vector_store %arg9[%c0_44, %c448_45], %85 {strides = array<i32>} : memref<256x576xbf16, #tpu.memory_space<vmem>>, vector<256x64xbf16>,
    %87 = vector.extract_strided_slice %54 {offsets = [2, 2, 0], sizes = [16, 16, 64], strides = [1, 1, 1]} : vector<18x18x64xf32> to vector<16x16x64xf32>
    %88 = vector.shape_cast %87 : vector<16x16x64xf32> to vector<256x64xf32>
    %89 = arith.truncf %88 : vector<256x64xf32> to vector<256x64xbf16>
    %c0_46 = arith.constant 0 : index
    %c512_47 = arith.constant 512 : index
    %90 = vector.load %arg9[%c0_46, %c512_47] : memref<256x576xbf16, #tpu.memory_space<vmem>>, vector<256x64xbf16>
    tpu.vector_store %arg9[%c0_46, %c512_47], %89 {strides = array<i32>} : memref<256x576xbf16, #tpu.memory_space<vmem>>, vector<256x64xbf16>,
    %c0_48 = arith.constant 0 : index
    %c0_49 = arith.constant 0 : index
    %91 = vector.load %arg9[%c0_48, %c0_49] : memref<256x576xbf16, #tpu.memory_space<vmem>>, vector<256x576xbf16>
    %c0_50 = arith.constant 0 : index
    %c0_51 = arith.constant 0 : index
    %92 = vector.load %arg5[%c0_50, %c0_51] : memref<576x64xbf16, #tpu.memory_space<vmem>>, vector<576x64xbf16>
    %cst_52 = arith.constant dense<0.000000e+00> : vector<256x64xf32>
    %93 = tpu.matmul %91, %92, %cst_52 {dimension_numbers = #tpu.dot_dimension_numbers<[1], [0], [0], [1], [0, 0, 1, 1], [], []>} : vector<256x576xbf16>, vector<576x64xbf16>, vector<256x64xf32> -> vector<256x64xf32>
    %c0_53 = arith.constant 0 : index
    %c0_54 = arith.constant 0 : index
    %94 = vector.load %arg6[%c0_53, %c0_54] : memref<1x64xf32, #tpu.memory_space<vmem>>, vector<1x64xf32>
    %95 = vector.broadcast %94 : vector<1x64xf32> to vector<256x64xf32>
    %96 = arith.addf %93, %95 : vector<256x64xf32>
    %c0_55 = arith.constant 0 : index
    %c1_56 = arith.constant 1 : index
    %c1_57 = arith.constant 1 : index
    %c0_58 = arith.constant 0 : index
    %97 = vector.load %arg2[%c0_55, %c1_56, %c1_57, %c0_58] : memref<1x18x18x64xf32, #tpu.memory_space<vmem>>, vector<1x16x16x64xf32>
    %98 = vector.shape_cast %97 : vector<1x16x16x64xf32> to vector<16x16x64xf32>
    %99 = vector.shape_cast %98 : vector<16x16x64xf32> to vector<256x64xf32>
    %100 = arith.addf %96, %99 : vector<256x64xf32>
    %101 = vector.shape_cast %100 : vector<256x64xf32> to vector<1x16x16x64xf32>
    %c0_59 = arith.constant 0 : index
    %c0_60 = arith.constant 0 : index
    %c0_61 = arith.constant 0 : index
    %c0_62 = arith.constant 0 : index
    %102 = vector.load %arg7[%c0_59, %c0_60, %c0_61, %c0_62] : memref<1x16x16x64xf32, #tpu.memory_space<vmem>>, vector<1x16x16x64xf32>
    tpu.vector_store %arg7[%c0_59, %c0_60, %c0_61, %c0_62], %101 {strides = array<i32>} : memref<1x16x16x64xf32, #tpu.memory_space<vmem>>, vector<1x16x16x64xf32>,
    return
  }
  func.func @transform_0(%arg0: i32) -> i32 {
    %c0_i32 = arith.constant 0 : i32
    %c0_i32_0 = arith.constant 0 : i32
    return %c0_i32 : i32
  }
  func.func @transform_1(%arg0: i32) -> (i32, i32, i32, i32) {
    %c0_i32 = arith.constant 0 : i32
    %c0_i32_0 = arith.constant 0 : i32
    %c0_i32_1 = arith.constant 0 : i32
    %c0_i32_2 = arith.constant 0 : i32
    return %arg0, %c0_i32, %c0_i32_0, %c0_i32_1 : i32, i32, i32, i32
  }
  func.func @transform_2(%arg0: i32) -> (i32, i32) {
    %c0_i32 = arith.constant 0 : i32
    %c0_i32_0 = arith.constant 0 : i32
    %c0_i32_1 = arith.constant 0 : i32
    return %c0_i32, %c0_i32_0 : i32, i32
  }
  func.func @transform_3(%arg0: i32) -> (i32, i32) {
    %c0_i32 = arith.constant 0 : i32
    %c0_i32_0 = arith.constant 0 : i32
    %c0_i32_1 = arith.constant 0 : i32
    return %c0_i32, %c0_i32_0 : i32, i32
  }
  func.func @transform_4(%arg0: i32) -> (i32, i32) {
    %c0_i32 = arith.constant 0 : i32
    %c0_i32_0 = arith.constant 0 : i32
    %c0_i32_1 = arith.constant 0 : i32
    return %c0_i32, %c0_i32_0 : i32, i32
  }
  func.func @transform_5(%arg0: i32) -> (i32, i32) {
    %c0_i32 = arith.constant 0 : i32
    %c0_i32_0 = arith.constant 0 : i32
    %c0_i32_1 = arith.constant 0 : i32
    return %c0_i32, %c0_i32_0 : i32, i32
  }
  func.func @transform_6(%arg0: i32) -> (i32, i32, i32, i32) {
    %c0_i32 = arith.constant 0 : i32
    %c0_i32_0 = arith.constant 0 : i32
    %c0_i32_1 = arith.constant 0 : i32
    %c0_i32_2 = arith.constant 0 : i32
    return %arg0, %c0_i32, %c0_i32_0, %c0_i32_1 : i32, i32, i32, i32
  }
}

</mosaic_0001>

<llo_original>
// kernel: tpu_custom_call.1
$region0: #{tpu_custom_call.1}
  #allocation0 [shape = 'u32[]', space=smem, size = 0x4, offset = 0x4, fixed_abs, tag = 'smem constant byte address 0x4 - core index']
  #allocation1 [shape = 'u32[144,128]{1,0:T(1,128)}', space=vmem, size = 0x12000, scoped, tag = 'internal scratch']
  #allocation2 [shape = 'f32[18,18,64]{2,1,0:T(8,128)}', space=vmem, size = 0x36000, scoped, tag = 'scratch operand']
  #allocation3 [shape = 'bf16[256,576]{1,0:T(16,128)(2,1)}', space=vmem, size = 0x50000, scoped, tag = 'scratch operand']
  #allocation4 [shape = 'f32[1]{0:T(128)S(6)}', space=smem, size = 0x200, scoped, tag = 'scoped memory for tpu_custom_call.1']
  %s0 = inlined_call_operand.<no memory space> [shape: f32[1], index: 0, kind: input, shape index: {}]
  %s1 = inlined_call_operand.vmem [shape: f32[2,18,18,64], index: 1, kind: input, shape index: {}]
  %s2 = inlined_call_operand.vmem [shape: bf16[576,64], index: 2, kind: input, shape index: {}]
  %s3 = inlined_call_operand.vmem [shape: f32[1,64], index: 3, kind: input, shape index: {}]
  %s4 = inlined_call_operand.vmem [shape: bf16[576,64], index: 4, kind: input, shape index: {}]
  %s5 = inlined_call_operand.vmem [shape: f32[1,64], index: 5, kind: input, shape index: {}]
  %s6 = inlined_call_operand.hbm [shape: f32[2,16,16,64], index: 6, kind: output, shape index: {}]
  %s7 = sld [smem:[#allocation0]]
  $region57: #{tpu_custom_call.1} parent=0
    _
  %s9 = ssub.s32 1, %s7
  %s10 = scalar_select 0, %s9, %s7
  %11 = sst [smem:[#allocation4]] %s0
  $region1: #{tpu_custom_call.1} parent=0
    #allocation5 [shape = 'u8[262144]{0}', space=vmem, size = 0x40000, scoped, tag = 'output window, operand 0']
    #allocation6 [shape = 's32[2]{0}', space=sflag, size = 0x8, scoped, tag = 'scoped memory for tpu_custom_call.1']
    %12 = vsyncpa [#allocation6], 0
    %s13 = scalar_lea.sflag [#allocation6], 1
    %14 = vsyncpa %s13, 0
    loop: start=0, step=1, limit=4
    $region2: #{tpu_custom_call.1} parent=1 // loop_pre_header
      _
    $region3: #{tpu_custom_call.1} parent=1 // loop_header
      %s16 = sphi 0, %s20
      %p17 = scmp.ge.s32.totalorder %s16, 4
      %s24 = sphi 0, %s24
      %s26 = sphi 0, %s24
      %s27 = sphi 0, %s26
      %s41 = sphi 0, %s27
      %s47 = sphi 0, %s49
      %s50 = sphi 0, %s47
      %s51 = sphi 0, %s50
      %s67 = sphi 0, %s51
      %s71 = sphi 0, %s71
      %s73 = sphi 0, %s71
      %s74 = sphi 0, %s73
      %s88 = sphi 0, %s74
      %s92 = sphi 0, %s92
      %s94 = sphi 0, %s92
      %s95 = sphi 0, %s94
      %s109 = sphi 0, %s95
      %s113 = sphi 0, %s113
      %s115 = sphi 0, %s113
      %s116 = sphi 0, %s115
      %s130 = sphi 0, %s116
      %s134 = sphi 0, %s134
      %s136 = sphi 0, %s134
      %s137 = sphi 0, %s136
      %s151 = sphi 0, %s137
      %s157 = sphi 0, %s159
      %s160 = sphi 0, %s157
      %s161 = sphi 0, %s160
      %s177 = sphi 0, %s161
    $region4: #{tpu_custom_call.1} parent=1 // loop_header_branch
      %19 = sbr.rel (%p17) target = $region8
    $region5: #{tpu_custom_call.1} parent=1 // loop_body
      %s21 = ssub.s32 %s16, 1
      %s22 = ssub.s32 %s16, 2
      %s23 = sadd.s32 %s16, 1
      %s25 = sadd.s32 %s24, 1
      %p28 = scmp.eq.s32.totalorder %s16, 1
      %p29 = scmp.ne.s32.totalorder %s24, %s26
      %p30 = scmp.eq.s32.totalorder %s16, 0
      %p31 = por %p29, %p30
      %p32 = scmp.ne.s32.totalorder %s24, %s26
      %p33 = scmp.eq.s32.totalorder %s21, 1
      %p34 = por %p32, %p33
      %p35 = scmp.ne.s32.totalorder %s26, %s27
      %p36 = scmp.eq.s32.totalorder %s21, 0
      %p37 = por %p35, %p36
      %p38 = scmp.ne.s32.totalorder %s26, %s27
      %p39 = scmp.eq.s32.totalorder %s22, 1
      %p40 = por %p38, %p39
      %p42 = scmp.ne.s32.totalorder %s27, %s41
      %p43 = scmp.eq.s32.totalorder %s22, 0
      %p44 = por %p42, %p43
      %s45 = ssub.s32 %s16, %s23
      %p46 = scmp.eq.s32.totalorder %s45, 0
      %s48 = sadd.s32 %s47, 1
      %s49 = scalar_select %p46, %s47, %s48
      %p52 = pneg %p46
      %p53 = scmp.eq.s32.totalorder %s16, 1
      %p54 = por %p52, %p53
      %p55 = scmp.ne.s32.totalorder %s47, %s50
      %p56 = scmp.eq.s32.totalorder %s16, 0
      %p57 = por %p55, %p56
      %p58 = scmp.ne.s32.totalorder %s47, %s50
      %p59 = scmp.eq.s32.totalorder %s21, 1
      %p60 = por %p58, %p59
      %p61 = scmp.ne.s32.totalorder %s50, %s51
      %p62 = scmp.eq.s32.totalorder %s21, 0
      %p63 = por %p61, %p62
      %p64 = scmp.ne.s32.totalorder %s50, %s51
      %p65 = scmp.eq.s32.totalorder %s22, 1
      %p66 = por %p64, %p65
      %p68 = scmp.ne.s32.totalorder %s51, %s67
      %p69 = scmp.eq.s32.totalorder %s22, 0
      %p70 = por %p68, %p69
      %s72 = sadd.s32 %s71, 1
      %p75 = scmp.eq.s32.totalorder %s16, 1
      %p76 = scmp.ne.s32.totalorder %s71, %s73
      %p77 = scmp.eq.s32.totalorder %s16, 0
      %p78 = por %p76, %p77
      %p79 = scmp.ne.s32.totalorder %s71, %s73
      %p80 = scmp.eq.s32.totalorder %s21, 1
      %p81 = por %p79, %p80
      %p82 = scmp.ne.s32.totalorder %s73, %s74
      %p83 = scmp.eq.s32.totalorder %s21, 0
      %p84 = por %p82, %p83
      %p85 = scmp.ne.s32.totalorder %s73, %s74
      %p86 = scmp.eq.s32.totalorder %s22, 1
      %p87 = por %p85, %p86
      %p89 = scmp.ne.s32.totalorder %s74, %s88
      %p90 = scmp.eq.s32.totalorder %s22, 0
      %p91 = por %p89, %p90
      %s93 = sadd.s32 %s92, 1
      %p96 = scmp.eq.s32.totalorder %s16, 1
      %p97 = scmp.ne.s32.totalorder %s92, %s94
      %p98 = scmp.eq.s32.totalorder %s16, 0
      %p99 = por %p97, %p98
      %p100 = scmp.ne.s32.totalorder %s92, %s94
      %p101 = scmp.eq.s32.totalorder %s21, 1
      %p102 = por %p100, %p101
      %p103 = scmp.ne.s32.totalorder %s94, %s95
      %p104 = scmp.eq.s32.totalorder %s21, 0
      %p105 = por %p103, %p104
      %p106 = scmp.ne.s32.totalorder %s94, %s95
      %p107 = scmp.eq.s32.totalorder %s22, 1
      %p108 = por %p106, %p107
      %p110 = scmp.ne.s32.totalorder %s95, %s109
      %p111 = scmp.eq.s32.totalorder %s22, 0
      %p112 = por %p110, %p111
      %s114 = sadd.s32 %s113, 1
      %p117 = scmp.eq.s32.totalorder %s16, 1
      %p118 = scmp.ne.s32.totalorder %s113, %s115
      %p119 = scmp.eq.s32.totalorder %s16, 0
      %p120 = por %p118, %p119
      %p121 = scmp.ne.s32.totalorder %s113, %s115
      %p122 = scmp.eq.s32.totalorder %s21, 1
      %p123 = por %p121, %p122
      %p124 = scmp.ne.s32.totalorder %s115, %s116
      %p125 = scmp.eq.s32.totalorder %s21, 0
      %p126 = por %p124, %p125
      %p127 = scmp.ne.s32.totalorder %s115, %s116
      %p128 = scmp.eq.s32.totalorder %s22, 1
      %p129 = por %p127, %p128
      %p131 = scmp.ne.s32.totalorder %s116, %s130
      %p132 = scmp.eq.s32.totalorder %s22, 0
      %p133 = por %p131, %p132
      %s135 = sadd.s32 %s134, 1
      %p138 = scmp.eq.s32.totalorder %s16, 1
      %p139 = scmp.ne.s32.totalorder %s134, %s136
      %p140 = scmp.eq.s32.totalorder %s16, 0
      %p141 = por %p139, %p140
      %p142 = scmp.ne.s32.totalorder %s134, %s136
      %p143 = scmp.eq.s32.totalorder %s21, 1
      %p144 = por %p142, %p143
      %p145 = scmp.ne.s32.totalorder %s136, %s137
      %p146 = scmp.eq.s32.totalorder %s21, 0
      %p147 = por %p145, %p146
      %p148 = scmp.ne.s32.totalorder %s136, %s137
      %p149 = scmp.eq.s32.totalorder %s22, 1
      %p150 = por %p148, %p149
      %p152 = scmp.ne.s32.totalorder %s137, %s151
      %p153 = scmp.eq.s32.totalorder %s22, 0
      %p154 = por %p152, %p153
      %s155 = ssub.s32 %s16, %s23
      %p156 = scmp.eq.s32.totalorder %s155, 0
      %s158 = sadd.s32 %s157, 1
      %s159 = scalar_select %p156, %s157, %s158
      %p162 = pneg %p156
      %p163 = scmp.eq.s32.totalorder %s16, 1
      %p164 = por %p162, %p163
      %p165 = scmp.ne.s32.totalorder %s157, %s160
      %p166 = scmp.eq.s32.totalorder %s16, 0
      %p167 = por %p165, %p166
      %p168 = scmp.ne.s32.totalorder %s157, %s160
      %p169 = scmp.eq.s32.totalorder %s21, 1
      %p170 = por %p168, %p169
      %p171 = scmp.ne.s32.totalorder %s160, %s161
      %p172 = scmp.eq.s32.totalorder %s21, 0
      %p173 = por %p171, %p172
      %p174 = scmp.ne.s32.totalorder %s160, %s161
      %p175 = scmp.eq.s32.totalorder %s22, 1
      %p176 = por %p174, %p175
      %p178 = scmp.ne.s32.totalorder %s161, %s177
      %p179 = scmp.eq.s32.totalorder %s22, 0
      %p180 = por %p178, %p179
      %p181 = scmp.le.s32.totalorder 1, %s16
      %p182 = scmp.lt.s32.totalorder %s16, 3
      %p183 = pnand %p181, %p182
      %p184 = pneg %p183
      // Predicated region
      $region9: #{tpu_custom_call.1} parent=5 // pred_check
        _
      $region10: #{tpu_custom_call.1} parent=5 // pred_check_branch
        %186 = sbr.rel (%p183) target = $region12
      $region11: #{tpu_custom_call.1} parent=5 // pred_region
        %s187 = ssub.s32 %s16, 1
        // Predicated region
        $region13: #{tpu_custom_call.1} parent=11 // pred_check
          %p188 = pneg %p37
        $region14: #{tpu_custom_call.1} parent=11 // pred_check_branch
          %190 = sbr.rel (%p188) target = $region16
        $region15: #{tpu_custom_call.1} parent=11 // pred_region
          _
        $region16: #{tpu_custom_call.1} parent=11 // pred_fallthru
          _
        // Predicated region
        $region17: #{tpu_custom_call.1} parent=11 // pred_check
          %p191 = pneg %p84
        $region18: #{tpu_custom_call.1} parent=11 // pred_check_branch
          %193 = sbr.rel (%p191) target = $region20
        $region19: #{tpu_custom_call.1} parent=11 // pred_region
          _
        $region20: #{tpu_custom_call.1} parent=11 // pred_fallthru
          _
        // Predicated region
        $region21: #{tpu_custom_call.1} parent=11 // pred_check
          %p194 = pneg %p105
        $region22: #{tpu_custom_call.1} parent=11 // pred_check_branch
          %196 = sbr.rel (%p194) target = $region24
        $region23: #{tpu_custom_call.1} parent=11 // pred_region
          _
        $region24: #{tpu_custom_call.1} parent=11 // pred_fallthru
          _
        // Predicated region
        $region25: #{tpu_custom_call.1} parent=11 // pred_check
          %p197 = pneg %p126
        $region26: #{tpu_custom_call.1} parent=11 // pred_check_branch
          %199 = sbr.rel (%p197) target = $region28
        $region27: #{tpu_custom_call.1} parent=11 // pred_region
          _
        $region28: #{tpu_custom_call.1} parent=11 // pred_fallthru
          _
        // Predicated region
        $region29: #{tpu_custom_call.1} parent=11 // pred_check
          %p200 = pneg %p147
        $region30: #{tpu_custom_call.1} parent=11 // pred_check_branch
          %202 = sbr.rel (%p200) target = $region32
        $region31: #{tpu_custom_call.1} parent=11 // pred_region
          _
        $region32: #{tpu_custom_call.1} parent=11 // pred_fallthru
          _
      $region12: #{tpu_custom_call.1} parent=5 // pred_fallthru
        _
      %p203 = scmp.lt.s32.totalorder %s16, 2
      // Predicated region
      $region33: #{tpu_custom_call.1} parent=5 // pred_check
        %p204 = pneg %p203
      $region34: #{tpu_custom_call.1} parent=5 // pred_check_branch
        %206 = sbr.rel (%p204) target = $region36
      $region35: #{tpu_custom_call.1} parent=5 // pred_region
        // Predicated region
        $region37: #{tpu_custom_call.1} parent=35 // pred_check
          %p207 = pneg %p57
        $region38: #{tpu_custom_call.1} parent=35 // pred_check_branch
          %209 = sbr.rel (%p207) target = $region40
        $region39: #{tpu_custom_call.1} parent=35 // pred_region
          %p210 = scmp.lt.s32.totalorder %s16, 1
          %s211 = scalar_select %p210, %s16, 1
          %s212 = smul.addr %s211, 54
          %s213 = smul.addr %s212, 8
          %s214 = scalar_lea.vmem %s1, %s213
        $region40: #{tpu_custom_call.1} parent=35 // pred_fallthru
          _
      $region36: #{tpu_custom_call.1} parent=5 // pred_fallthru
        _
      %p215 = scmp.le.s32.totalorder 1, %s16
      %p216 = scmp.lt.s32.totalorder %s16, 3
      %p217 = pnand %p215, %p216
      %p218 = pneg %p217
      // Predicated region
      $region41: #{tpu_custom_call.1} parent=5 // pred_check
        _
      $region42: #{tpu_custom_call.1} parent=5 // pred_check_branch
        %220 = sbr.rel (%p217) target = $region44
      $region43: #{tpu_custom_call.1} parent=5 // pred_region
        %s221 = ssub.s32 %s16, 1
        %p222 = pneg %p37
        %p223 = pneg %p34
        %p224 = scmp.lt.s32.totalorder %s21, 1
        %s225 = scalar_select %p224, %s21, 1
        %s226 = smul.addr %s225, 54
        %s227 = smul.addr %s226, 8
        %s228 = scalar_lea.vmem %s1, %s227
        %p229 = pneg %p63
        %p230 = pneg %p60
        %p231 = pneg %p84
        %p232 = pneg %p81
        %p233 = pneg %p105
        %p234 = pneg %p102
        %p235 = pneg %p126
        %p236 = pneg %p123
        %p237 = pneg %p147
        %p238 = pneg %p144
        %p239 = pneg %p173
        %p240 = pneg %p170
        %s241 = sand.u32 %s160, 1
        %s242 = scalar_lea.sflag [#allocation6], %s241
        %s243 = sand.u32 %s160, 1
        %s244 = smul.addr %s243, 256
        %s245 = scalar_lea.vmem [#allocation5], %s244
        %p246 = scmp.lt.s32.totalorder %s21, 1
        %s247 = scalar_select %p246, %s21, 1
        %s248 = smul.addr %s247, 54
        %s249 = smul.addr %s248, 8
        %s250 = scalar_lea.vmem %s1, %s249
        %v252 = vld [vmem:[%s250] sm:$0xff]
        %v253 = vld [vmem:[%s250 + $0x8] sm:$0xff]
        %v254 = vld [vmem:[%s250 + $0x10] sm:$0x3]
        %v255 = vld [vmem:[%s250 + $0x18] sm:$0xff]
        %v256 = vld [vmem:[%s250 + $0x20] sm:$0xff]
        %v257 = vld [vmem:[%s250 + $0x28] sm:$0x3]
        %v258 = vld [vmem:[%s250 + $0x30] sm:$0xff]
        %v259 = vld [vmem:[%s250 + $0x38] sm:$0xff]
        %v260 = vld [vmem:[%s250 + $0x40] sm:$0x3]
        %v261 = vld [vmem:[%s250 + $0x48] sm:$0xff]
        %v262 = vld [vmem:[%s250 + $0x50] sm:$0xff]
        %v263 = vld [vmem:[%s250 + $0x58] sm:$0x3]
        %v264 = vld [vmem:[%s250 + $0x60] sm:$0xff]
        %v265 = vld [vmem:[%s250 + $0x68] sm:$0xff]
        %v266 = vld [vmem:[%s250 + $0x70] sm:$0x3]
        %v267 = vld [vmem:[%s250 + $0x78] sm:$0xff]
        %v268 = vld [vmem:[%s250 + $0x80] sm:$0xff]
        %v269 = vld [vmem:[%s250 + $0x88] sm:$0x3]
        %v270 = vld [vmem:[%s250 + $0x90] sm:$0xff]
        %v271 = vld [vmem:[%s250 + $0x98] sm:$0xff]
        %v272 = vld [vmem:[%s250 + $0xa0] sm:$0x3]
        %v273 = vld [vmem:[%s250 + $0xa8] sm:$0xff]
        %v274 = vld [vmem:[%s250 + $0xb0] sm:$0xff]
        %v275 = vld [vmem:[%s250 + $0xb8] sm:$0x3]
        %v276 = vld [vmem:[%s250 + $0xc0] sm:$0xff]
        %v277 = vld [vmem:[%s250 + $0xc8] sm:$0xff]
        %v278 = vld [vmem:[%s250 + $0xd0] sm:$0x3]
        %v279 = vld [vmem:[%s250 + $0xd8] sm:$0xff]
        %v280 = vld [vmem:[%s250 + $0xe0] sm:$0xff]
        %v281 = vld [vmem:[%s250 + $0xe8] sm:$0x3]
        %v282 = vld [vmem:[%s250 + $0xf0] sm:$0xff]
        %v283 = vld [vmem:[%s250 + $0xf8] sm:$0xff]
        %v284 = vld [vmem:[%s250 + $0x100] sm:$0x3]
        %v285 = vld [vmem:[%s250 + $0x108] sm:$0xff]
        %v286 = vld [vmem:[%s250 + $0x110] sm:$0xff]
        %v287 = vld [vmem:[%s250 + $0x118] sm:$0x3]
        %v288 = vld [vmem:[%s250 + $0x120] sm:$0xff]
        %v289 = vld [vmem:[%s250 + $0x128] sm:$0xff]
        %v290 = vld [vmem:[%s250 + $0x130] sm:$0x3]
        %v291 = vld [vmem:[%s250 + $0x138] sm:$0xff]
        %v292 = vld [vmem:[%s250 + $0x140] sm:$0xff]
        %v293 = vld [vmem:[%s250 + $0x148] sm:$0x3]
        %v294 = vld [vmem:[%s250 + $0x150] sm:$0xff]
        %v295 = vld [vmem:[%s250 + $0x158] sm:$0xff]
        %v296 = vld [vmem:[%s250 + $0x160] sm:$0x3]
        %v297 = vld [vmem:[%s250 + $0x168] sm:$0xff]
        %v298 = vld [vmem:[%s250 + $0x170] sm:$0xff]
        %v299 = vld [vmem:[%s250 + $0x178] sm:$0x3]
        %v300 = vld [vmem:[%s250 + $0x180] sm:$0xff]
        %v301 = vld [vmem:[%s250 + $0x188] sm:$0xff]
        %v302 = vld [vmem:[%s250 + $0x190] sm:$0x3]
        %v303 = vld [vmem:[%s250 + $0x198] sm:$0xff]
        %v304 = vld [vmem:[%s250 + $0x1a0] sm:$0xff]
        %v305 = vld [vmem:[%s250 + $0x1a8] sm:$0x3]
        %v306 = vpack.c.bf16 %v253, %v252
        %v307 = vpack.c.bf16 %v256, %v255
        %v308 = vpack.c.bf16 %v259, %v258
        %v309 = vpack.c.bf16 %v262, %v261
        %v310 = vpack.c.bf16 %v265, %v264
        %v311 = vpack.c.bf16 %v268, %v267
        %v312 = vpack.c.bf16 %v271, %v270
        %v313 = vpack.c.bf16 %v274, %v273
        %v314 = vpack.c.bf16 %v277, %v276
        %v315 = vpack.c.bf16 %v280, %v279
        %v316 = vpack.c.bf16 %v283, %v282
        %v317 = vpack.c.bf16 %v286, %v285
        %v318 = vpack.c.bf16 %v289, %v288
        %v319 = vpack.c.bf16 %v292, %v291
        %v320 = vpack.c.bf16 %v295, %v294
        %v321 = vpack.c.bf16 %v298, %v297
        %vm322 = vcmask 523264
        %323 = vst.msk [vmem:[#allocation3] sm:$0xff] %vm322, %v306
        %324 = vst.msk [vmem:[#allocation3 + $0x28] sm:$0xff] %vm322, %v307
        %325 = vst.msk [vmem:[#allocation3 + $0x50] sm:$0xff] %vm322, %v308
        %326 = vst.msk [vmem:[#allocation3 + $0x78] sm:$0xff] %vm322, %v309
        %327 = vst.msk [vmem:[#allocation3 + $0xa0] sm:$0xff] %vm322, %v310
        %328 = vst.msk [vmem:[#allocation3 + $0xc8] sm:$0xff] %vm322, %v311
        %329 = vst.msk [vmem:[#allocation3 + $0xf0] sm:$0xff] %vm322, %v312
        %330 = vst.msk [vmem:[#allocation3 + $0x118] sm:$0xff] %vm322, %v313
        %331 = vst.msk [vmem:[#allocation3 + $0x140] sm:$0xff] %vm322, %v314
        %332 = vst.msk [vmem:[#allocation3 + $0x168] sm:$0xff] %vm322, %v315
        %333 = vst.msk [vmem:[#allocation3 + $0x190] sm:$0xff] %vm322, %v316
        %334 = vst.msk [vmem:[#allocation3 + $0x1b8] sm:$0xff] %vm322, %v317
        %335 = vst.msk [vmem:[#allocation3 + $0x1e0] sm:$0xff] %vm322, %v318
        %336 = vst.msk [vmem:[#allocation3 + $0x208] sm:$0xff] %vm322, %v319
        %337 = vst.msk [vmem:[#allocation3 + $0x230] sm:$0xff] %vm322, %v320
        %338 = vst.msk [vmem:[#allocation3 + $0x258] sm:$0xff] %vm322, %v321
        %vm387 = vcmask 1046528
        %v388 = vrot.slane %v252, 1
        %v389 = vrot.slane %v253, 1
        %v390 = vsel %vm387, %v388, %v389
        %v391 = vrot.slane %v254, 1
        %v392 = vsel %vm387, %v389, %v391
        %v393 = vrot.slane %v255, 1
        %v394 = vrot.slane %v256, 1
        %v395 = vsel %vm387, %v393, %v394
        %v396 = vrot.slane %v257, 1
        %v397 = vsel %vm387, %v394, %v396
        %v398 = vrot.slane %v258, 1
        %v399 = vrot.slane %v259, 1
        %v400 = vsel %vm387, %v398, %v399
        %v401 = vrot.slane %v260, 1
        %v402 = vsel %vm387, %v399, %v401
        %v403 = vrot.slane %v261, 1
        %v404 = vrot.slane %v262, 1
        %v405 = vsel %vm387, %v403, %v404
        %v406 = vrot.slane %v263, 1
        %v407 = vsel %vm387, %v404, %v406
        %v408 = vrot.slane %v264, 1
        %v409 = vrot.slane %v265, 1
        %v410 = vsel %vm387, %v408, %v409
        %v411 = vrot.slane %v266, 1
        %v412 = vsel %vm387, %v409, %v411
        %v413 = vrot.slane %v267, 1
        %v414 = vrot.slane %v268, 1
        %v415 = vsel %vm387, %v413, %v414
        %v416 = vrot.slane %v269, 1
        %v417 = vsel %vm387, %v414, %v416
        %v418 = vrot.slane %v270, 1
        %v419 = vrot.slane %v271, 1
        %v420 = vsel %vm387, %v418, %v419
        %v421 = vrot.slane %v272, 1
        %v422 = vsel %vm387, %v419, %v421
        %v423 = vrot.slane %v273, 1
        %v424 = vrot.slane %v274, 1
        %v425 = vsel %vm387, %v423, %v424
        %v426 = vrot.slane %v275, 1
        %v427 = vsel %vm387, %v424, %v426
        %v428 = vrot.slane %v276, 1
        %v429 = vrot.slane %v277, 1
        %v430 = vsel %vm387, %v428, %v429
        %v431 = vrot.slane %v278, 1
        %v432 = vsel %vm387, %v429, %v431
        %v433 = vrot.slane %v279, 1
        %v434 = vrot.slane %v280, 1
        %v435 = vsel %vm387, %v433, %v434
        %v436 = vrot.slane %v281, 1
        %v437 = vsel %vm387, %v434, %v436
        %v438 = vrot.slane %v282, 1
        %v439 = vrot.slane %v283, 1
        %v440 = vsel %vm387, %v438, %v439
        %v441 = vrot.slane %v284, 1
        %v442 = vsel %vm387, %v439, %v441
        %v443 = vrot.slane %v285, 1
        %v444 = vrot.slane %v286, 1
        %v445 = vsel %vm387, %v443, %v444
        %v446 = vrot.slane %v287, 1
        %v447 = vsel %vm387, %v444, %v446
        %v448 = vrot.slane %v288, 1
        %v449 = vrot.slane %v289, 1
        %v450 = vsel %vm387, %v448, %v449
        %v451 = vrot.slane %v290, 1
        %v452 = vsel %vm387, %v449, %v451
        %v453 = vrot.slane %v291, 1
        %v454 = vrot.slane %v292, 1
        %v455 = vsel %vm387, %v453, %v454
        %v456 = vrot.slane %v293, 1
        %v457 = vsel %vm387, %v454, %v456
        %v458 = vrot.slane %v294, 1
        %v459 = vrot.slane %v295, 1
        %v460 = vsel %vm387, %v458, %v459
        %v461 = vrot.slane %v296, 1
        %v462 = vsel %vm387, %v459, %v461
        %v463 = vrot.slane %v297, 1
        %v464 = vrot.slane %v298, 1
        %v465 = vsel %vm387, %v463, %v464
        %v466 = vrot.slane %v299, 1
        %v467 = vsel %vm387, %v464, %v466
        %v500 = vpack.c.bf16 %v392, %v390
        %v501 = vpack.c.bf16 %v397, %v395
        %v502 = vpack.c.bf16 %v402, %v400
        %v503 = vpack.c.bf16 %v407, %v405
        %v504 = vpack.c.bf16 %v412, %v410
        %v505 = vpack.c.bf16 %v417, %v415
        %v506 = vpack.c.bf16 %v422, %v420
        %v507 = vpack.c.bf16 %v427, %v425
        %v508 = vpack.c.bf16 %v432, %v430
        %v509 = vpack.c.bf16 %v437, %v435
        %v510 = vpack.c.bf16 %v442, %v440
        %v511 = vpack.c.bf16 %v447, %v445
        %v512 = vpack.c.bf16 %v452, %v450
        %v513 = vpack.c.bf16 %v457, %v455
        %v514 = vpack.c.bf16 %v462, %v460
        %v515 = vpack.c.bf16 %v467, %v465
        %532 = vrot.lane.b32.xlu0 %v500, 64
        %v533 = vpop.permute.xlu0 %532
        %534 = vrot.lane.b32.xlu0 %v501, 64
        %v535 = vpop.permute.xlu0 %534
        %536 = vrot.lane.b32.xlu0 %v502, 64
        %v537 = vpop.permute.xlu0 %536
        %538 = vrot.lane.b32.xlu0 %v503, 64
        %v539 = vpop.permute.xlu0 %538
        %540 = vrot.lane.b32.xlu0 %v504, 64
        %v541 = vpop.permute.xlu0 %540
        %542 = vrot.lane.b32.xlu0 %v505, 64
        %v543 = vpop.permute.xlu0 %542
        %544 = vrot.lane.b32.xlu0 %v506, 64
        %v545 = vpop.permute.xlu0 %544
        %546 = vrot.lane.b32.xlu0 %v507, 64
        %v547 = vpop.permute.xlu0 %546
        %548 = vrot.lane.b32.xlu0 %v508, 64
        %v549 = vpop.permute.xlu0 %548
        %550 = vrot.lane.b32.xlu0 %v509, 64
        %v551 = vpop.permute.xlu0 %550
        %552 = vrot.lane.b32.xlu0 %v510, 64
        %v553 = vpop.permute.xlu0 %552
        %554 = vrot.lane.b32.xlu0 %v511, 64
        %v555 = vpop.permute.xlu0 %554
        %556 = vrot.lane.b32.xlu0 %v512, 64
        %v557 = vpop.permute.xlu0 %556
        %558 = vrot.lane.b32.xlu0 %v513, 64
        %v559 = vpop.permute.xlu0 %558
        %560 = vrot.lane.b32.xlu0 %v514, 64
        %v561 = vpop.permute.xlu0 %560
        %562 = vrot.lane.b32.xlu0 %v515, 64
        %v563 = vpop.permute.xlu0 %562
        %vm580 = vcmask 1048064
        %581 = vst.msk [vmem:[#allocation3] sm:$0xff] %vm580, %v533
        %582 = vst.msk [vmem:[#allocation3 + $0x28] sm:$0xff] %vm580, %v535
        %583 = vst.msk [vmem:[#allocation3 + $0x50] sm:$0xff] %vm580, %v537
        %584 = vst.msk [vmem:[#allocation3 + $0x78] sm:$0xff] %vm580, %v539
        %585 = vst.msk [vmem:[#allocation3 + $0xa0] sm:$0xff] %vm580, %v541
        %586 = vst.msk [vmem:[#allocation3 + $0xc8] sm:$0xff] %vm580, %v543
        %587 = vst.msk [vmem:[#allocation3 + $0xf0] sm:$0xff] %vm580, %v545
        %588 = vst.msk [vmem:[#allocation3 + $0x118] sm:$0xff] %vm580, %v547
        %589 = vst.msk [vmem:[#allocation3 + $0x140] sm:$0xff] %vm580, %v549
        %590 = vst.msk [vmem:[#allocation3 + $0x168] sm:$0xff] %vm580, %v551
        %591 = vst.msk [vmem:[#allocation3 + $0x190] sm:$0xff] %vm580, %v553
        %592 = vst.msk [vmem:[#allocation3 + $0x1b8] sm:$0xff] %vm580, %v555
        %593 = vst.msk [vmem:[#allocation3 + $0x1e0] sm:$0xff] %vm580, %v557
        %594 = vst.msk [vmem:[#allocation3 + $0x208] sm:$0xff] %vm580, %v559
        %595 = vst.msk [vmem:[#allocation3 + $0x230] sm:$0xff] %vm580, %v561
        %596 = vst.msk [vmem:[#allocation3 + $0x258] sm:$0xff] %vm580, %v563
        %vm597 = vcmask 1045504
        %v598 = vrot.slane %v252, 2
        %v599 = vrot.slane %v253, 2
        %v600 = vsel %vm597, %v598, %v599
        %v601 = vrot.slane %v254, 2
        %v602 = vsel %vm597, %v599, %v601
        %v603 = vrot.slane %v255, 2
        %v604 = vrot.slane %v256, 2
        %v605 = vsel %vm597, %v603, %v604
        %v606 = vrot.slane %v257, 2
        %v607 = vsel %vm597, %v604, %v606
        %v608 = vrot.slane %v258, 2
        %v609 = vrot.slane %v259, 2
        %v610 = vsel %vm597, %v608, %v609
        %v611 = vrot.slane %v260, 2
        %v612 = vsel %vm597, %v609, %v611
        %v613 = vrot.slane %v261, 2
        %v614 = vrot.slane %v262, 2
        %v615 = vsel %vm597, %v613, %v614
        %v616 = vrot.slane %v263, 2
        %v617 = vsel %vm597, %v614, %v616
        %v618 = vrot.slane %v264, 2
        %v619 = vrot.slane %v265, 2
        %v620 = vsel %vm597, %v618, %v619
        %v621 = vrot.slane %v266, 2
        %v622 = vsel %vm597, %v619, %v621
        %v623 = vrot.slane %v267, 2
        %v624 = vrot.slane %v268, 2
        %v625 = vsel %vm597, %v623, %v624
        %v626 = vrot.slane %v269, 2
        %v627 = vsel %vm597, %v624, %v626
        %v628 = vrot.slane %v270, 2
        %v629 = vrot.slane %v271, 2
        %v630 = vsel %vm597, %v628, %v629
        %v631 = vrot.slane %v272, 2
        %v632 = vsel %vm597, %v629, %v631
        %v633 = vrot.slane %v273, 2
        %v634 = vrot.slane %v274, 2
        %v635 = vsel %vm597, %v633, %v634
        %v636 = vrot.slane %v275, 2
        %v637 = vsel %vm597, %v634, %v636
        %v638 = vrot.slane %v276, 2
        %v639 = vrot.slane %v277, 2
        %v640 = vsel %vm597, %v638, %v639
        %v641 = vrot.slane %v278, 2
        %v642 = vsel %vm597, %v639, %v641
        %v643 = vrot.slane %v279, 2
        %v644 = vrot.slane %v280, 2
        %v645 = vsel %vm597, %v643, %v644
        %v646 = vrot.slane %v281, 2
        %v647 = vsel %vm597, %v644, %v646
        %v648 = vrot.slane %v282, 2
        %v649 = vrot.slane %v283, 2
        %v650 = vsel %vm597, %v648, %v649
        %v651 = vrot.slane %v284, 2
        %v652 = vsel %vm597, %v649, %v651
        %v653 = vrot.slane %v285, 2
        %v654 = vrot.slane %v286, 2
        %v655 = vsel %vm597, %v653, %v654
        %v656 = vrot.slane %v287, 2
        %v657 = vsel %vm597, %v654, %v656
        %v658 = vrot.slane %v288, 2
        %v659 = vrot.slane %v289, 2
        %v660 = vsel %vm597, %v658, %v659
        %v661 = vrot.slane %v290, 2
        %v662 = vsel %vm597, %v659, %v661
        %v663 = vrot.slane %v291, 2
        %v664 = vrot.slane %v292, 2
        %v665 = vsel %vm597, %v663, %v664
        %v666 = vrot.slane %v293, 2
        %v667 = vsel %vm597, %v664, %v666
        %v668 = vrot.slane %v294, 2
        %v669 = vrot.slane %v295, 2
        %v670 = vsel %vm597, %v668, %v669
        %v671 = vrot.slane %v296, 2
        %v672 = vsel %vm597, %v669, %v671
        %v673 = vrot.slane %v297, 2
        %v674 = vrot.slane %v298, 2
        %v675 = vsel %vm597, %v673, %v674
        %v676 = vrot.slane %v299, 2
        %v677 = vsel %vm597, %v674, %v676
        %v710 = vpack.c.bf16 %v602, %v600
        %v711 = vpack.c.bf16 %v607, %v605
        %v712 = vpack.c.bf16 %v612, %v610
        %v713 = vpack.c.bf16 %v617, %v615
        %v714 = vpack.c.bf16 %v622, %v620
        %v715 = vpack.c.bf16 %v627, %v625
        %v716 = vpack.c.bf16 %v632, %v630
        %v717 = vpack.c.bf16 %v637, %v635
        %v718 = vpack.c.bf16 %v642, %v640
        %v719 = vpack.c.bf16 %v647, %v645
        %v720 = vpack.c.bf16 %v652, %v650
        %v721 = vpack.c.bf16 %v657, %v655
        %v722 = vpack.c.bf16 %v662, %v660
        %v723 = vpack.c.bf16 %v667, %v665
        %v724 = vpack.c.bf16 %v672, %v670
        %v725 = vpack.c.bf16 %v677, %v675
        %726 = vst.msk [vmem:[#allocation3 + $0x8] sm:$0xff] %vm322, %v710
        %727 = vst.msk [vmem:[#allocation3 + $0x30] sm:$0xff] %vm322, %v711
        %728 = vst.msk [vmem:[#allocation3 + $0x58] sm:$0xff] %vm322, %v712
        %729 = vst.msk [vmem:[#allocation3 + $0x80] sm:$0xff] %vm322, %v713
        %730 = vst.msk [vmem:[#allocation3 + $0xa8] sm:$0xff] %vm322, %v714
        %731 = vst.msk [vmem:[#allocation3 + $0xd0] sm:$0xff] %vm322, %v715
        %732 = vst.msk [vmem:[#allocation3 + $0xf8] sm:$0xff] %vm322, %v716
        %733 = vst.msk [vmem:[#allocation3 + $0x120] sm:$0xff] %vm322, %v717
        %734 = vst.msk [vmem:[#allocation3 + $0x148] sm:$0xff] %vm322, %v718
        %735 = vst.msk [vmem:[#allocation3 + $0x170] sm:$0xff] %vm322, %v719
        %736 = vst.msk [vmem:[#allocation3 + $0x198] sm:$0xff] %vm322, %v720
        %737 = vst.msk [vmem:[#allocation3 + $0x1c0] sm:$0xff] %vm322, %v721
        %738 = vst.msk [vmem:[#allocation3 + $0x1e8] sm:$0xff] %vm322, %v722
        %739 = vst.msk [vmem:[#allocation3 + $0x210] sm:$0xff] %vm322, %v723
        %740 = vst.msk [vmem:[#allocation3 + $0x238] sm:$0xff] %vm322, %v724
        %741 = vst.msk [vmem:[#allocation3 + $0x260] sm:$0xff] %vm322, %v725
        %v742 = vpack.c.bf16 %v301, %v300
        %759 = vrot.lane.b32.xlu0 %v307, 64
        %v760 = vpop.permute.xlu0 %759
        %761 = vrot.lane.b32.xlu0 %v308, 64
        %v762 = vpop.permute.xlu0 %761
        %763 = vrot.lane.b32.xlu0 %v309, 64
        %v764 = vpop.permute.xlu0 %763
        %765 = vrot.lane.b32.xlu0 %v310, 64
        %v766 = vpop.permute.xlu0 %765
        %767 = vrot.lane.b32.xlu0 %v311, 64
        %v768 = vpop.permute.xlu0 %767
        %769 = vrot.lane.b32.xlu0 %v312, 64
        %v770 = vpop.permute.xlu0 %769
        %771 = vrot.lane.b32.xlu0 %v313, 64
        %v772 = vpop.permute.xlu0 %771
        %773 = vrot.lane.b32.xlu0 %v314, 64
        %v774 = vpop.permute.xlu0 %773
        %775 = vrot.lane.b32.xlu0 %v315, 64
        %v776 = vpop.permute.xlu0 %775
        %777 = vrot.lane.b32.xlu0 %v316, 64
        %v778 = vpop.permute.xlu0 %777
        %779 = vrot.lane.b32.xlu0 %v317, 64
        %v780 = vpop.permute.xlu0 %779
        %781 = vrot.lane.b32.xlu0 %v318, 64
        %v782 = vpop.permute.xlu0 %781
        %783 = vrot.lane.b32.xlu0 %v319, 64
        %v784 = vpop.permute.xlu0 %783
        %785 = vrot.lane.b32.xlu0 %v320, 64
        %v786 = vpop.permute.xlu0 %785
        %787 = vrot.lane.b32.xlu0 %v321, 64
        %v788 = vpop.permute.xlu0 %787
        %789 = vrot.lane.b32.xlu0 %v742, 64
        %v790 = vpop.permute.xlu0 %789
        %807 = vst.msk [vmem:[#allocation3 + $0x8] sm:$0xff] %vm580, %v760
        %808 = vst.msk [vmem:[#allocation3 + $0x30] sm:$0xff] %vm580, %v762
        %809 = vst.msk [vmem:[#allocation3 + $0x58] sm:$0xff] %vm580, %v764
        %810 = vst.msk [vmem:[#allocation3 + $0x80] sm:$0xff] %vm580, %v766
        %811 = vst.msk [vmem:[#allocation3 + $0xa8] sm:$0xff] %vm580, %v768
        %812 = vst.msk [vmem:[#allocation3 + $0xd0] sm:$0xff] %vm580, %v770
        %813 = vst.msk [vmem:[#allocation3 + $0xf8] sm:$0xff] %vm580, %v772
        %814 = vst.msk [vmem:[#allocation3 + $0x120] sm:$0xff] %vm580, %v774
        %815 = vst.msk [vmem:[#allocation3 + $0x148] sm:$0xff] %vm580, %v776
        %816 = vst.msk [vmem:[#allocation3 + $0x170] sm:$0xff] %vm580, %v778
        %817 = vst.msk [vmem:[#allocation3 + $0x198] sm:$0xff] %vm580, %v780
        %818 = vst.msk [vmem:[#allocation3 + $0x1c0] sm:$0xff] %vm580, %v782
        %819 = vst.msk [vmem:[#allocation3 + $0x1e8] sm:$0xff] %vm580, %v784
        %820 = vst.msk [vmem:[#allocation3 + $0x210] sm:$0xff] %vm580, %v786
        %821 = vst.msk [vmem:[#allocation3 + $0x238] sm:$0xff] %vm580, %v788
        %822 = vst.msk [vmem:[#allocation3 + $0x260] sm:$0xff] %vm580, %v790
        %v826 = vrot.slane %v300, 1
        %v827 = vrot.slane %v301, 1
        %v828 = vsel %vm387, %v826, %v827
        %v829 = vrot.slane %v302, 1
        %v830 = vsel %vm387, %v827, %v829
        %v833 = vpack.c.bf16 %v830, %v828
        %834 = vst.msk [vmem:[#allocation3 + $0x10] sm:$0xff] %vm322, %v501
        %835 = vst.msk [vmem:[#allocation3 + $0x38] sm:$0xff] %vm322, %v502
        %836 = vst.msk [vmem:[#allocation3 + $0x60] sm:$0xff] %vm322, %v503
        %837 = vst.msk [vmem:[#allocation3 + $0x88] sm:$0xff] %vm322, %v504
        %838 = vst.msk [vmem:[#allocation3 + $0xb0] sm:$0xff] %vm322, %v505
        %839 = vst.msk [vmem:[#allocation3 + $0xd8] sm:$0xff] %vm322, %v506
        %840 = vst.msk [vmem:[#allocation3 + $0x100] sm:$0xff] %vm322, %v507
        %841 = vst.msk [vmem:[#allocation3 + $0x128] sm:$0xff] %vm322, %v508
        %842 = vst.msk [vmem:[#allocation3 + $0x150] sm:$0xff] %vm322, %v509
        %843 = vst.msk [vmem:[#allocation3 + $0x178] sm:$0xff] %vm322, %v510
        %844 = vst.msk [vmem:[#allocation3 + $0x1a0] sm:$0xff] %vm322, %v511
        %845 = vst.msk [vmem:[#allocation3 + $0x1c8] sm:$0xff] %vm322, %v512
        %846 = vst.msk [vmem:[#allocation3 + $0x1f0] sm:$0xff] %vm322, %v513
        %847 = vst.msk [vmem:[#allocation3 + $0x218] sm:$0xff] %vm322, %v514
        %848 = vst.msk [vmem:[#allocation3 + $0x240] sm:$0xff] %vm322, %v515
        %849 = vst.msk [vmem:[#allocation3 + $0x268] sm:$0xff] %vm322, %v833
        %v850 = vrot.slane %v300, 2
        %v851 = vrot.slane %v301, 2
        %v852 = vsel %vm597, %v850, %v851
        %v853 = vrot.slane %v302, 2
        %v854 = vsel %vm597, %v851, %v853
        %v857 = vpack.c.bf16 %v854, %v852
        %874 = vrot.lane.b32.xlu0 %v711, 64
        %v875 = vpop.permute.xlu0 %874
        %876 = vrot.lane.b32.xlu0 %v712, 64
        %v877 = vpop.permute.xlu0 %876
        %878 = vrot.lane.b32.xlu0 %v713, 64
        %v879 = vpop.permute.xlu0 %878
        %880 = vrot.lane.b32.xlu0 %v714, 64
        %v881 = vpop.permute.xlu0 %880
        %882 = vrot.lane.b32.xlu0 %v715, 64
        %v883 = vpop.permute.xlu0 %882
        %884 = vrot.lane.b32.xlu0 %v716, 64
        %v885 = vpop.permute.xlu0 %884
        %886 = vrot.lane.b32.xlu0 %v717, 64
        %v887 = vpop.permute.xlu0 %886
        %888 = vrot.lane.b32.xlu0 %v718, 64
        %v889 = vpop.permute.xlu0 %888
        %890 = vrot.lane.b32.xlu0 %v719, 64
        %v891 = vpop.permute.xlu0 %890
        %892 = vrot.lane.b32.xlu0 %v720, 64
        %v893 = vpop.permute.xlu0 %892
        %894 = vrot.lane.b32.xlu0 %v721, 64
        %v895 = vpop.permute.xlu0 %894
        %896 = vrot.lane.b32.xlu0 %v722, 64
        %v897 = vpop.permute.xlu0 %896
        %898 = vrot.lane.b32.xlu0 %v723, 64
        %v899 = vpop.permute.xlu0 %898
        %900 = vrot.lane.b32.xlu0 %v724, 64
        %v901 = vpop.permute.xlu0 %900
        %902 = vrot.lane.b32.xlu0 %v725, 64
        %v903 = vpop.permute.xlu0 %902
        %904 = vrot.lane.b32.xlu0 %v857, 64
        %v905 = vpop.permute.xlu0 %904
        %922 = vst.msk [vmem:[#allocation3 + $0x10] sm:$0xff] %vm580, %v875
        %923 = vst.msk [vmem:[#allocation3 + $0x38] sm:$0xff] %vm580, %v877
        %924 = vst.msk [vmem:[#allocation3 + $0x60] sm:$0xff] %vm580, %v879
        %925 = vst.msk [vmem:[#allocation3 + $0x88] sm:$0xff] %vm580, %v881
        %926 = vst.msk [vmem:[#allocation3 + $0xb0] sm:$0xff] %vm580, %v883
        %927 = vst.msk [vmem:[#allocation3 + $0xd8] sm:$0xff] %vm580, %v885
        %928 = vst.msk [vmem:[#allocation3 + $0x100] sm:$0xff] %vm580, %v887
        %929 = vst.msk [vmem:[#allocation3 + $0x128] sm:$0xff] %vm580, %v889
        %930 = vst.msk [vmem:[#allocation3 + $0x150] sm:$0xff] %vm580, %v891
        %931 = vst.msk [vmem:[#allocation3 + $0x178] sm:$0xff] %vm580, %v893
        %932 = vst.msk [vmem:[#allocation3 + $0x1a0] sm:$0xff] %vm580, %v895
        %933 = vst.msk [vmem:[#allocation3 + $0x1c8] sm:$0xff] %vm580, %v897
        %934 = vst.msk [vmem:[#allocation3 + $0x1f0] sm:$0xff] %vm580, %v899
        %935 = vst.msk [vmem:[#allocation3 + $0x218] sm:$0xff] %vm580, %v901
        %936 = vst.msk [vmem:[#allocation3 + $0x240] sm:$0xff] %vm580, %v903
        %937 = vst.msk [vmem:[#allocation3 + $0x268] sm:$0xff] %vm580, %v905
        %v938 = vpack.c.bf16 %v304, %v303
        %939 = vst.msk [vmem:[#allocation3 + $0x18] sm:$0xff] %vm322, %v308
        %940 = vst.msk [vmem:[#allocation3 + $0x40] sm:$0xff] %vm322, %v309
        %941 = vst.msk [vmem:[#allocation3 + $0x68] sm:$0xff] %vm322, %v310
        %942 = vst.msk [vmem:[#allocation3 + $0x90] sm:$0xff] %vm322, %v311
        %943 = vst.msk [vmem:[#allocation3 + $0xb8] sm:$0xff] %vm322, %v312
        %944 = vst.msk [vmem:[#allocation3 + $0xe0] sm:$0xff] %vm322, %v313
        %945 = vst.msk [vmem:[#allocation3 + $0x108] sm:$0xff] %vm322, %v314
        %946 = vst.msk [vmem:[#allocation3 + $0x130] sm:$0xff] %vm322, %v315
        %947 = vst.msk [vmem:[#allocation3 + $0x158] sm:$0xff] %vm322, %v316
        %948 = vst.msk [vmem:[#allocation3 + $0x180] sm:$0xff] %vm322, %v317
        %949 = vst.msk [vmem:[#allocation3 + $0x1a8] sm:$0xff] %vm322, %v318
        %950 = vst.msk [vmem:[#allocation3 + $0x1d0] sm:$0xff] %vm322, %v319
        %951 = vst.msk [vmem:[#allocation3 + $0x1f8] sm:$0xff] %vm322, %v320
        %952 = vst.msk [vmem:[#allocation3 + $0x220] sm:$0xff] %vm322, %v321
        %953 = vst.msk [vmem:[#allocation3 + $0x248] sm:$0xff] %vm322, %v742
        %954 = vst.msk [vmem:[#allocation3 + $0x270] sm:$0xff] %vm322, %v938
        %v958 = vrot.slane %v303, 1
        %v959 = vrot.slane %v304, 1
        %v960 = vsel %vm387, %v958, %v959
        %v961 = vrot.slane %v305, 1
        %v962 = vsel %vm387, %v959, %v961
        %v965 = vpack.c.bf16 %v962, %v960
        %968 = vrot.lane.b32.xlu0 %v833, 64
        %v969 = vpop.permute.xlu0 %968
        %970 = vrot.lane.b32.xlu0 %v965, 64
        %v971 = vpop.permute.xlu0 %970
        %974 = vst.msk [vmem:[#allocation3 + $0x18] sm:$0xff] %vm580, %v537
        %975 = vst.msk [vmem:[#allocation3 + $0x40] sm:$0xff] %vm580, %v539
        %976 = vst.msk [vmem:[#allocation3 + $0x68] sm:$0xff] %vm580, %v541
        %977 = vst.msk [vmem:[#allocation3 + $0x90] sm:$0xff] %vm580, %v543
        %978 = vst.msk [vmem:[#allocation3 + $0xb8] sm:$0xff] %vm580, %v545
        %979 = vst.msk [vmem:[#allocation3 + $0xe0] sm:$0xff] %vm580, %v547
        %980 = vst.msk [vmem:[#allocation3 + $0x108] sm:$0xff] %vm580, %v549
        %981 = vst.msk [vmem:[#allocation3 + $0x130] sm:$0xff] %vm580, %v551
        %982 = vst.msk [vmem:[#allocation3 + $0x158] sm:$0xff] %vm580, %v553
        %983 = vst.msk [vmem:[#allocation3 + $0x180] sm:$0xff] %vm580, %v555
        %984 = vst.msk [vmem:[#allocation3 + $0x1a8] sm:$0xff] %vm580, %v557
        %985 = vst.msk [vmem:[#allocation3 + $0x1d0] sm:$0xff] %vm580, %v559
        %986 = vst.msk [vmem:[#allocation3 + $0x1f8] sm:$0xff] %vm580, %v561
        %987 = vst.msk [vmem:[#allocation3 + $0x220] sm:$0xff] %vm580, %v563
        %988 = vst.msk [vmem:[#allocation3 + $0x248] sm:$0xff] %vm580, %v969
        %989 = vst.msk [vmem:[#allocation3 + $0x270] sm:$0xff] %vm580, %v971
        %v990 = vrot.slane %v303, 2
        %v991 = vrot.slane %v304, 2
        %v992 = vsel %vm597, %v990, %v991
        %v993 = vrot.slane %v305, 2
        %v994 = vsel %vm597, %v991, %v993
        %v997 = vpack.c.bf16 %v994, %v992
        %998 = vst.msk [vmem:[#allocation3 + $0x20] sm:$0xff] %vm322, %v712
        %999 = vst.msk [vmem:[#allocation3 + $0x48] sm:$0xff] %vm322, %v713
        %1000 = vst.msk [vmem:[#allocation3 + $0x70] sm:$0xff] %vm322, %v714
        %1001 = vst.msk [vmem:[#allocation3 + $0x98] sm:$0xff] %vm322, %v715
        %1002 = vst.msk [vmem:[#allocation3 + $0xc0] sm:$0xff] %vm322, %v716
        %1003 = vst.msk [vmem:[#allocation3 + $0xe8] sm:$0xff] %vm322, %v717
        %1004 = vst.msk [vmem:[#allocation3 + $0x110] sm:$0xff] %vm322, %v718
        %1005 = vst.msk [vmem:[#allocation3 + $0x138] sm:$0xff] %vm322, %v719
        %1006 = vst.msk [vmem:[#allocation3 + $0x160] sm:$0xff] %vm322, %v720
        %1007 = vst.msk [vmem:[#allocation3 + $0x188] sm:$0xff] %vm322, %v721
        %1008 = vst.msk [vmem:[#allocation3 + $0x1b0] sm:$0xff] %vm322, %v722
        %1009 = vst.msk [vmem:[#allocation3 + $0x1d8] sm:$0xff] %vm322, %v723
        %1010 = vst.msk [vmem:[#allocation3 + $0x200] sm:$0xff] %vm322, %v724
        %1011 = vst.msk [vmem:[#allocation3 + $0x228] sm:$0xff] %vm322, %v725
        %1012 = vst.msk [vmem:[#allocation3 + $0x250] sm:$0xff] %vm322, %v857
        %1013 = vst.msk [vmem:[#allocation3 + $0x278] sm:$0xff] %vm322, %v997
        %v1014 = vld [vmem:[#allocation3] sm:$0xff]
        %v1015 = vld [vmem:[#allocation3 + $0x8] sm:$0xff]
        %v1016 = vld [vmem:[#allocation3 + $0x10] sm:$0xff]
        %v1017 = vld [vmem:[#allocation3 + $0x18] sm:$0xff]
        %v1018 = vld [vmem:[#allocation3 + $0x20] sm:$0xff]
        %v1019 = vld [vmem:[#allocation3 + $0x28] sm:$0xff]
        %v1020 = vld [vmem:[#allocation3 + $0x30] sm:$0xff]
        %v1021 = vld [vmem:[#allocation3 + $0x38] sm:$0xff]
        %v1022 = vld [vmem:[#allocation3 + $0x40] sm:$0xff]
        %v1023 = vld [vmem:[#allocation3 + $0x48] sm:$0xff]
        %v1024 = vld [vmem:[#allocation3 + $0x50] sm:$0xff]
        %v1025 = vld [vmem:[#allocation3 + $0x58] sm:$0xff]
        %v1026 = vld [vmem:[#allocation3 + $0x60] sm:$0xff]
        %v1027 = vld [vmem:[#allocation3 + $0x68] sm:$0xff]
        %v1028 = vld [vmem:[#allocation3 + $0x70] sm:$0xff]
        %v1029 = vld [vmem:[#allocation3 + $0x78] sm:$0xff]
        %v1030 = vld [vmem:[#allocation3 + $0x80] sm:$0xff]
        %v1031 = vld [vmem:[#allocation3 + $0x88] sm:$0xff]
        %v1032 = vld [vmem:[#allocation3 + $0x90] sm:$0xff]
        %v1033 = vld [vmem:[#allocation3 + $0x98] sm:$0xff]
        %v1034 = vld [vmem:[#allocation3 + $0xa0] sm:$0xff]
        %v1035 = vld [vmem:[#allocation3 + $0xa8] sm:$0xff]
        %v1036 = vld [vmem:[#allocation3 + $0xb0] sm:$0xff]
        %v1037 = vld [vmem:[#allocation3 + $0xb8] sm:$0xff]
        %v1038 = vld [vmem:[#allocation3 + $0xc0] sm:$0xff]
        %v1039 = vld [vmem:[#allocation3 + $0xc8] sm:$0xff]
        %v1040 = vld [vmem:[#allocation3 + $0xd0] sm:$0xff]
        %v1041 = vld [vmem:[#allocation3 + $0xd8] sm:$0xff]
        %v1042 = vld [vmem:[#allocation3 + $0xe0] sm:$0xff]
        %v1043 = vld [vmem:[#allocation3 + $0xe8] sm:$0xff]
        %v1044 = vld [vmem:[#allocation3 + $0xf0] sm:$0xff]
        %v1045 = vld [vmem:[#allocation3 + $0xf8] sm:$0xff]
        %v1046 = vld [vmem:[#allocation3 + $0x100] sm:$0xff]
        %v1047 = vld [vmem:[#allocation3 + $0x108] sm:$0xff]
        %v1048 = vld [vmem:[#allocation3 + $0x110] sm:$0xff]
        %v1049 = vld [vmem:[#allocation3 + $0x118] sm:$0xff]
        %v1050 = vld [vmem:[#allocation3 + $0x120] sm:$0xff]
        %v1051 = vld [vmem:[#allocation3 + $0x128] sm:$0xff]
        %v1052 = vld [vmem:[#allocation3 + $0x130] sm:$0xff]
        %v1053 = vld [vmem:[#allocation3 + $0x138] sm:$0xff]
        %v1054 = vld [vmem:[#allocation3 + $0x140] sm:$0xff]
        %v1055 = vld [vmem:[#allocation3 + $0x148] sm:$0xff]
        %v1056 = vld [vmem:[#allocation3 + $0x150] sm:$0xff]
        %v1057 = vld [vmem:[#allocation3 + $0x158] sm:$0xff]
        %v1058 = vld [vmem:[#allocation3 + $0x160] sm:$0xff]
        %v1059 = vld [vmem:[#allocation3 + $0x168] sm:$0xff]
        %v1060 = vld [vmem:[#allocation3 + $0x170] sm:$0xff]
        %v1061 = vld [vmem:[#allocation3 + $0x178] sm:$0xff]
        %v1062 = vld [vmem:[#allocation3 + $0x180] sm:$0xff]
        %v1063 = vld [vmem:[#allocation3 + $0x188] sm:$0xff]
        %v1064 = vld [vmem:[#allocation3 + $0x190] sm:$0xff]
        %v1065 = vld [vmem:[#allocation3 + $0x198] sm:$0xff]
        %v1066 = vld [vmem:[#allocation3 + $0x1a0] sm:$0xff]
        %v1067 = vld [vmem:[#allocation3 + $0x1a8] sm:$0xff]
        %v1068 = vld [vmem:[#allocation3 + $0x1b0] sm:$0xff]
        %v1069 = vld [vmem:[#allocation3 + $0x1b8] sm:$0xff]
        %v1070 = vld [vmem:[#allocation3 + $0x1c0] sm:$0xff]
        %v1071 = vld [vmem:[#allocation3 + $0x1c8] sm:$0xff]
        %v1072 = vld [vmem:[#allocation3 + $0x1d0] sm:$0xff]
        %v1073 = vld [vmem:[#allocation3 + $0x1d8] sm:$0xff]
        %v1074 = vld [vmem:[#allocation3 + $0x1e0] sm:$0xff]
        %v1075 = vld [vmem:[#allocation3 + $0x1e8] sm:$0xff]
        %v1076 = vld [vmem:[#allocation3 + $0x1f0] sm:$0xff]
        %v1077 = vld [vmem:[#allocation3 + $0x1f8] sm:$0xff]
        %v1078 = vld [vmem:[#allocation3 + $0x200] sm:$0xff]
        %v1079 = vld [vmem:[#allocation3 + $0x208] sm:$0xff]
        %v1080 = vld [vmem:[#allocation3 + $0x210] sm:$0xff]
        %v1081 = vld [vmem:[#allocation3 + $0x218] sm:$0xff]
        %v1082 = vld [vmem:[#allocation3 + $0x220] sm:$0xff]
        %v1083 = vld [vmem:[#allocation3 + $0x228] sm:$0xff]
        %v1084 = vld [vmem:[#allocation3 + $0x230] sm:$0xff]
        %v1085 = vld [vmem:[#allocation3 + $0x238] sm:$0xff]
        %v1086 = vld [vmem:[#allocation3 + $0x240] sm:$0xff]
        %v1087 = vld [vmem:[#allocation3 + $0x248] sm:$0xff]
        %v1088 = vld [vmem:[#allocation3 + $0x250] sm:$0xff]
        %v1089 = vld [vmem:[#allocation3 + $0x258] sm:$0xff]
        %v1090 = vld [vmem:[#allocation3 + $0x260] sm:$0xff]
        %v1091 = vld [vmem:[#allocation3 + $0x268] sm:$0xff]
        %v1092 = vld [vmem:[#allocation3 + $0x270] sm:$0xff]
        %v1093 = vld [vmem:[#allocation3 + $0x278] sm:$0xff]
        %v1094 = vld [vmem:[%s2] sm:$0xf]
        %v1095 = vld [vmem:[%s2 + $0x4] sm:$0xf]
        %v1096 = vld [vmem:[%s2 + $0x8] sm:$0xf]
        %v1097 = vld [vmem:[%s2 + $0xc] sm:$0xf]
        %v1098 = vld [vmem:[%s2 + $0x10] sm:$0xf]
        %v1099 = vld [vmem:[%s2 + $0x14] sm:$0xf]
        %v1100 = vld [vmem:[%s2 + $0x18] sm:$0xf]
        %v1101 = vld [vmem:[%s2 + $0x1c] sm:$0xf]
        %v1102 = vld [vmem:[%s2 + $0x20] sm:$0xf]
        %v1103 = vld [vmem:[%s2 + $0x24] sm:$0xf]
        %v1104 = vld [vmem:[%s2 + $0x28] sm:$0xf]
        %v1105 = vld [vmem:[%s2 + $0x2c] sm:$0xf]
        %v1106 = vld [vmem:[%s2 + $0x30] sm:$0xf]
        %v1107 = vld [vmem:[%s2 + $0x34] sm:$0xf]
        %v1108 = vld [vmem:[%s2 + $0x38] sm:$0xf]
        %v1109 = vld [vmem:[%s2 + $0x3c] sm:$0xf]
        %v1110 = vld [vmem:[%s2 + $0x40] sm:$0xf]
        %v1111 = vld [vmem:[%s2 + $0x44] sm:$0xf]
        %v1112 = vld [vmem:[%s2 + $0x48] sm:$0xf]
        %v1113 = vld [vmem:[%s2 + $0x4c] sm:$0xf]
        %v1114 = vld [vmem:[%s2 + $0x50] sm:$0xf]
        %v1115 = vld [vmem:[%s2 + $0x54] sm:$0xf]
        %v1116 = vld [vmem:[%s2 + $0x58] sm:$0xf]
        %v1117 = vld [vmem:[%s2 + $0x5c] sm:$0xf]
        %v1118 = vld [vmem:[%s2 + $0x60] sm:$0xf]
        %v1119 = vld [vmem:[%s2 + $0x64] sm:$0xf]
        %v1120 = vld [vmem:[%s2 + $0x68] sm:$0xf]
        %v1121 = vld [vmem:[%s2 + $0x6c] sm:$0xf]
        %v1122 = vld [vmem:[%s2 + $0x70] sm:$0xf]
        %v1123 = vld [vmem:[%s2 + $0x74] sm:$0xf]
        %v1124 = vld [vmem:[%s2 + $0x78] sm:$0xf]
        %v1125 = vld [vmem:[%s2 + $0x7c] sm:$0xf]
        %v1126 = vld [vmem:[%s2 + $0x80] sm:$0xf]
        %v1127 = vld [vmem:[%s2 + $0x84] sm:$0xf]
        %v1128 = vld [vmem:[%s2 + $0x88] sm:$0xf]
        %v1129 = vld [vmem:[%s2 + $0x8c] sm:$0xf]
        %v1130 = vld [vmem:[%s2 + $0x90] sm:$0xf]
        %v1131 = vld [vmem:[%s2 + $0x94] sm:$0xf]
        %v1132 = vld [vmem:[%s2 + $0x98] sm:$0xf]
        %v1133 = vld [vmem:[%s2 + $0x9c] sm:$0xf]
        %v1134 = vld [vmem:[%s2 + $0xa0] sm:$0xf]
        %v1135 = vld [vmem:[%s2 + $0xa4] sm:$0xf]
        %v1136 = vld [vmem:[%s2 + $0xa8] sm:$0xf]
        %v1137 = vld [vmem:[%s2 + $0xac] sm:$0xf]
        %v1138 = vld [vmem:[%s2 + $0xb0] sm:$0xf]
        %v1139 = vld [vmem:[%s2 + $0xb4] sm:$0xf]
        %v1140 = vld [vmem:[%s2 + $0xb8] sm:$0xf]
        %v1141 = vld [vmem:[%s2 + $0xbc] sm:$0xf]
        %v1142 = vld [vmem:[%s2 + $0xc0] sm:$0xf]
        %v1143 = vld [vmem:[%s2 + $0xc4] sm:$0xf]
        %v1144 = vld [vmem:[%s2 + $0xc8] sm:$0xf]
        %v1145 = vld [vmem:[%s2 + $0xcc] sm:$0xf]
        %v1146 = vld [vmem:[%s2 + $0xd0] sm:$0xf]
        %v1147 = vld [vmem:[%s2 + $0xd4] sm:$0xf]
        %v1148 = vld [vmem:[%s2 + $0xd8] sm:$0xf]
        %v1149 = vld [vmem:[%s2 + $0xdc] sm:$0xf]
        %v1150 = vld [vmem:[%s2 + $0xe0] sm:$0xf]
        %v1151 = vld [vmem:[%s2 + $0xe4] sm:$0xf]
        %v1152 = vld [vmem:[%s2 + $0xe8] sm:$0xf]
        %v1153 = vld [vmem:[%s2 + $0xec] sm:$0xf]
        %v1154 = vld [vmem:[%s2 + $0xf0] sm:$0xf]
        %v1155 = vld [vmem:[%s2 + $0xf4] sm:$0xf]
        %v1156 = vld [vmem:[%s2 + $0xf8] sm:$0xf]
        %v1157 = vld [vmem:[%s2 + $0xfc] sm:$0xf]
        %v1158 = vld [vmem:[%s2 + $0x100] sm:$0xf]
        %v1159 = vld [vmem:[%s2 + $0x104] sm:$0xf]
        %v1160 = vld [vmem:[%s2 + $0x108] sm:$0xf]
        %v1161 = vld [vmem:[%s2 + $0x10c] sm:$0xf]
        %v1162 = vld [vmem:[%s2 + $0x110] sm:$0xf]
        %v1163 = vld [vmem:[%s2 + $0x114] sm:$0xf]
        %v1164 = vld [vmem:[%s2 + $0x118] sm:$0xf]
        %v1165 = vld [vmem:[%s2 + $0x11c] sm:$0xf]
        %v1166 = vld [vmem:[%s3] sm:$0x1]
        %v1168 = vlaneseq
        %v1169 = vshrl.u32 %v1168, 7
        %v1170 = vsub.s32 0, %v1169
        %v1171 = vrot.slane %v1166, %v1170
        %v1245 = vunpack.c.l.b16 %v1094
        %v1246 = vunpack.c.l.b16 %v1095
        %v1247 = vunpack.c.l.b16 %v1096
        %v1248 = vunpack.c.l.b16 %v1097
        %v1249 = vunpack.c.l.b16 %v1098
        %v1250 = vunpack.c.l.b16 %v1099
        %v1251 = vunpack.c.l.b16 %v1100
        %v1252 = vunpack.c.l.b16 %v1101
        %v1253 = vunpack.c.l.b16 %v1102
        %v1254 = vunpack.c.l.b16 %v1103
        %v1255 = vunpack.c.l.b16 %v1104
        %v1256 = vunpack.c.l.b16 %v1105
        %v1257 = vunpack.c.l.b16 %v1106
        %v1258 = vunpack.c.l.b16 %v1107
        %v1259 = vunpack.c.l.b16 %v1108
        %v1260 = vunpack.c.l.b16 %v1109
        %v1261 = vunpack.c.l.b16 %v1110
        %v1262 = vunpack.c.l.b16 %v1111
        %v1263 = vunpack.c.l.b16 %v1112
        %v1264 = vunpack.c.l.b16 %v1113
        %v1265 = vunpack.c.l.b16 %v1114
        %v1266 = vunpack.c.l.b16 %v1115
        %v1267 = vunpack.c.l.b16 %v1116
        %v1268 = vunpack.c.l.b16 %v1117
        %v1269 = vunpack.c.l.b16 %v1118
        %v1270 = vunpack.c.l.b16 %v1119
        %v1271 = vunpack.c.l.b16 %v1120
        %v1272 = vunpack.c.l.b16 %v1121
        %v1273 = vunpack.c.l.b16 %v1122
        %v1274 = vunpack.c.l.b16 %v1123
        %v1275 = vunpack.c.l.b16 %v1124
        %v1276 = vunpack.c.l.b16 %v1125
        %v1277 = vunpack.c.l.b16 %v1126
        %v1278 = vunpack.c.l.b16 %v1127
        %v1279 = vunpack.c.l.b16 %v1128
        %v1280 = vunpack.c.l.b16 %v1129
        %v1281 = vunpack.c.l.b16 %v1130
        %v1282 = vunpack.c.l.b16 %v1131
        %v1283 = vunpack.c.l.b16 %v1132
        %v1284 = vunpack.c.l.b16 %v1133
        %v1285 = vunpack.c.l.b16 %v1134
        %v1286 = vunpack.c.l.b16 %v1135
        %v1287 = vunpack.c.l.b16 %v1136
        %v1288 = vunpack.c.l.b16 %v1137
        %v1289 = vunpack.c.l.b16 %v1138
        %v1290 = vunpack.c.l.b16 %v1139
        %v1291 = vunpack.c.l.b16 %v1140
        %v1292 = vunpack.c.l.b16 %v1141
        %v1293 = vunpack.c.l.b16 %v1142
        %v1294 = vunpack.c.l.b16 %v1143
        %v1295 = vunpack.c.l.b16 %v1144
        %v1296 = vunpack.c.l.b16 %v1145
        %v1297 = vunpack.c.l.b16 %v1146
        %v1298 = vunpack.c.l.b16 %v1147
        %v1299 = vunpack.c.l.b16 %v1148
        %v1300 = vunpack.c.l.b16 %v1149
        %v1301 = vunpack.c.l.b16 %v1150
        %v1302 = vunpack.c.l.b16 %v1151
        %v1303 = vunpack.c.l.b16 %v1152
        %v1304 = vunpack.c.l.b16 %v1153
        %v1305 = vunpack.c.l.b16 %v1154
        %v1306 = vunpack.c.l.b16 %v1155
        %v1307 = vunpack.c.l.b16 %v1156
        %v1308 = vunpack.c.l.b16 %v1157
        %v1309 = vunpack.c.l.b16 %v1158
        %v1310 = vunpack.c.l.b16 %v1159
        %v1311 = vunpack.c.l.b16 %v1160
        %v1312 = vunpack.c.l.b16 %v1161
        %v1313 = vunpack.c.l.b16 %v1162
        %v1314 = vunpack.c.l.b16 %v1163
        %v1315 = vunpack.c.l.b16 %v1164
        %v1316 = vunpack.c.l.b16 %v1165
        %v1317 = vpack.c.b16 %v1246, %v1245
        %v1318 = vpack.c.b16 %v1248, %v1247
        %v1319 = vpack.c.b16 %v1250, %v1249
        %v1320 = vpack.c.b16 %v1252, %v1251
        %v1321 = vpack.c.b16 %v1254, %v1253
        %v1322 = vpack.c.b16 %v1256, %v1255
        %v1323 = vpack.c.b16 %v1258, %v1257
        %v1324 = vpack.c.b16 %v1260, %v1259
        %v1325 = vpack.c.b16 %v1262, %v1261
        %v1326 = vpack.c.b16 %v1264, %v1263
        %v1327 = vpack.c.b16 %v1266, %v1265
        %v1328 = vpack.c.b16 %v1268, %v1267
        %v1329 = vpack.c.b16 %v1270, %v1269
        %v1330 = vpack.c.b16 %v1272, %v1271
        %v1331 = vpack.c.b16 %v1274, %v1273
        %v1332 = vpack.c.b16 %v1276, %v1275
        %v1333 = vpack.c.b16 %v1278, %v1277
        %v1334 = vpack.c.b16 %v1280, %v1279
        %v1335 = vpack.c.b16 %v1282, %v1281
        %v1336 = vpack.c.b16 %v1284, %v1283
        %v1337 = vpack.c.b16 %v1286, %v1285
        %v1338 = vpack.c.b16 %v1288, %v1287
        %v1339 = vpack.c.b16 %v1290, %v1289
        %v1340 = vpack.c.b16 %v1292, %v1291
        %v1341 = vpack.c.b16 %v1294, %v1293
        %v1342 = vpack.c.b16 %v1296, %v1295
        %v1343 = vpack.c.b16 %v1298, %v1297
        %v1344 = vpack.c.b16 %v1300, %v1299
        %v1345 = vpack.c.b16 %v1302, %v1301
        %v1346 = vpack.c.b16 %v1304, %v1303
        %v1347 = vpack.c.b16 %v1306, %v1305
        %v1348 = vpack.c.b16 %v1308, %v1307
        %v1349 = vpack.c.b16 %v1310, %v1309
        %v1350 = vpack.c.b16 %v1312, %v1311
        %v1351 = vpack.c.b16 %v1314, %v1313
        %v1352 = vpack.c.b16 %v1316, %v1315
        %v1390 = vsel %vm322, %v1018, 0
        %v1393 = vsel %vm322, %v1023, 0
        %v1396 = vsel %vm322, %v1028, 0
        %v1399 = vsel %vm322, %v1033, 0
        %v1402 = vsel %vm322, %v1038, 0
        %v1405 = vsel %vm322, %v1043, 0
        %v1408 = vsel %vm322, %v1048, 0
        %v1411 = vsel %vm322, %v1053, 0
        %v1414 = vsel %vm322, %v1058, 0
        %v1417 = vsel %vm322, %v1063, 0
        %v1420 = vsel %vm322, %v1068, 0
        %v1423 = vsel %vm322, %v1073, 0
        %v1426 = vsel %vm322, %v1078, 0
        %v1429 = vsel %vm322, %v1083, 0
        %v1432 = vsel %vm322, %v1088, 0
        %v1435 = vsel %vm322, %v1093, 0
        %1437 = vmatprep.subr.bf16.mxu0 0
        %1438 = vmatpush1.bf16.msra.mxu0 %v1317
        %1439 = vmatprep.subr.bf16.mxu0 0
        %1440 = vmatpush1.bf16.msra.mxu0 %v1318
        %1441 = vmatprep.subr.bf16.mxu0 0
        %1442 = vmatpush1.bf16.msra.mxu0 %v1319
        %1443 = vmatprep.subr.bf16.mxu0 0
        %1444 = vmatpush1.bf16.msra.mxu0 %v1320
        %1445 = vmatprep.subr.bf16.mxu0 0
        %1446 = vmatpush1.bf16.msra.mxu0 %v1321
        %1447 = vmatprep.subr.bf16.mxu0 0
        %1448 = vmatpush1.bf16.msra.mxu0 %v1322
        %1449 = vmatprep.subr.bf16.mxu0 0
        %1450 = vmatpush1.bf16.msra.mxu0 %v1323
        %1451 = vmatprep.subr.bf16.mxu0 0
        %1452 = vmatpush1.bf16.msra.mxu0 %v1324
        %1453 = vmatprep.subr.bf16.mxu0 0
        %1454 = vmatpush1.bf16.msra.mxu0 %v1325
        %1455 = vmatprep.subr.bf16.mxu0 0
        %1456 = vmatpush1.bf16.msra.mxu0 %v1326
        %1457 = vmatprep.subr.bf16.mxu0 0
        %1458 = vmatpush1.bf16.msra.mxu0 %v1327
        %1459 = vmatprep.subr.bf16.mxu0 0
        %1460 = vmatpush1.bf16.msra.mxu0 %v1328
        %1461 = vmatprep.subr.bf16.mxu0 0
        %1462 = vmatpush1.bf16.msra.mxu0 %v1329
        %1463 = vmatprep.subr.bf16.mxu0 0
        %1464 = vmatpush1.bf16.msra.mxu0 %v1330
        %1465 = vmatprep.subr.bf16.mxu0 0
        %1466 = vmatpush1.bf16.msra.mxu0 %v1331
        %1467 = vmatprep.subr.bf16.mxu0 0
        %1468 = vmatpush1.bf16.msra.mxu0 %v1332
        %1469 = vmatprep.mubr.bf16.mxu0 %v1015
        %1470 = vmatmul.mubr.bf16.gmra.mrb[0].mxu0 %v1014
        %v1471 = vpop.f32.mrb[0].mxu0
        %v1472 = vadd.f32 %v1171, %v1471
        %v1473 = vpop.f32.mrb[0].mxu0
        %v1474 = vpop.f32.mrb[0].mxu0
        %v1475 = vadd.f32 %v1171, %v1474
        %v1476 = vpop.f32.mrb[0].mxu0
        %1477 = vmatprep.mubr.bf16.mxu0 %v1020
        %1478 = vmatmul.mubr.bf16.gmra.mrb[0].mxu0 %v1019
        %v1479 = vpop.f32.mrb[0].mxu0
        %v1480 = vadd.f32 %v1171, %v1479
        %v1481 = vpop.f32.mrb[0].mxu0
        %v1482 = vpop.f32.mrb[0].mxu0
        %v1483 = vadd.f32 %v1171, %v1482
        %v1484 = vpop.f32.mrb[0].mxu0
        %1485 = vmatprep.mubr.bf16.mxu0 %v1025
        %1486 = vmatmul.mubr.bf16.gmra.mrb[0].mxu0 %v1024
        %v1487 = vpop.f32.mrb[0].mxu0
        %v1488 = vadd.f32 %v1171, %v1487
        %v1489 = vpop.f32.mrb[0].mxu0
        %v1490 = vpop.f32.mrb[0].mxu0
        %v1491 = vadd.f32 %v1171, %v1490
        %v1492 = vpop.f32.mrb[0].mxu0
        %1493 = vmatprep.mubr.bf16.mxu0 %v1030
        %1494 = vmatmul.mubr.bf16.gmra.mrb[0].mxu0 %v1029
        %v1495 = vpop.f32.mrb[0].mxu0
        %v1496 = vadd.f32 %v1171, %v1495
        %v1497 = vpop.f32.mrb[0].mxu0
        %v1498 = vpop.f32.mrb[0].mxu0
        %v1499 = vadd.f32 %v1171, %v1498
        %v1500 = vpop.f32.mrb[0].mxu0
        %1501 = vmatprep.mubr.bf16.mxu0 %v1035
        %1502 = vmatmul.mubr.bf16.gmra.mrb[0].mxu0 %v1034
        %v1503 = vpop.f32.mrb[0].mxu0
        %v1504 = vadd.f32 %v1171, %v1503
        %v1505 = vpop.f32.mrb[0].mxu0
        %v1506 = vpop.f32.mrb[0].mxu0
        %v1507 = vadd.f32 %v1171, %v1506
        %v1508 = vpop.f32.mrb[0].mxu0
        %1509 = vmatprep.mubr.bf16.mxu0 %v1040
        %1510 = vmatmul.mubr.bf16.gmra.mrb[0].mxu0 %v1039
        %v1511 = vpop.f32.mrb[0].mxu0
        %v1512 = vadd.f32 %v1171, %v1511
        %v1513 = vpop.f32.mrb[0].mxu0
        %v1514 = vpop.f32.mrb[0].mxu0
        %v1515 = vadd.f32 %v1171, %v1514
        %v1516 = vpop.f32.mrb[0].mxu0
        %1517 = vmatprep.mubr.bf16.mxu0 %v1045
        %1518 = vmatmul.mubr.bf16.gmra.mrb[0].mxu0 %v1044
        %v1519 = vpop.f32.mrb[0].mxu0
        %v1520 = vadd.f32 %v1171, %v1519
        %v1521 = vpop.f32.mrb[0].mxu0
        %v1522 = vpop.f32.mrb[0].mxu0
        %v1523 = vadd.f32 %v1171, %v1522
        %v1524 = vpop.f32.mrb[0].mxu0
        %1525 = vmatprep.mubr.bf16.mxu0 %v1050
        %1526 = vmatmul.mubr.bf16.gmra.mrb[0].mxu0 %v1049
        %v1527 = vpop.f32.mrb[0].mxu0
        %v1528 = vadd.f32 %v1171, %v1527
        %v1529 = vpop.f32.mrb[0].mxu0
        %v1530 = vpop.f32.mrb[0].mxu0
        %v1531 = vadd.f32 %v1171, %v1530
        %v1532 = vpop.f32.mrb[0].mxu0
        %1533 = vmatprep.mubr.bf16.mxu0 %v1055
        %1534 = vmatmul.mubr.bf16.gmra.mrb[0].mxu0 %v1054
        %v1535 = vpop.f32.mrb[0].mxu0
        %v1536 = vadd.f32 %v1171, %v1535
        %v1537 = vpop.f32.mrb[0].mxu0
        %v1538 = vpop.f32.mrb[0].mxu0
        %v1539 = vadd.f32 %v1171, %v1538
        %v1540 = vpop.f32.mrb[0].mxu0
        %1541 = vmatprep.mubr.bf16.mxu0 %v1060
        %1542 = vmatmul.mubr.bf16.gmra.mrb[0].mxu0 %v1059
        %v1543 = vpop.f32.mrb[0].mxu0
        %v1544 = vadd.f32 %v1171, %v1543
        %v1545 = vpop.f32.mrb[0].mxu0
        %v1546 = vpop.f32.mrb[0].mxu0
        %v1547 = vadd.f32 %v1171, %v1546
        %v1548 = vpop.f32.mrb[0].mxu0
        %1549 = vmatprep.mubr.bf16.mxu0 %v1065
        %1550 = vmatmul.mubr.bf16.gmra.mrb[0].mxu0 %v1064
        %v1551 = vpop.f32.mrb[0].mxu0
        %v1552 = vadd.f32 %v1171, %v1551
        %v1553 = vpop.f32.mrb[0].mxu0
        %v1554 = vpop.f32.mrb[0].mxu0
        %v1555 = vadd.f32 %v1171, %v1554
        %v1556 = vpop.f32.mrb[0].mxu0
        %1557 = vmatprep.mubr.bf16.mxu0 %v1070
        %1558 = vmatmul.mubr.bf16.gmra.mrb[0].mxu0 %v1069
        %v1559 = vpop.f32.mrb[0].mxu0
        %v1560 = vadd.f32 %v1171, %v1559
        %v1561 = vpop.f32.mrb[0].mxu0
        %v1562 = vpop.f32.mrb[0].mxu0
        %v1563 = vadd.f32 %v1171, %v1562
        %v1564 = vpop.f32.mrb[0].mxu0
        %1565 = vmatprep.mubr.bf16.mxu0 %v1075
        %1566 = vmatmul.mubr.bf16.gmra.mrb[0].mxu0 %v1074
        %v1567 = vpop.f32.mrb[0].mxu0
        %v1568 = vadd.f32 %v1171, %v1567
        %v1569 = vpop.f32.mrb[0].mxu0
        %v1570 = vpop.f32.mrb[0].mxu0
        %v1571 = vadd.f32 %v1171, %v1570
        %v1572 = vpop.f32.mrb[0].mxu0
        %1573 = vmatprep.mubr.bf16.mxu0 %v1080
        %1574 = vmatmul.mubr.bf16.gmra.mrb[0].mxu0 %v1079
        %v1575 = vpop.f32.mrb[0].mxu0
        %v1576 = vadd.f32 %v1171, %v1575
        %v1577 = vpop.f32.mrb[0].mxu0
        %v1578 = vpop.f32.mrb[0].mxu0
        %v1579 = vadd.f32 %v1171, %v1578
        %v1580 = vpop.f32.mrb[0].mxu0
        %1581 = vmatprep.mubr.bf16.mxu0 %v1085
        %1582 = vmatmul.mubr.bf16.gmra.mrb[0].mxu0 %v1084
        %v1583 = vpop.f32.mrb[0].mxu0
        %v1584 = vadd.f32 %v1171, %v1583
        %v1585 = vpop.f32.mrb[0].mxu0
        %v1586 = vpop.f32.mrb[0].mxu0
        %v1587 = vadd.f32 %v1171, %v1586
        %v1588 = vpop.f32.mrb[0].mxu0
        %1589 = vmatprep.mubr.bf16.mxu0 %v1090
        %1590 = vmatmul.mubr.bf16.gmra.mrb[0].mxu0 %v1089
        %v1591 = vpop.f32.mrb[0].mxu0
        %v1592 = vadd.f32 %v1171, %v1591
        %v1593 = vpop.f32.mrb[0].mxu0
        %v1594 = vpop.f32.mrb[0].mxu0
        %v1595 = vadd.f32 %v1171, %v1594
        %v1596 = vpop.f32.mrb[0].mxu0
        %1597 = vdwg.mxu0
        %1598 = vmatprep.subr.bf16.mxu0 0
        %1599 = vmatpush1.bf16.msra.mxu0 %v1333
        %1600 = vmatprep.subr.bf16.mxu0 0
        %1601 = vmatpush1.bf16.msra.mxu0 %v1334
        %1602 = vmatprep.subr.bf16.mxu0 0
        %1603 = vmatpush1.bf16.msra.mxu0 %v1335
        %1604 = vmatprep.subr.bf16.mxu0 0
        %1605 = vmatpush1.bf16.msra.mxu0 %v1336
        %1606 = vmatprep.subr.bf16.mxu0 0
        %1607 = vmatpush1.bf16.msra.mxu0 %v1337
        %1608 = vmatprep.subr.bf16.mxu0 0
        %1609 = vmatpush1.bf16.msra.mxu0 %v1338
        %1610 = vmatprep.subr.bf16.mxu0 0
        %1611 = vmatpush1.bf16.msra.mxu0 %v1339
        %1612 = vmatprep.subr.bf16.mxu0 0
        %1613 = vmatpush1.bf16.msra.mxu0 %v1340
        %1614 = vmatprep.subr.bf16.mxu0 0
        %1615 = vmatpush1.bf16.msra.mxu0 %v1341
        %1616 = vmatprep.subr.bf16.mxu0 0
        %1617 = vmatpush1.bf16.msra.mxu0 %v1342
        %1618 = vmatprep.subr.bf16.mxu0 0
        %1619 = vmatpush1.bf16.msra.mxu0 %v1343
        %1620 = vmatprep.subr.bf16.mxu0 0
        %1621 = vmatpush1.bf16.msra.mxu0 %v1344
        %1622 = vmatprep.subr.bf16.mxu0 0
        %1623 = vmatpush1.bf16.msra.mxu0 %v1345
        %1624 = vmatprep.subr.bf16.mxu0 0
        %1625 = vmatpush1.bf16.msra.mxu0 %v1346
        %1626 = vmatprep.subr.bf16.mxu0 0
        %1627 = vmatpush1.bf16.msra.mxu0 %v1347
        %1628 = vmatprep.subr.bf16.mxu0 0
        %1629 = vmatpush1.bf16.msra.mxu0 %v1348
        %1630 = vmatprep.mubr.bf16.mxu0 %v1017
        %1631 = vmatmul.mubr.bf16.gmra.mrb[0].mxu0 %v1016
        %v1632 = vpop.f32.mrb[0].mxu0
        %v1633 = vadd.f32 %v1472, %v1632
        %v1634 = vpop.f32.mrb[0].mxu0
        %v1635 = vpop.f32.mrb[0].mxu0
        %v1636 = vadd.f32 %v1475, %v1635
        %v1637 = vpop.f32.mrb[0].mxu0
        %1638 = vmatprep.mubr.bf16.mxu0 %v1022
        %1639 = vmatmul.mubr.bf16.gmra.mrb[0].mxu0 %v1021
        %v1640 = vpop.f32.mrb[0].mxu0
        %v1641 = vadd.f32 %v1480, %v1640
        %v1642 = vpop.f32.mrb[0].mxu0
        %v1643 = vpop.f32.mrb[0].mxu0
        %v1644 = vadd.f32 %v1483, %v1643
        %v1645 = vpop.f32.mrb[0].mxu0
        %1646 = vmatprep.mubr.bf16.mxu0 %v1027
        %1647 = vmatmul.mubr.bf16.gmra.mrb[0].mxu0 %v1026
        %v1648 = vpop.f32.mrb[0].mxu0
        %v1649 = vadd.f32 %v1488, %v1648
        %v1650 = vpop.f32.mrb[0].mxu0
        %v1651 = vpop.f32.mrb[0].mxu0
        %v1652 = vadd.f32 %v1491, %v1651
        %v1653 = vpop.f32.mrb[0].mxu0
        %1654 = vmatprep.mubr.bf16.mxu0 %v1032
        %1655 = vmatmul.mubr.bf16.gmra.mrb[0].mxu0 %v1031
        %v1656 = vpop.f32.mrb[0].mxu0
        %v1657 = vadd.f32 %v1496, %v1656
        %v1658 = vpop.f32.mrb[0].mxu0
        %v1659 = vpop.f32.mrb[0].mxu0
        %v1660 = vadd.f32 %v1499, %v1659
        %v1661 = vpop.f32.mrb[0].mxu0
        %1662 = vmatprep.mubr.bf16.mxu0 %v1037
        %1663 = vmatmul.mubr.bf16.gmra.mrb[0].mxu0 %v1036
        %v1664 = vpop.f32.mrb[0].mxu0
        %v1665 = vadd.f32 %v1504, %v1664
        %v1666 = vpop.f32.mrb[0].mxu0
        %v1667 = vpop.f32.mrb[0].mxu0
        %v1668 = vadd.f32 %v1507, %v1667
        %v1669 = vpop.f32.mrb[0].mxu0
        %1670 = vmatprep.mubr.bf16.mxu0 %v1042
        %1671 = vmatmul.mubr.bf16.gmra.mrb[0].mxu0 %v1041
        %v1672 = vpop.f32.mrb[0].mxu0
        %v1673 = vadd.f32 %v1512, %v1672
        %v1674 = vpop.f32.mrb[0].mxu0
        %v1675 = vpop.f32.mrb[0].mxu0
        %v1676 = vadd.f32 %v1515, %v1675
        %v1677 = vpop.f32.mrb[0].mxu0
        %1678 = vmatprep.mubr.bf16.mxu0 %v1047
        %1679 = vmatmul.mubr.bf16.gmra.mrb[0].mxu0 %v1046
        %v1680 = vpop.f32.mrb[0].mxu0
        %v1681 = vadd.f32 %v1520, %v1680
        %v1682 = vpop.f32.mrb[0].mxu0
        %v1683 = vpop.f32.mrb[0].mxu0
        %v1684 = vadd.f32 %v1523, %v1683
        %v1685 = vpop.f32.mrb[0].mxu0
        %1686 = vmatprep.mubr.bf16.mxu0 %v1052
        %1687 = vmatmul.mubr.bf16.gmra.mrb[0].mxu0 %v1051
        %v1688 = vpop.f32.mrb[0].mxu0
        %v1689 = vadd.f32 %v1528, %v1688
        %v1690 = vpop.f32.mrb[0].mxu0
        %v1691 = vpop.f32.mrb[0].mxu0
        %v1692 = vadd.f32 %v1531, %v1691
        %v1693 = vpop.f32.mrb[0].mxu0
        %1694 = vmatprep.mubr.bf16.mxu0 %v1057
        %1695 = vmatmul.mubr.bf16.gmra.mrb[0].mxu0 %v1056
        %v1696 = vpop.f32.mrb[0].mxu0
        %v1697 = vadd.f32 %v1536, %v1696
        %v1698 = vpop.f32.mrb[0].mxu0
        %v1699 = vpop.f32.mrb[0].mxu0
        %v1700 = vadd.f32 %v1539, %v1699
        %v1701 = vpop.f32.mrb[0].mxu0
        %1702 = vmatprep.mubr.bf16.mxu0 %v1062
        %1703 = vmatmul.mubr.bf16.gmra.mrb[0].mxu0 %v1061
        %v1704 = vpop.f32.mrb[0].mxu0
        %v1705 = vadd.f32 %v1544, %v1704
        %v1706 = vpop.f32.mrb[0].mxu0
        %v1707 = vpop.f32.mrb[0].mxu0
        %v1708 = vadd.f32 %v1547, %v1707
        %v1709 = vpop.f32.mrb[0].mxu0
        %1710 = vmatprep.mubr.bf16.mxu0 %v1067
        %1711 = vmatmul.mubr.bf16.gmra.mrb[0].mxu0 %v1066
        %v1712 = vpop.f32.mrb[0].mxu0
        %v1713 = vadd.f32 %v1552, %v1712
        %v1714 = vpop.f32.mrb[0].mxu0
        %v1715 = vpop.f32.mrb[0].mxu0
        %v1716 = vadd.f32 %v1555, %v1715
        %v1717 = vpop.f32.mrb[0].mxu0
        %1718 = vmatprep.mubr.bf16.mxu0 %v1072
        %1719 = vmatmul.mubr.bf16.gmra.mrb[0].mxu0 %v1071
        %v1720 = vpop.f32.mrb[0].mxu0
        %v1721 = vadd.f32 %v1560, %v1720
        %v1722 = vpop.f32.mrb[0].mxu0
        %v1723 = vpop.f32.mrb[0].mxu0
        %v1724 = vadd.f32 %v1563, %v1723
        %v1725 = vpop.f32.mrb[0].mxu0
        %1726 = vmatprep.mubr.bf16.mxu0 %v1077
        %1727 = vmatmul.mubr.bf16.gmra.mrb[0].mxu0 %v1076
        %v1728 = vpop.f32.mrb[0].mxu0
        %v1729 = vadd.f32 %v1568, %v1728
        %v1730 = vpop.f32.mrb[0].mxu0
        %v1731 = vpop.f32.mrb[0].mxu0
        %v1732 = vadd.f32 %v1571, %v1731
        %v1733 = vpop.f32.mrb[0].mxu0
        %1734 = vmatprep.mubr.bf16.mxu0 %v1082
        %1735 = vmatmul.mubr.bf16.gmra.mrb[0].mxu0 %v1081
        %v1736 = vpop.f32.mrb[0].mxu0
        %v1737 = vadd.f32 %v1576, %v1736
        %v1738 = vpop.f32.mrb[0].mxu0
        %v1739 = vpop.f32.mrb[0].mxu0
        %v1740 = vadd.f32 %v1579, %v1739
        %v1741 = vpop.f32.mrb[0].mxu0
        %1742 = vmatprep.mubr.bf16.mxu0 %v1087
        %1743 = vmatmul.mubr.bf16.gmra.mrb[0].mxu0 %v1086
        %v1744 = vpop.f32.mrb[0].mxu0
        %v1745 = vadd.f32 %v1584, %v1744
        %v1746 = vpop.f32.mrb[0].mxu0
        %v1747 = vpop.f32.mrb[0].mxu0
        %v1748 = vadd.f32 %v1587, %v1747
        %v1749 = vpop.f32.mrb[0].mxu0
        %1750 = vmatprep.mubr.bf16.mxu0 %v1092
        %1751 = vmatmul.mubr.bf16.gmra.mrb[0].mxu0 %v1091
        %v1752 = vpop.f32.mrb[0].mxu0
        %v1753 = vadd.f32 %v1592, %v1752
        %v1754 = vpop.f32.mrb[0].mxu0
        %v1755 = vpop.f32.mrb[0].mxu0
        %v1756 = vadd.f32 %v1595, %v1755
        %v1757 = vpop.f32.mrb[0].mxu0
        %1758 = vdwg.mxu0
        %1759 = vmatprep.subr.bf16.mxu0 0
        %1760 = vmatpush1.bf16.msra.mxu0 %v1349
        %1761 = vmatprep.subr.bf16.mxu0 0
        %1762 = vmatpush1.bf16.msra.mxu0 %v1350
        %1763 = vmatprep.subr.bf16.mxu0 0
        %1764 = vmatpush1.bf16.msra.mxu0 %v1351
        %1765 = vmatprep.subr.bf16.mxu0 0
        %1766 = vmatpush1.bf16.msra.mxu0 %v1352
        %1767 = vmatprep.subr.bf16.mxu0 0
        %1768 = vmatpush1.bf16.msra.mxu0 0
        %1769 = vmatprep.subr.bf16.mxu0 0
        %1770 = vmatpush1.bf16.msra.mxu0 0
        %1771 = vmatprep.subr.bf16.mxu0 0
        %1772 = vmatpush1.bf16.msra.mxu0 0
        %1773 = vmatprep.subr.bf16.mxu0 0
        %1774 = vmatpush1.bf16.msra.mxu0 0
        %1775 = vmatprep.subr.bf16.mxu0 0
        %1776 = vmatpush1.bf16.msra.mxu0 0
        %1777 = vmatprep.subr.bf16.mxu0 0
        %1778 = vmatpush1.bf16.msra.mxu0 0
        %1779 = vmatprep.subr.bf16.mxu0 0
        %1780 = vmatpush1.bf16.msra.mxu0 0
        %1781 = vmatprep.subr.bf16.mxu0 0
        %1782 = vmatpush1.bf16.msra.mxu0 0
        %1783 = vmatprep.subr.bf16.mxu0 0
        %1784 = vmatpush1.bf16.msra.mxu0 0
        %1785 = vmatprep.subr.bf16.mxu0 0
        %1786 = vmatpush1.bf16.msra.mxu0 0
        %1787 = vmatprep.subr.bf16.mxu0 0
        %1788 = vmatpush1.bf16.msra.mxu0 0
        %1789 = vmatprep.subr.bf16.mxu0 0
        %1790 = vmatpush1.bf16.msra.mxu0 0
        %1791 = vmatprep.mubr.bf16.mxu0 0
        %1792 = vmatmul.mubr.bf16.gmra.mrb[0].mxu0 %v1390
        %v1793 = vpop.f32.mrb[0].mxu0
        %v1794 = vadd.f32 %v1633, %v1793
        %v1795 = vpop.f32.mrb[0].mxu0
        %v1796 = vpop.f32.mrb[0].mxu0
        %v1797 = vadd.f32 %v1636, %v1796
        %v1798 = vpop.f32.mrb[0].mxu0
        %1799 = vmatprep.mubr.bf16.mxu0 0
        %1800 = vmatmul.mubr.bf16.gmra.mrb[0].mxu0 %v1393
        %v1801 = vpop.f32.mrb[0].mxu0
        %v1802 = vadd.f32 %v1641, %v1801
        %v1803 = vpop.f32.mrb[0].mxu0
        %v1804 = vpop.f32.mrb[0].mxu0
        %v1805 = vadd.f32 %v1644, %v1804
        %v1806 = vpop.f32.mrb[0].mxu0
        %1807 = vmatprep.mubr.bf16.mxu0 0
        %1808 = vmatmul.mubr.bf16.gmra.mrb[0].mxu0 %v1396
        %v1809 = vpop.f32.mrb[0].mxu0
        %v1810 = vadd.f32 %v1649, %v1809
        %v1811 = vpop.f32.mrb[0].mxu0
        %v1812 = vpop.f32.mrb[0].mxu0
        %v1813 = vadd.f32 %v1652, %v1812
        %v1814 = vpop.f32.mrb[0].mxu0
        %1815 = vmatprep.mubr.bf16.mxu0 0
        %1816 = vmatmul.mubr.bf16.gmra.mrb[0].mxu0 %v1399
        %v1817 = vpop.f32.mrb[0].mxu0
        %v1818 = vadd.f32 %v1657, %v1817
        %v1819 = vpop.f32.mrb[0].mxu0
        %v1820 = vpop.f32.mrb[0].mxu0
        %v1821 = vadd.f32 %v1660, %v1820
        %v1822 = vpop.f32.mrb[0].mxu0
        %1823 = vmatprep.mubr.bf16.mxu0 0
        %1824 = vmatmul.mubr.bf16.gmra.mrb[0].mxu0 %v1402
        %v1825 = vpop.f32.mrb[0].mxu0
        %v1826 = vadd.f32 %v1665, %v1825
        %v1827 = vpop.f32.mrb[0].mxu0
        %v1828 = vpop.f32.mrb[0].mxu0
        %v1829 = vadd.f32 %v1668, %v1828
        %v1830 = vpop.f32.mrb[0].mxu0
        %1831 = vmatprep.mubr.bf16.mxu0 0
        %1832 = vmatmul.mubr.bf16.gmra.mrb[0].mxu0 %v1405
        %v1833 = vpop.f32.mrb[0].mxu0
        %v1834 = vadd.f32 %v1673, %v1833
        %v1835 = vpop.f32.mrb[0].mxu0
        %v1836 = vpop.f32.mrb[0].mxu0
        %v1837 = vadd.f32 %v1676, %v1836
        %v1838 = vpop.f32.mrb[0].mxu0
        %1839 = vmatprep.mubr.bf16.mxu0 0
        %1840 = vmatmul.mubr.bf16.gmra.mrb[0].mxu0 %v1408
        %v1841 = vpop.f32.mrb[0].mxu0
        %v1842 = vadd.f32 %v1681, %v1841
        %v1843 = vpop.f32.mrb[0].mxu0
        %v1844 = vpop.f32.mrb[0].mxu0
        %v1845 = vadd.f32 %v1684, %v1844
        %v1846 = vpop.f32.mrb[0].mxu0
        %1847 = vmatprep.mubr.bf16.mxu0 0
        %1848 = vmatmul.mubr.bf16.gmra.mrb[0].mxu0 %v1411
        %v1849 = vpop.f32.mrb[0].mxu0
        %v1850 = vadd.f32 %v1689, %v1849
        %v1851 = vpop.f32.mrb[0].mxu0
        %v1852 = vpop.f32.mrb[0].mxu0
        %v1853 = vadd.f32 %v1692, %v1852
        %v1854 = vpop.f32.mrb[0].mxu0
        %1855 = vmatprep.mubr.bf16.mxu0 0
        %1856 = vmatmul.mubr.bf16.gmra.mrb[0].mxu0 %v1414
        %v1857 = vpop.f32.mrb[0].mxu0
        %v1858 = vadd.f32 %v1697, %v1857
        %v1859 = vpop.f32.mrb[0].mxu0
        %v1860 = vpop.f32.mrb[0].mxu0
        %v1861 = vadd.f32 %v1700, %v1860
        %v1862 = vpop.f32.mrb[0].mxu0
        %1863 = vmatprep.mubr.bf16.mxu0 0
        %1864 = vmatmul.mubr.bf16.gmra.mrb[0].mxu0 %v1417
        %v1865 = vpop.f32.mrb[0].mxu0
        %v1866 = vadd.f32 %v1705, %v1865
        %v1867 = vpop.f32.mrb[0].mxu0
        %v1868 = vpop.f32.mrb[0].mxu0
        %v1869 = vadd.f32 %v1708, %v1868
        %v1870 = vpop.f32.mrb[0].mxu0
        %1871 = vmatprep.mubr.bf16.mxu0 0
        %1872 = vmatmul.mubr.bf16.gmra.mrb[0].mxu0 %v1420
        %v1873 = vpop.f32.mrb[0].mxu0
        %v1874 = vadd.f32 %v1713, %v1873
        %v1875 = vpop.f32.mrb[0].mxu0
        %v1876 = vpop.f32.mrb[0].mxu0
        %v1877 = vadd.f32 %v1716, %v1876
        %v1878 = vpop.f32.mrb[0].mxu0
        %1879 = vmatprep.mubr.bf16.mxu0 0
        %1880 = vmatmul.mubr.bf16.gmra.mrb[0].mxu0 %v1423
        %v1881 = vpop.f32.mrb[0].mxu0
        %v1882 = vadd.f32 %v1721, %v1881
        %v1883 = vpop.f32.mrb[0].mxu0
        %v1884 = vpop.f32.mrb[0].mxu0
        %v1885 = vadd.f32 %v1724, %v1884
        %v1886 = vpop.f32.mrb[0].mxu0
        %1887 = vmatprep.mubr.bf16.mxu0 0
        %1888 = vmatmul.mubr.bf16.gmra.mrb[0].mxu0 %v1426
        %v1889 = vpop.f32.mrb[0].mxu0
        %v1890 = vadd.f32 %v1729, %v1889
        %v1891 = vpop.f32.mrb[0].mxu0
        %v1892 = vpop.f32.mrb[0].mxu0
        %v1893 = vadd.f32 %v1732, %v1892
        %v1894 = vpop.f32.mrb[0].mxu0
        %1895 = vmatprep.mubr.bf16.mxu0 0
        %1896 = vmatmul.mubr.bf16.gmra.mrb[0].mxu0 %v1429
        %v1897 = vpop.f32.mrb[0].mxu0
        %v1898 = vadd.f32 %v1737, %v1897
        %v1899 = vpop.f32.mrb[0].mxu0
        %v1900 = vpop.f32.mrb[0].mxu0
        %v1901 = vadd.f32 %v1740, %v1900
        %v1902 = vpop.f32.mrb[0].mxu0
        %1903 = vmatprep.mubr.bf16.mxu0 0
        %1904 = vmatmul.mubr.bf16.gmra.mrb[0].mxu0 %v1432
        %v1905 = vpop.f32.mrb[0].mxu0
        %v1906 = vadd.f32 %v1745, %v1905
        %v1907 = vpop.f32.mrb[0].mxu0
        %v1908 = vpop.f32.mrb[0].mxu0
        %v1909 = vadd.f32 %v1748, %v1908
        %v1910 = vpop.f32.mrb[0].mxu0
        %1911 = vmatprep.mubr.bf16.mxu0 0
        %1912 = vmatmul.mubr.bf16.gmra.mrb[0].mxu0 %v1435
        %v1913 = vpop.f32.mrb[0].mxu0
        %v1914 = vadd.f32 %v1753, %v1913
        %v1915 = vpop.f32.mrb[0].mxu0
        %v1916 = vpop.f32.mrb[0].mxu0
        %v1917 = vadd.f32 %v1756, %v1916
        %v1918 = vpop.f32.mrb[0].mxu0
        %1919 = vdwg.mxu0
        %s1920 = sld [smem:[#allocation4]]
        %vm1921 = vcmp.gt.f32.partialorder %v1794, 0.0
        %vm1922 = vcmp.gt.f32.partialorder %v1797, 0.0
        %vm1923 = vcmp.gt.f32.partialorder %v1802, 0.0
        %vm1924 = vcmp.gt.f32.partialorder %v1805, 0.0
        %vm1925 = vcmp.gt.f32.partialorder %v1810, 0.0
        %vm1926 = vcmp.gt.f32.partialorder %v1813, 0.0
        %vm1927 = vcmp.gt.f32.partialorder %v1818, 0.0
        %vm1928 = vcmp.gt.f32.partialorder %v1821, 0.0
        %vm1929 = vcmp.gt.f32.partialorder %v1826, 0.0
        %vm1930 = vcmp.gt.f32.partialorder %v1829, 0.0
        %vm1931 = vcmp.gt.f32.partialorder %v1834, 0.0
        %vm1932 = vcmp.gt.f32.partialorder %v1837, 0.0
        %vm1933 = vcmp.gt.f32.partialorder %v1842, 0.0
        %vm1934 = vcmp.gt.f32.partialorder %v1845, 0.0
        %vm1935 = vcmp.gt.f32.partialorder %v1850, 0.0
        %vm1936 = vcmp.gt.f32.partialorder %v1853, 0.0
        %vm1937 = vcmp.gt.f32.partialorder %v1858, 0.0
        %vm1938 = vcmp.gt.f32.partialorder %v1861, 0.0
        %vm1939 = vcmp.gt.f32.partialorder %v1866, 0.0
        %vm1940 = vcmp.gt.f32.partialorder %v1869, 0.0
        %vm1941 = vcmp.gt.f32.partialorder %v1874, 0.0
        %vm1942 = vcmp.gt.f32.partialorder %v1877, 0.0
        %vm1943 = vcmp.gt.f32.partialorder %v1882, 0.0
        %vm1944 = vcmp.gt.f32.partialorder %v1885, 0.0
        %vm1945 = vcmp.gt.f32.partialorder %v1890, 0.0
        %vm1946 = vcmp.gt.f32.partialorder %v1893, 0.0
        %vm1947 = vcmp.gt.f32.partialorder %v1898, 0.0
        %vm1948 = vcmp.gt.f32.partialorder %v1901, 0.0
        %vm1949 = vcmp.gt.f32.partialorder %v1906, 0.0
        %vm1950 = vcmp.gt.f32.partialorder %v1909, 0.0
        %vm1951 = vcmp.gt.f32.partialorder %v1914, 0.0
        %vm1952 = vcmp.gt.f32.partialorder %v1917, 0.0
        %v1953 = vstv %s1920
        %v1954 = vmul.f32 %v1953, %v1794
        %v1955 = vmul.f32 %v1953, %v1797
        %v1956 = vmul.f32 %v1953, %v1802
        %v1957 = vmul.f32 %v1953, %v1805
        %v1958 = vmul.f32 %v1953, %v1810
        %v1959 = vmul.f32 %v1953, %v1813
        %v1960 = vmul.f32 %v1953, %v1818
        %v1961 = vmul.f32 %v1953, %v1821
        %v1962 = vmul.f32 %v1953, %v1826
        %v1963 = vmul.f32 %v1953, %v1829
        %v1964 = vmul.f32 %v1953, %v1834
        %v1965 = vmul.f32 %v1953, %v1837
        %v1966 = vmul.f32 %v1953, %v1842
        %v1967 = vmul.f32 %v1953, %v1845
        %v1968 = vmul.f32 %v1953, %v1850
        %v1969 = vmul.f32 %v1953, %v1853
        %v1970 = vmul.f32 %v1953, %v1858
        %v1971 = vmul.f32 %v1953, %v1861
        %v1972 = vmul.f32 %v1953, %v1866
        %v1973 = vmul.f32 %v1953, %v1869
        %v1974 = vmul.f32 %v1953, %v1874
        %v1975 = vmul.f32 %v1953, %v1877
        %v1976 = vmul.f32 %v1953, %v1882
        %v1977 = vmul.f32 %v1953, %v1885
        %v1978 = vmul.f32 %v1953, %v1890
        %v1979 = vmul.f32 %v1953, %v1893
        %v1980 = vmul.f32 %v1953, %v1898
        %v1981 = vmul.f32 %v1953, %v1901
        %v1982 = vmul.f32 %v1953, %v1906
        %v1983 = vmul.f32 %v1953, %v1909
        %v1984 = vmul.f32 %v1953, %v1914
        %v1985 = vmul.f32 %v1953, %v1917
        %v1986 = vsel %vm1921, %v1794, %v1954
        %v1987 = vsel %vm1922, %v1797, %v1955
        %v1988 = vsel %vm1923, %v1802, %v1956
        %v1989 = vsel %vm1924, %v1805, %v1957
        %v1990 = vsel %vm1925, %v1810, %v1958
        %v1991 = vsel %vm1926, %v1813, %v1959
        %v1992 = vsel %vm1927, %v1818, %v1960
        %v1993 = vsel %vm1928, %v1821, %v1961
        %v1994 = vsel %vm1929, %v1826, %v1962
        %v1995 = vsel %vm1930, %v1829, %v1963
        %v1996 = vsel %vm1931, %v1834, %v1964
        %v1997 = vsel %vm1932, %v1837, %v1965
        %v1998 = vsel %vm1933, %v1842, %v1966
        %v1999 = vsel %vm1934, %v1845, %v1967
        %v2000 = vsel %vm1935, %v1850, %v1968
        %v2001 = vsel %vm1936, %v1853, %v1969
        %v2002 = vsel %vm1937, %v1858, %v1970
        %v2003 = vsel %vm1938, %v1861, %v1971
        %v2004 = vsel %vm1939, %v1866, %v1972
        %v2005 = vsel %vm1940, %v1869, %v1973
        %v2006 = vsel %vm1941, %v1874, %v1974
        %v2007 = vsel %vm1942, %v1877, %v1975
        %v2008 = vsel %vm1943, %v1882, %v1976
        %v2009 = vsel %vm1944, %v1885, %v1977
        %v2010 = vsel %vm1945, %v1890, %v1978
        %v2011 = vsel %vm1946, %v1893, %v1979
        %v2012 = vsel %vm1947, %v1898, %v1980
        %v2013 = vsel %vm1948, %v1901, %v1981
        %v2014 = vsel %vm1949, %v1906, %v1982
        %v2015 = vsel %vm1950, %v1909, %v1983
        %v2016 = vsel %vm1951, %v1914, %v1984
        %v2017 = vsel %vm1952, %v1917, %v1985
        %2018 = vst.msk [vmem:[#allocation2] sm:$0xff] %vm322, 0.0
        %2019 = vst.msk [vmem:[#allocation2 + $0x8] sm:$0xff] %vm322, 0.0
        %vm2020 = vcmask 517120
        %2021 = vst.msk [vmem:[#allocation2 + $0x10] sm:$0x3] %vm2020, 0.0
        %2022 = vst.msk [vmem:[#allocation2 + $0x18] sm:$0xff] %vm322, 0.0
        %2023 = vst.msk [vmem:[#allocation2 + $0x20] sm:$0xff] %vm322, 0.0
        %2024 = vst.msk [vmem:[#allocation2 + $0x28] sm:$0x3] %vm2020, 0.0
        %2025 = vst.msk [vmem:[#allocation2 + $0x30] sm:$0xff] %vm322, 0.0
        %2026 = vst.msk [vmem:[#allocation2 + $0x38] sm:$0xff] %vm322, 0.0
        %2027 = vst.msk [vmem:[#allocation2 + $0x40] sm:$0x3] %vm2020, 0.0
        %2028 = vst.msk [vmem:[#allocation2 + $0x48] sm:$0xff] %vm322, 0.0
        %2029 = vst.msk [vmem:[#allocation2 + $0x50] sm:$0xff] %vm322, 0.0
        %2030 = vst.msk [vmem:[#allocation2 + $0x58] sm:$0x3] %vm2020, 0.0
        %2031 = vst.msk [vmem:[#allocation2 + $0x60] sm:$0xff] %vm322, 0.0
        %2032 = vst.msk [vmem:[#allocation2 + $0x68] sm:$0xff] %vm322, 0.0
        %2033 = vst.msk [vmem:[#allocation2 + $0x70] sm:$0x3] %vm2020, 0.0
        %2034 = vst.msk [vmem:[#allocation2 + $0x78] sm:$0xff] %vm322, 0.0
        %2035 = vst.msk [vmem:[#allocation2 + $0x80] sm:$0xff] %vm322, 0.0
        %2036 = vst.msk [vmem:[#allocation2 + $0x88] sm:$0x3] %vm2020, 0.0
        %2037 = vst.msk [vmem:[#allocation2 + $0x90] sm:$0xff] %vm322, 0.0
        %2038 = vst.msk [vmem:[#allocation2 + $0x98] sm:$0xff] %vm322, 0.0
        %2039 = vst.msk [vmem:[#allocation2 + $0xa0] sm:$0x3] %vm2020, 0.0
        %2040 = vst.msk [vmem:[#allocation2 + $0xa8] sm:$0xff] %vm322, 0.0
        %2041 = vst.msk [vmem:[#allocation2 + $0xb0] sm:$0xff] %vm322, 0.0
        %2042 = vst.msk [vmem:[#allocation2 + $0xb8] sm:$0x3] %vm2020, 0.0
        %2043 = vst.msk [vmem:[#allocation2 + $0xc0] sm:$0xff] %vm322, 0.0
        %2044 = vst.msk [vmem:[#allocation2 + $0xc8] sm:$0xff] %vm322, 0.0
        %2045 = vst.msk [vmem:[#allocation2 + $0xd0] sm:$0x3] %vm2020, 0.0
        %2046 = vst.msk [vmem:[#allocation2 + $0xd8] sm:$0xff] %vm322, 0.0
        %2047 = vst.msk [vmem:[#allocation2 + $0xe0] sm:$0xff] %vm322, 0.0
        %2048 = vst.msk [vmem:[#allocation2 + $0xe8] sm:$0x3] %vm2020, 0.0
        %2049 = vst.msk [vmem:[#allocation2 + $0xf0] sm:$0xff] %vm322, 0.0
        %2050 = vst.msk [vmem:[#allocation2 + $0xf8] sm:$0xff] %vm322, 0.0
        %2051 = vst.msk [vmem:[#allocation2 + $0x100] sm:$0x3] %vm2020, 0.0
        %2052 = vst.msk [vmem:[#allocation2 + $0x108] sm:$0xff] %vm322, 0.0
        %2053 = vst.msk [vmem:[#allocation2 + $0x110] sm:$0xff] %vm322, 0.0
        %2054 = vst.msk [vmem:[#allocation2 + $0x118] sm:$0x3] %vm2020, 0.0
        %2055 = vst.msk [vmem:[#allocation2 + $0x120] sm:$0xff] %vm322, 0.0
        %2056 = vst.msk [vmem:[#allocation2 + $0x128] sm:$0xff] %vm322, 0.0
        %2057 = vst.msk [vmem:[#allocation2 + $0x130] sm:$0x3] %vm2020, 0.0
        %2058 = vst.msk [vmem:[#allocation2 + $0x138] sm:$0xff] %vm322, 0.0
        %2059 = vst.msk [vmem:[#allocation2 + $0x140] sm:$0xff] %vm322, 0.0
        %2060 = vst.msk [vmem:[#allocation2 + $0x148] sm:$0x3] %vm2020, 0.0
        %2061 = vst.msk [vmem:[#allocation2 + $0x150] sm:$0xff] %vm322, 0.0
        %2062 = vst.msk [vmem:[#allocation2 + $0x158] sm:$0xff] %vm322, 0.0
        %2063 = vst.msk [vmem:[#allocation2 + $0x160] sm:$0x3] %vm2020, 0.0
        %2064 = vst.msk [vmem:[#allocation2 + $0x168] sm:$0xff] %vm322, 0.0
        %2065 = vst.msk [vmem:[#allocation2 + $0x170] sm:$0xff] %vm322, 0.0
        %2066 = vst.msk [vmem:[#allocation2 + $0x178] sm:$0x3] %vm2020, 0.0
        %2067 = vst.msk [vmem:[#allocation2 + $0x180] sm:$0xff] %vm322, 0.0
        %2068 = vst.msk [vmem:[#allocation2 + $0x188] sm:$0xff] %vm322, 0.0
        %2069 = vst.msk [vmem:[#allocation2 + $0x190] sm:$0x3] %vm2020, 0.0
        %2070 = vst.msk [vmem:[#allocation2 + $0x198] sm:$0xff] %vm322, 0.0
        %2071 = vst.msk [vmem:[#allocation2 + $0x1a0] sm:$0xff] %vm322, 0.0
        %2072 = vst.msk [vmem:[#allocation2 + $0x1a8] sm:$0x3] %vm2020, 0.0
        %s2073 = scalar_lea.vmem [#allocation2], 24
        %2074 = vst.msk [vmem:[%s2073 + $0x1] sm:$0xff] %vm322, %v1986
        %2075 = vst.msk [vmem:[%s2073 + $0x9] sm:$0xff] %vm322, %v1987
        %2076 = vst.msk [vmem:[%s2073 + $0x19] sm:$0xff] %vm322, %v1988
        %2077 = vst.msk [vmem:[%s2073 + $0x21] sm:$0xff] %vm322, %v1989
        %2078 = vst.msk [vmem:[%s2073 + $0x31] sm:$0xff] %vm322, %v1990
        %2079 = vst.msk [vmem:[%s2073 + $0x39] sm:$0xff] %vm322, %v1991
        %2080 = vst.msk [vmem:[%s2073 + $0x49] sm:$0xff] %vm322, %v1992
        %2081 = vst.msk [vmem:[%s2073 + $0x51] sm:$0xff] %vm322, %v1993
        %2082 = vst.msk [vmem:[%s2073 + $0x61] sm:$0xff] %vm322, %v1994
        %2083 = vst.msk [vmem:[%s2073 + $0x69] sm:$0xff] %vm322, %v1995
        %2084 = vst.msk [vmem:[%s2073 + $0x79] sm:$0xff] %vm322, %v1996
        %2085 = vst.msk [vmem:[%s2073 + $0x81] sm:$0xff] %vm322, %v1997
        %2086 = vst.msk [vmem:[%s2073 + $0x91] sm:$0xff] %vm322, %v1998
        %2087 = vst.msk [vmem:[%s2073 + $0x99] sm:$0xff] %vm322, %v1999
        %2088 = vst.msk [vmem:[%s2073 + $0xa9] sm:$0xff] %vm322, %v2000
        %2089 = vst.msk [vmem:[%s2073 + $0xb1] sm:$0xff] %vm322, %v2001
        %2090 = vst.msk [vmem:[%s2073 + $0xc1] sm:$0xff] %vm322, %v2002
        %2091 = vst.msk [vmem:[%s2073 + $0xc9] sm:$0xff] %vm322, %v2003
        %2092 = vst.msk [vmem:[%s2073 + $0xd9] sm:$0xff] %vm322, %v2004
        %2093 = vst.msk [vmem:[%s2073 + $0xe1] sm:$0xff] %vm322, %v2005
        %2094 = vst.msk [vmem:[%s2073 + $0xf1] sm:$0xff] %vm322, %v2006
        %2095 = vst.msk [vmem:[%s2073 + $0xf9] sm:$0xff] %vm322, %v2007
        %2096 = vst.msk [vmem:[%s2073 + $0x109] sm:$0xff] %vm322, %v2008
        %2097 = vst.msk [vmem:[%s2073 + $0x111] sm:$0xff] %vm322, %v2009
        %2098 = vst.msk [vmem:[%s2073 + $0x121] sm:$0xff] %vm322, %v2010
        %2099 = vst.msk [vmem:[%s2073 + $0x129] sm:$0xff] %vm322, %v2011
        %2100 = vst.msk [vmem:[%s2073 + $0x139] sm:$0xff] %vm322, %v2012
        %2101 = vst.msk [vmem:[%s2073 + $0x141] sm:$0xff] %vm322, %v2013
        %2102 = vst.msk [vmem:[%s2073 + $0x151] sm:$0xff] %vm322, %v2014
        %2103 = vst.msk [vmem:[%s2073 + $0x159] sm:$0xff] %vm322, %v2015
        %2104 = vst.msk [vmem:[%s2073 + $0x169] sm:$0xff] %vm322, %v2016
        %2105 = vst.msk [vmem:[%s2073 + $0x171] sm:$0xff] %vm322, %v2017
        %v2106 = vld [vmem:[#allocation2] sm:$0xff]
        %v2107 = vld [vmem:[#allocation2 + $0x8] sm:$0xff]
        %v2108 = vld [vmem:[#allocation2 + $0x10] sm:$0x3]
        %v2109 = vld [vmem:[#allocation2 + $0x18] sm:$0xff]
        %v2110 = vld [vmem:[#allocation2 + $0x20] sm:$0xff]
        %v2111 = vld [vmem:[#allocation2 + $0x28] sm:$0x3]
        %v2112 = vld [vmem:[#allocation2 + $0x30] sm:$0xff]
        %v2113 = vld [vmem:[#allocation2 + $0x38] sm:$0xff]
        %v2114 = vld [vmem:[#allocation2 + $0x40] sm:$0x3]
        %v2115 = vld [vmem:[#allocation2 + $0x48] sm:$0xff]
        %v2116 = vld [vmem:[#allocation2 + $0x50] sm:$0xff]
        %v2117 = vld [vmem:[#allocation2 + $0x58] sm:$0x3]
        %v2118 = vld [vmem:[#allocation2 + $0x60] sm:$0xff]
        %v2119 = vld [vmem:[#allocation2 + $0x68] sm:$0xff]
        %v2120 = vld [vmem:[#allocation2 + $0x70] sm:$0x3]
        %v2121 = vld [vmem:[#allocation2 + $0x78] sm:$0xff]
        %v2122 = vld [vmem:[#allocation2 + $0x80] sm:$0xff]
        %v2123 = vld [vmem:[#allocation2 + $0x88] sm:$0x3]
        %v2124 = vld [vmem:[#allocation2 + $0x90] sm:$0xff]
        %v2125 = vld [vmem:[#allocation2 + $0x98] sm:$0xff]
        %v2126 = vld [vmem:[#allocation2 + $0xa0] sm:$0x3]
        %v2127 = vld [vmem:[#allocation2 + $0xa8] sm:$0xff]
        %v2128 = vld [vmem:[#allocation2 + $0xb0] sm:$0xff]
        %v2129 = vld [vmem:[#allocation2 + $0xb8] sm:$0x3]
        %v2130 = vld [vmem:[#allocation2 + $0xc0] sm:$0xff]
        %v2131 = vld [vmem:[#allocation2 + $0xc8] sm:$0xff]
        %v2132 = vld [vmem:[#allocation2 + $0xd0] sm:$0x3]
        %v2133 = vld [vmem:[#allocation2 + $0xd8] sm:$0xff]
        %v2134 = vld [vmem:[#allocation2 + $0xe0] sm:$0xff]
        %v2135 = vld [vmem:[#allocation2 + $0xe8] sm:$0x3]
        %v2136 = vld [vmem:[#allocation2 + $0xf0] sm:$0xff]
        %v2137 = vld [vmem:[#allocation2 + $0xf8] sm:$0xff]
        %v2138 = vld [vmem:[#allocation2 + $0x100] sm:$0x3]
        %v2139 = vld [vmem:[#allocation2 + $0x108] sm:$0xff]
        %v2140 = vld [vmem:[#allocation2 + $0x110] sm:$0xff]
        %v2141 = vld [vmem:[#allocation2 + $0x118] sm:$0x3]
        %v2142 = vld [vmem:[#allocation2 + $0x120] sm:$0xff]
        %v2143 = vld [vmem:[#allocation2 + $0x128] sm:$0xff]
        %v2144 = vld [vmem:[#allocation2 + $0x130] sm:$0x3]
        %v2145 = vld [vmem:[#allocation2 + $0x138] sm:$0xff]
        %v2146 = vld [vmem:[#allocation2 + $0x140] sm:$0xff]
        %v2147 = vld [vmem:[#allocation2 + $0x148] sm:$0x3]
        %v2148 = vld [vmem:[#allocation2 + $0x150] sm:$0xff]
        %v2149 = vld [vmem:[#allocation2 + $0x158] sm:$0xff]
        %v2150 = vld [vmem:[#allocation2 + $0x160] sm:$0x3]
        %v2151 = vld [vmem:[#allocation2 + $0x168] sm:$0xff]
        %v2152 = vld [vmem:[#allocation2 + $0x170] sm:$0xff]
        %v2153 = vld [vmem:[#allocation2 + $0x178] sm:$0x3]
        %v2154 = vld [vmem:[#allocation2 + $0x180] sm:$0xff]
        %v2155 = vld [vmem:[#allocation2 + $0x188] sm:$0xff]
        %v2156 = vld [vmem:[#allocation2 + $0x190] sm:$0x3]
        %v2157 = vld [vmem:[#allocation2 + $0x198] sm:$0xff]
        %v2158 = vld [vmem:[#allocation2 + $0x1a0] sm:$0xff]
        %v2159 = vld [vmem:[#allocation2 + $0x1a8] sm:$0x3]
        %v2160 = vpack.c.bf16 %v2107, %v2106
        %v2161 = vpack.c.bf16 %v2110, %v2109
        %v2162 = vpack.c.bf16 %v2113, %v2112
        %v2163 = vpack.c.bf16 %v2116, %v2115
        %v2164 = vpack.c.bf16 %v2119, %v2118
        %v2165 = vpack.c.bf16 %v2122, %v2121
        %v2166 = vpack.c.bf16 %v2125, %v2124
        %v2167 = vpack.c.bf16 %v2128, %v2127
        %v2168 = vpack.c.bf16 %v2131, %v2130
        %v2169 = vpack.c.bf16 %v2134, %v2133
        %v2170 = vpack.c.bf16 %v2137, %v2136
        %v2171 = vpack.c.bf16 %v2140, %v2139
        %v2172 = vpack.c.bf16 %v2143, %v2142
        %v2173 = vpack.c.bf16 %v2146, %v2145
        %v2174 = vpack.c.bf16 %v2149, %v2148
        %v2175 = vpack.c.bf16 %v2152, %v2151
        %2176 = vst.msk [vmem:[#allocation3] sm:$0xff] %vm322, %v2160
        %2177 = vst.msk [vmem:[#allocation3 + $0x28] sm:$0xff] %vm322, %v2161
        %2178 = vst.msk [vmem:[#allocation3 + $0x50] sm:$0xff] %vm322, %v2162
        %2179 = vst.msk [vmem:[#allocation3 + $0x78] sm:$0xff] %vm322, %v2163
        %2180 = vst.msk [vmem:[#allocation3 + $0xa0] sm:$0xff] %vm322, %v2164
        %2181 = vst.msk [vmem:[#allocation3 + $0xc8] sm:$0xff] %vm322, %v2165
        %2182 = vst.msk [vmem:[#allocation3 + $0xf0] sm:$0xff] %vm322, %v2166
        %2183 = vst.msk [vmem:[#allocation3 + $0x118] sm:$0xff] %vm322, %v2167
        %2184 = vst.msk [vmem:[#allocation3 + $0x140] sm:$0xff] %vm322, %v2168
        %2185 = vst.msk [vmem:[#allocation3 + $0x168] sm:$0xff] %vm322, %v2169
        %2186 = vst.msk [vmem:[#allocation3 + $0x190] sm:$0xff] %vm322, %v2170
        %2187 = vst.msk [vmem:[#allocation3 + $0x1b8] sm:$0xff] %vm322, %v2171
        %2188 = vst.msk [vmem:[#allocation3 + $0x1e0] sm:$0xff] %vm322, %v2172
        %2189 = vst.msk [vmem:[#allocation3 + $0x208] sm:$0xff] %vm322, %v2173
        %2190 = vst.msk [vmem:[#allocation3 + $0x230] sm:$0xff] %vm322, %v2174
        %2191 = vst.msk [vmem:[#allocation3 + $0x258] sm:$0xff] %vm322, %v2175
        %v2240 = vrot.slane %v2106, 1
        %v2241 = vrot.slane %v2107, 1
        %v2242 = vsel %vm387, %v2240, %v2241
        %v2243 = vrot.slane %v2108, 1
        %v2244 = vsel %vm387, %v2241, %v2243
        %v2245 = vrot.slane %v2109, 1
        %v2246 = vrot.slane %v2110, 1
        %v2247 = vsel %vm387, %v2245, %v2246
        %v2248 = vrot.slane %v2111, 1
        %v2249 = vsel %vm387, %v2246, %v2248
        %v2250 = vrot.slane %v2112, 1
        %v2251 = vrot.slane %v2113, 1
        %v2252 = vsel %vm387, %v2250, %v2251
        %v2253 = vrot.slane %v2114, 1
        %v2254 = vsel %vm387, %v2251, %v2253
        %v2255 = vrot.slane %v2115, 1
        %v2256 = vrot.slane %v2116, 1
        %v2257 = vsel %vm387, %v2255, %v2256
        %v2258 = vrot.slane %v2117, 1
        %v2259 = vsel %vm387, %v2256, %v2258
        %v2260 = vrot.slane %v2118, 1
        %v2261 = vrot.slane %v2119, 1
        %v2262 = vsel %vm387, %v2260, %v2261
        %v2263 = vrot.slane %v2120, 1
        %v2264 = vsel %vm387, %v2261, %v2263
        %v2265 = vrot.slane %v2121, 1
        %v2266 = vrot.slane %v2122, 1
        %v2267 = vsel %vm387, %v2265, %v2266
        %v2268 = vrot.slane %v2123, 1
        %v2269 = vsel %vm387, %v2266, %v2268
        %v2270 = vrot.slane %v2124, 1
        %v2271 = vrot.slane %v2125, 1
        %v2272 = vsel %vm387, %v2270, %v2271
        %v2273 = vrot.slane %v2126, 1
        %v2274 = vsel %vm387, %v2271, %v2273
        %v2275 = vrot.slane %v2127, 1
        %v2276 = vrot.slane %v2128, 1
        %v2277 = vsel %vm387, %v2275, %v2276
        %v2278 = vrot.slane %v2129, 1
        %v2279 = vsel %vm387, %v2276, %v2278
        %v2280 = vrot.slane %v2130, 1
        %v2281 = vrot.slane %v2131, 1
        %v2282 = vsel %vm387, %v2280, %v2281
        %v2283 = vrot.slane %v2132, 1
        %v2284 = vsel %vm387, %v2281, %v2283
        %v2285 = vrot.slane %v2133, 1
        %v2286 = vrot.slane %v2134, 1
        %v2287 = vsel %vm387, %v2285, %v2286
        %v2288 = vrot.slane %v2135, 1
        %v2289 = vsel %vm387, %v2286, %v2288
        %v2290 = vrot.slane %v2136, 1
        %v2291 = vrot.slane %v2137, 1
        %v2292 = vsel %vm387, %v2290, %v2291
        %v2293 = vrot.slane %v2138, 1
        %v2294 = vsel %vm387, %v2291, %v2293
        %v2295 = vrot.slane %v2139, 1
        %v2296 = vrot.slane %v2140, 1
        %v2297 = vsel %vm387, %v2295, %v2296
        %v2298 = vrot.slane %v2141, 1
        %v2299 = vsel %vm387, %v2296, %v2298
        %v2300 = vrot.slane %v2142, 1
        %v2301 = vrot.slane %v2143, 1
        %v2302 = vsel %vm387, %v2300, %v2301
        %v2303 = vrot.slane %v2144, 1
        %v2304 = vsel %vm387, %v2301, %v2303
        %v2305 = vrot.slane %v2145, 1
        %v2306 = vrot.slane %v2146, 1
        %v2307 = vsel %vm387, %v2305, %v2306
        %v2308 = vrot.slane %v2147, 1
        %v2309 = vsel %vm387, %v2306, %v2308
        %v2310 = vrot.slane %v2148, 1
        %v2311 = vrot.slane %v2149, 1
        %v2312 = vsel %vm387, %v2310, %v2311
        %v2313 = vrot.slane %v2150, 1
        %v2314 = vsel %vm387, %v2311, %v2313
        %v2315 = vrot.slane %v2151, 1
        %v2316 = vrot.slane %v2152, 1
        %v2317 = vsel %vm387, %v2315, %v2316
        %v2318 = vrot.slane %v2153, 1
        %v2319 = vsel %vm387, %v2316, %v2318
        %v2352 = vpack.c.bf16 %v2244, %v2242
        %v2353 = vpack.c.bf16 %v2249, %v2247
        %v2354 = vpack.c.bf16 %v2254, %v2252
        %v2355 = vpack.c.bf16 %v2259, %v2257
        %v2356 = vpack.c.bf16 %v2264, %v2262
        %v2357 = vpack.c.bf16 %v2269, %v2267
        %v2358 = vpack.c.bf16 %v2274, %v2272
        %v2359 = vpack.c.bf16 %v2279, %v2277
        %v2360 = vpack.c.bf16 %v2284, %v2282
        %v2361 = vpack.c.bf16 %v2289, %v2287
        %v2362 = vpack.c.bf16 %v2294, %v2292
        %v2363 = vpack.c.bf16 %v2299, %v2297
        %v2364 = vpack.c.bf16 %v2304, %v2302
        %v2365 = vpack.c.bf16 %v2309, %v2307
        %v2366 = vpack.c.bf16 %v2314, %v2312
        %v2367 = vpack.c.bf16 %v2319, %v2317
        %2384 = vrot.lane.b32.xlu0 %v2352, 64
        %v2385 = vpop.permute.xlu0 %2384
        %2386 = vrot.lane.b32.xlu0 %v2353, 64
        %v2387 = vpop.permute.xlu0 %2386
        %2388 = vrot.lane.b32.xlu0 %v2354, 64
        %v2389 = vpop.permute.xlu0 %2388
        %2390 = vrot.lane.b32.xlu0 %v2355, 64
        %v2391 = vpop.permute.xlu0 %2390
        %2392 = vrot.lane.b32.xlu0 %v2356, 64
        %v2393 = vpop.permute.xlu0 %2392
        %2394 = vrot.lane.b32.xlu0 %v2357, 64
        %v2395 = vpop.permute.xlu0 %2394
        %2396 = vrot.lane.b32.xlu0 %v2358, 64
        %v2397 = vpop.permute.xlu0 %2396
        %2398 = vrot.lane.b32.xlu0 %v2359, 64
        %v2399 = vpop.permute.xlu0 %2398
        %2400 = vrot.lane.b32.xlu0 %v2360, 64
        %v2401 = vpop.permute.xlu0 %2400
        %2402 = vrot.lane.b32.xlu0 %v2361, 64
        %v2403 = vpop.permute.xlu0 %2402
        %2404 = vrot.lane.b32.xlu0 %v2362, 64
        %v2405 = vpop.permute.xlu0 %2404
        %2406 = vrot.lane.b32.xlu0 %v2363, 64
        %v2407 = vpop.permute.xlu0 %2406
        %2408 = vrot.lane.b32.xlu0 %v2364, 64
        %v2409 = vpop.permute.xlu0 %2408
        %2410 = vrot.lane.b32.xlu0 %v2365, 64
        %v2411 = vpop.permute.xlu0 %2410
        %2412 = vrot.lane.b32.xlu0 %v2366, 64
        %v2413 = vpop.permute.xlu0 %2412
        %2414 = vrot.lane.b32.xlu0 %v2367, 64
        %v2415 = vpop.permute.xlu0 %2414
        %2432 = vst.msk [vmem:[#allocation3] sm:$0xff] %vm580, %v2385
        %2433 = vst.msk [vmem:[#allocation3 + $0x28] sm:$0xff] %vm580, %v2387
        %2434 = vst.msk [vmem:[#allocation3 + $0x50] sm:$0xff] %vm580, %v2389
        %2435 = vst.msk [vmem:[#allocation3 + $0x78] sm:$0xff] %vm580, %v2391
        %2436 = vst.msk [vmem:[#allocation3 + $0xa0] sm:$0xff] %vm580, %v2393
        %2437 = vst.msk [vmem:[#allocation3 + $0xc8] sm:$0xff] %vm580, %v2395
        %2438 = vst.msk [vmem:[#allocation3 + $0xf0] sm:$0xff] %vm580, %v2397
        %2439 = vst.msk [vmem:[#allocation3 + $0x118] sm:$0xff] %vm580, %v2399
        %2440 = vst.msk [vmem:[#allocation3 + $0x140] sm:$0xff] %vm580, %v2401
        %2441 = vst.msk [vmem:[#allocation3 + $0x168] sm:$0xff] %vm580, %v2403
        %2442 = vst.msk [vmem:[#allocation3 + $0x190] sm:$0xff] %vm580, %v2405
        %2443 = vst.msk [vmem:[#allocation3 + $0x1b8] sm:$0xff] %vm580, %v2407
        %2444 = vst.msk [vmem:[#allocation3 + $0x1e0] sm:$0xff] %vm580, %v2409
        %2445 = vst.msk [vmem:[#allocation3 + $0x208] sm:$0xff] %vm580, %v2411
        %2446 = vst.msk [vmem:[#allocation3 + $0x230] sm:$0xff] %vm580, %v2413
        %2447 = vst.msk [vmem:[#allocation3 + $0x258] sm:$0xff] %vm580, %v2415
        %v2448 = vrot.slane %v2106, 2
        %v2449 = vrot.slane %v2107, 2
        %v2450 = vsel %vm597, %v2448, %v2449
        %v2451 = vrot.slane %v2108, 2
        %v2452 = vsel %vm597, %v2449, %v2451
        %v2453 = vrot.slane %v2109, 2
        %v2454 = vrot.slane %v2110, 2
        %v2455 = vsel %vm597, %v2453, %v2454
        %v2456 = vrot.slane %v2111, 2
        %v2457 = vsel %vm597, %v2454, %v2456
        %v2458 = vrot.slane %v2112, 2
        %v2459 = vrot.slane %v2113, 2
        %v2460 = vsel %vm597, %v2458, %v2459
        %v2461 = vrot.slane %v2114, 2
        %v2462 = vsel %vm597, %v2459, %v2461
        %v2463 = vrot.slane %v2115, 2
        %v2464 = vrot.slane %v2116, 2
        %v2465 = vsel %vm597, %v2463, %v2464
        %v2466 = vrot.slane %v2117, 2
        %v2467 = vsel %vm597, %v2464, %v2466
        %v2468 = vrot.slane %v2118, 2
        %v2469 = vrot.slane %v2119, 2
        %v2470 = vsel %vm597, %v2468, %v2469
        %v2471 = vrot.slane %v2120, 2
        %v2472 = vsel %vm597, %v2469, %v2471
        %v2473 = vrot.slane %v2121, 2
        %v2474 = vrot.slane %v2122, 2
        %v2475 = vsel %vm597, %v2473, %v2474
        %v2476 = vrot.slane %v2123, 2
        %v2477 = vsel %vm597, %v2474, %v2476
        %v2478 = vrot.slane %v2124, 2
        %v2479 = vrot.slane %v2125, 2
        %v2480 = vsel %vm597, %v2478, %v2479
        %v2481 = vrot.slane %v2126, 2
        %v2482 = vsel %vm597, %v2479, %v2481
        %v2483 = vrot.slane %v2127, 2
        %v2484 = vrot.slane %v2128, 2
        %v2485 = vsel %vm597, %v2483, %v2484
        %v2486 = vrot.slane %v2129, 2
        %v2487 = vsel %vm597, %v2484, %v2486
        %v2488 = vrot.slane %v2130, 2
        %v2489 = vrot.slane %v2131, 2
        %v2490 = vsel %vm597, %v2488, %v2489
        %v2491 = vrot.slane %v2132, 2
        %v2492 = vsel %vm597, %v2489, %v2491
        %v2493 = vrot.slane %v2133, 2
        %v2494 = vrot.slane %v2134, 2
        %v2495 = vsel %vm597, %v2493, %v2494
        %v2496 = vrot.slane %v2135, 2
        %v2497 = vsel %vm597, %v2494, %v2496
        %v2498 = vrot.slane %v2136, 2
        %v2499 = vrot.slane %v2137, 2
        %v2500 = vsel %vm597, %v2498, %v2499
        %v2501 = vrot.slane %v2138, 2
        %v2502 = vsel %vm597, %v2499, %v2501
        %v2503 = vrot.slane %v2139, 2
        %v2504 = vrot.slane %v2140, 2
        %v2505 = vsel %vm597, %v2503, %v2504
        %v2506 = vrot.slane %v2141, 2
        %v2507 = vsel %vm597, %v2504, %v2506
        %v2508 = vrot.slane %v2142, 2
        %v2509 = vrot.slane %v2143, 2
        %v2510 = vsel %vm597, %v2508, %v2509
        %v2511 = vrot.slane %v2144, 2
        %v2512 = vsel %vm597, %v2509, %v2511
        %v2513 = vrot.slane %v2145, 2
        %v2514 = vrot.slane %v2146, 2
        %v2515 = vsel %vm597, %v2513, %v2514
        %v2516 = vrot.slane %v2147, 2
        %v2517 = vsel %vm597, %v2514, %v2516
        %v2518 = vrot.slane %v2148, 2
        %v2519 = vrot.slane %v2149, 2
        %v2520 = vsel %vm597, %v2518, %v2519
        %v2521 = vrot.slane %v2150, 2
        %v2522 = vsel %vm597, %v2519, %v2521
        %v2523 = vrot.slane %v2151, 2
        %v2524 = vrot.slane %v2152, 2
        %v2525 = vsel %vm597, %v2523, %v2524
        %v2526 = vrot.slane %v2153, 2
        %v2527 = vsel %vm597, %v2524, %v2526
        %v2560 = vpack.c.bf16 %v2452, %v2450
        %v2561 = vpack.c.bf16 %v2457, %v2455
        %v2562 = vpack.c.bf16 %v2462, %v2460
        %v2563 = vpack.c.bf16 %v2467, %v2465
        %v2564 = vpack.c.bf16 %v2472, %v2470
        %v2565 = vpack.c.bf16 %v2477, %v2475
        %v2566 = vpack.c.bf16 %v2482, %v2480
        %v2567 = vpack.c.bf16 %v2487, %v2485
        %v2568 = vpack.c.bf16 %v2492, %v2490
        %v2569 = vpack.c.bf16 %v2497, %v2495
        %v2570 = vpack.c.bf16 %v2502, %v2500
        %v2571 = vpack.c.bf16 %v2507, %v2505
        %v2572 = vpack.c.bf16 %v2512, %v2510
        %v2573 = vpack.c.bf16 %v2517, %v2515
        %v2574 = vpack.c.bf16 %v2522, %v2520
        %v2575 = vpack.c.bf16 %v2527, %v2525
        %2576 = vst.msk [vmem:[#allocation3 + $0x8] sm:$0xff] %vm322, %v2560
        %2577 = vst.msk [vmem:[#allocation3 + $0x30] sm:$0xff] %vm322, %v2561
        %2578 = vst.msk [vmem:[#allocation3 + $0x58] sm:$0xff] %vm322, %v2562
        %2579 = vst.msk [vmem:[#allocation3 + $0x80] sm:$0xff] %vm322, %v2563
        %2580 = vst.msk [vmem:[#allocation3 + $0xa8] sm:$0xff] %vm322, %v2564
        %2581 = vst.msk [vmem:[#allocation3 + $0xd0] sm:$0xff] %vm322, %v2565
        %2582 = vst.msk [vmem:[#allocation3 + $0xf8] sm:$0xff] %vm322, %v2566
        %2583 = vst.msk [vmem:[#allocation3 + $0x120] sm:$0xff] %vm322, %v2567
        %2584 = vst.msk [vmem:[#allocation3 + $0x148] sm:$0xff] %vm322, %v2568
        %2585 = vst.msk [vmem:[#allocation3 + $0x170] sm:$0xff] %vm322, %v2569
        %2586 = vst.msk [vmem:[#allocation3 + $0x198] sm:$0xff] %vm322, %v2570
        %2587 = vst.msk [vmem:[#allocation3 + $0x1c0] sm:$0xff] %vm322, %v2571
        %2588 = vst.msk [vmem:[#allocation3 + $0x1e8] sm:$0xff] %vm322, %v2572
        %2589 = vst.msk [vmem:[#allocation3 + $0x210] sm:$0xff] %vm322, %v2573
        %2590 = vst.msk [vmem:[#allocation3 + $0x238] sm:$0xff] %vm322, %v2574
        %2591 = vst.msk [vmem:[#allocation3 + $0x260] sm:$0xff] %vm322, %v2575
        %v2592 = vpack.c.bf16 %v2155, %v2154
        %2609 = vrot.lane.b32.xlu0 %v2161, 64
        %v2610 = vpop.permute.xlu0 %2609
        %2611 = vrot.lane.b32.xlu0 %v2162, 64
        %v2612 = vpop.permute.xlu0 %2611
        %2613 = vrot.lane.b32.xlu0 %v2163, 64
        %v2614 = vpop.permute.xlu0 %2613
        %2615 = vrot.lane.b32.xlu0 %v2164, 64
        %v2616 = vpop.permute.xlu0 %2615
        %2617 = vrot.lane.b32.xlu0 %v2165, 64
        %v2618 = vpop.permute.xlu0 %2617
        %2619 = vrot.lane.b32.xlu0 %v2166, 64
        %v2620 = vpop.permute.xlu0 %2619
        %2621 = vrot.lane.b32.xlu0 %v2167, 64
        %v2622 = vpop.permute.xlu0 %2621
        %2623 = vrot.lane.b32.xlu0 %v2168, 64
        %v2624 = vpop.permute.xlu0 %2623
        %2625 = vrot.lane.b32.xlu0 %v2169, 64
        %v2626 = vpop.permute.xlu0 %2625
        %2627 = vrot.lane.b32.xlu0 %v2170, 64
        %v2628 = vpop.permute.xlu0 %2627
        %2629 = vrot.lane.b32.xlu0 %v2171, 64
        %v2630 = vpop.permute.xlu0 %2629
        %2631 = vrot.lane.b32.xlu0 %v2172, 64
        %v2632 = vpop.permute.xlu0 %2631
        %2633 = vrot.lane.b32.xlu0 %v2173, 64
        %v2634 = vpop.permute.xlu0 %2633
        %2635 = vrot.lane.b32.xlu0 %v2174, 64
        %v2636 = vpop.permute.xlu0 %2635
        %2637 = vrot.lane.b32.xlu0 %v2175, 64
        %v2638 = vpop.permute.xlu0 %2637
        %2639 = vrot.lane.b32.xlu0 %v2592, 64
        %v2640 = vpop.permute.xlu0 %2639
        %2657 = vst.msk [vmem:[#allocation3 + $0x8] sm:$0xff] %vm580, %v2610
        %2658 = vst.msk [vmem:[#allocation3 + $0x30] sm:$0xff] %vm580, %v2612
        %2659 = vst.msk [vmem:[#allocation3 + $0x58] sm:$0xff] %vm580, %v2614
        %2660 = vst.msk [vmem:[#allocation3 + $0x80] sm:$0xff] %vm580, %v2616
        %2661 = vst.msk [vmem:[#allocation3 + $0xa8] sm:$0xff] %vm580, %v2618
        %2662 = vst.msk [vmem:[#allocation3 + $0xd0] sm:$0xff] %vm580, %v2620
        %2663 = vst.msk [vmem:[#allocation3 + $0xf8] sm:$0xff] %vm580, %v2622
        %2664 = vst.msk [vmem:[#allocation3 + $0x120] sm:$0xff] %vm580, %v2624
        %2665 = vst.msk [vmem:[#allocation3 + $0x148] sm:$0xff] %vm580, %v2626
        %2666 = vst.msk [vmem:[#allocation3 + $0x170] sm:$0xff] %vm580, %v2628
        %2667 = vst.msk [vmem:[#allocation3 + $0x198] sm:$0xff] %vm580, %v2630
        %2668 = vst.msk [vmem:[#allocation3 + $0x1c0] sm:$0xff] %vm580, %v2632
        %2669 = vst.msk [vmem:[#allocation3 + $0x1e8] sm:$0xff] %vm580, %v2634
        %2670 = vst.msk [vmem:[#allocation3 + $0x210] sm:$0xff] %vm580, %v2636
        %2671 = vst.msk [vmem:[#allocation3 + $0x238] sm:$0xff] %vm580, %v2638
        %2672 = vst.msk [vmem:[#allocation3 + $0x260] sm:$0xff] %vm580, %v2640
        %v2676 = vrot.slane %v2154, 1
        %v2677 = vrot.slane %v2155, 1
        %v2678 = vsel %vm387, %v2676, %v2677
        %v2679 = vrot.slane %v2156, 1
        %v2680 = vsel %vm387, %v2677, %v2679
        %v2683 = vpack.c.bf16 %v2680, %v2678
        %2684 = vst.msk [vmem:[#allocation3 + $0x10] sm:$0xff] %vm322, %v2353
        %2685 = vst.msk [vmem:[#allocation3 + $0x38] sm:$0xff] %vm322, %v2354
        %2686 = vst.msk [vmem:[#allocation3 + $0x60] sm:$0xff] %vm322, %v2355
        %2687 = vst.msk [vmem:[#allocation3 + $0x88] sm:$0xff] %vm322, %v2356
        %2688 = vst.msk [vmem:[#allocation3 + $0xb0] sm:$0xff] %vm322, %v2357
        %2689 = vst.msk [vmem:[#allocation3 + $0xd8] sm:$0xff] %vm322, %v2358
        %2690 = vst.msk [vmem:[#allocation3 + $0x100] sm:$0xff] %vm322, %v2359
        %2691 = vst.msk [vmem:[#allocation3 + $0x128] sm:$0xff] %vm322, %v2360
        %2692 = vst.msk [vmem:[#allocation3 + $0x150] sm:$0xff] %vm322, %v2361
        %2693 = vst.msk [vmem:[#allocation3 + $0x178] sm:$0xff] %vm322, %v2362
        %2694 = vst.msk [vmem:[#allocation3 + $0x1a0] sm:$0xff] %vm322, %v2363
        %2695 = vst.msk [vmem:[#allocation3 + $0x1c8] sm:$0xff] %vm322, %v2364
        %2696 = vst.msk [vmem:[#allocation3 + $0x1f0] sm:$0xff] %vm322, %v2365
        %2697 = vst.msk [vmem:[#allocation3 + $0x218] sm:$0xff] %vm322, %v2366
        %2698 = vst.msk [vmem:[#allocation3 + $0x240] sm:$0xff] %vm322, %v2367
        %2699 = vst.msk [vmem:[#allocation3 + $0x268] sm:$0xff] %vm322, %v2683
        %v2700 = vrot.slane %v2154, 2
        %v2701 = vrot.slane %v2155, 2
        %v2702 = vsel %vm597, %v2700, %v2701
        %v2703 = vrot.slane %v2156, 2
        %v2704 = vsel %vm597, %v2701, %v2703
        %v2707 = vpack.c.bf16 %v2704, %v2702
        %2724 = vrot.lane.b32.xlu0 %v2561, 64
        %v2725 = vpop.permute.xlu0 %2724
        %2726 = vrot.lane.b32.xlu0 %v2562, 64
        %v2727 = vpop.permute.xlu0 %2726
        %2728 = vrot.lane.b32.xlu0 %v2563, 64
        %v2729 = vpop.permute.xlu0 %2728
        %2730 = vrot.lane.b32.xlu0 %v2564, 64
        %v2731 = vpop.permute.xlu0 %2730
        %2732 = vrot.lane.b32.xlu0 %v2565, 64
        %v2733 = vpop.permute.xlu0 %2732
        %2734 = vrot.lane.b32.xlu0 %v2566, 64
        %v2735 = vpop.permute.xlu0 %2734
        %2736 = vrot.lane.b32.xlu0 %v2567, 64
        %v2737 = vpop.permute.xlu0 %2736
        %2738 = vrot.lane.b32.xlu0 %v2568, 64
        %v2739 = vpop.permute.xlu0 %2738
        %2740 = vrot.lane.b32.xlu0 %v2569, 64
        %v2741 = vpop.permute.xlu0 %2740
        %2742 = vrot.lane.b32.xlu0 %v2570, 64
        %v2743 = vpop.permute.xlu0 %2742
        %2744 = vrot.lane.b32.xlu0 %v2571, 64
        %v2745 = vpop.permute.xlu0 %2744
        %2746 = vrot.lane.b32.xlu0 %v2572, 64
        %v2747 = vpop.permute.xlu0 %2746
        %2748 = vrot.lane.b32.xlu0 %v2573, 64
        %v2749 = vpop.permute.xlu0 %2748
        %2750 = vrot.lane.b32.xlu0 %v2574, 64
        %v2751 = vpop.permute.xlu0 %2750
        %2752 = vrot.lane.b32.xlu0 %v2575, 64
        %v2753 = vpop.permute.xlu0 %2752
        %2754 = vrot.lane.b32.xlu0 %v2707, 64
        %v2755 = vpop.permute.xlu0 %2754
        %2772 = vst.msk [vmem:[#allocation3 + $0x10] sm:$0xff] %vm580, %v2725
        %2773 = vst.msk [vmem:[#allocation3 + $0x38] sm:$0xff] %vm580, %v2727
        %2774 = vst.msk [vmem:[#allocation3 + $0x60] sm:$0xff] %vm580, %v2729
        %2775 = vst.msk [vmem:[#allocation3 + $0x88] sm:$0xff] %vm580, %v2731
        %2776 = vst.msk [vmem:[#allocation3 + $0xb0] sm:$0xff] %vm580, %v2733
        %2777 = vst.msk [vmem:[#allocation3 + $0xd8] sm:$0xff] %vm580, %v2735
        %2778 = vst.msk [vmem:[#allocation3 + $0x100] sm:$0xff] %vm580, %v2737
        %2779 = vst.msk [vmem:[#allocation3 + $0x128] sm:$0xff] %vm580, %v2739
        %2780 = vst.msk [vmem:[#allocation3 + $0x150] sm:$0xff] %vm580, %v2741
        %2781 = vst.msk [vmem:[#allocation3 + $0x178] sm:$0xff] %vm580, %v2743
        %2782 = vst.msk [vmem:[#allocation3 + $0x1a0] sm:$0xff] %vm580, %v2745
        %2783 = vst.msk [vmem:[#allocation3 + $0x1c8] sm:$0xff] %vm580, %v2747
        %2784 = vst.msk [vmem:[#allocation3 + $0x1f0] sm:$0xff] %vm580, %v2749
        %2785 = vst.msk [vmem:[#allocation3 + $0x218] sm:$0xff] %vm580, %v2751
        %2786 = vst.msk [vmem:[#allocation3 + $0x240] sm:$0xff] %vm580, %v2753
        %2787 = vst.msk [vmem:[#allocation3 + $0x268] sm:$0xff] %vm580, %v2755
        %v2788 = vpack.c.bf16 %v2158, %v2157
        %2789 = vst.msk [vmem:[#allocation3 + $0x18] sm:$0xff] %vm322, %v2162
        %2790 = vst.msk [vmem:[#allocation3 + $0x40] sm:$0xff] %vm322, %v2163
        %2791 = vst.msk [vmem:[#allocation3 + $0x68] sm:$0xff] %vm322, %v2164
        %2792 = vst.msk [vmem:[#allocation3 + $0x90] sm:$0xff] %vm322, %v2165
        %2793 = vst.msk [vmem:[#allocation3 + $0xb8] sm:$0xff] %vm322, %v2166
        %2794 = vst.msk [vmem:[#allocation3 + $0xe0] sm:$0xff] %vm322, %v2167
        %2795 = vst.msk [vmem:[#allocation3 + $0x108] sm:$0xff] %vm322, %v2168
        %2796 = vst.msk [vmem:[#allocation3 + $0x130] sm:$0xff] %vm322, %v2169
        %2797 = vst.msk [vmem:[#allocation3 + $0x158] sm:$0xff] %vm322, %v2170
        %2798 = vst.msk [vmem:[#allocation3 + $0x180] sm:$0xff] %vm322, %v2171
        %2799 = vst.msk [vmem:[#allocation3 + $0x1a8] sm:$0xff] %vm322, %v2172
        %2800 = vst.msk [vmem:[#allocation3 + $0x1d0] sm:$0xff] %vm322, %v2173
        %2801 = vst.msk [vmem:[#allocation3 + $0x1f8] sm:$0xff] %vm322, %v2174
        %2802 = vst.msk [vmem:[#allocation3 + $0x220] sm:$0xff] %vm322, %v2175
        %2803 = vst.msk [vmem:[#allocation3 + $0x248] sm:$0xff] %vm322, %v2592
        %2804 = vst.msk [vmem:[#allocation3 + $0x270] sm:$0xff] %vm322, %v2788
        %v2808 = vrot.slane %v2157, 1
        %v2809 = vrot.slane %v2158, 1
        %v2810 = vsel %vm387, %v2808, %v2809
        %v2811 = vrot.slane %v2159, 1
        %v2812 = vsel %vm387, %v2809, %v2811
        %v2815 = vpack.c.bf16 %v2812, %v2810
        %2818 = vrot.lane.b32.xlu0 %v2683, 64
        %v2819 = vpop.permute.xlu0 %2818
        %2820 = vrot.lane.b32.xlu0 %v2815, 64
        %v2821 = vpop.permute.xlu0 %2820
        %2824 = vst.msk [vmem:[#allocation3 + $0x18] sm:$0xff] %vm580, %v2389
        %2825 = vst.msk [vmem:[#allocation3 + $0x40] sm:$0xff] %vm580, %v2391
        %2826 = vst.msk [vmem:[#allocation3 + $0x68] sm:$0xff] %vm580, %v2393
        %2827 = vst.msk [vmem:[#allocation3 + $0x90] sm:$0xff] %vm580, %v2395
        %2828 = vst.msk [vmem:[#allocation3 + $0xb8] sm:$0xff] %vm580, %v2397
        %2829 = vst.msk [vmem:[#allocation3 + $0xe0] sm:$0xff] %vm580, %v2399
        %2830 = vst.msk [vmem:[#allocation3 + $0x108] sm:$0xff] %vm580, %v2401
        %2831 = vst.msk [vmem:[#allocation3 + $0x130] sm:$0xff] %vm580, %v2403
        %2832 = vst.msk [vmem:[#allocation3 + $0x158] sm:$0xff] %vm580, %v2405
        %2833 = vst.msk [vmem:[#allocation3 + $0x180] sm:$0xff] %vm580, %v2407
        %2834 = vst.msk [vmem:[#allocation3 + $0x1a8] sm:$0xff] %vm580, %v2409
        %2835 = vst.msk [vmem:[#allocation3 + $0x1d0] sm:$0xff] %vm580, %v2411
        %2836 = vst.msk [vmem:[#allocation3 + $0x1f8] sm:$0xff] %vm580, %v2413
        %2837 = vst.msk [vmem:[#allocation3 + $0x220] sm:$0xff] %vm580, %v2415
        %2838 = vst.msk [vmem:[#allocation3 + $0x248] sm:$0xff] %vm580, %v2819
        %2839 = vst.msk [vmem:[#allocation3 + $0x270] sm:$0xff] %vm580, %v2821
        %v2840 = vrot.slane %v2157, 2
        %v2841 = vrot.slane %v2158, 2
        %v2842 = vsel %vm597, %v2840, %v2841
        %v2843 = vrot.slane %v2159, 2
        %v2844 = vsel %vm597, %v2841, %v2843
        %v2847 = vpack.c.bf16 %v2844, %v2842
        %2848 = vst.msk [vmem:[#allocation3 + $0x20] sm:$0xff] %vm322, %v2562
        %2849 = vst.msk [vmem:[#allocation3 + $0x48] sm:$0xff] %vm322, %v2563
        %2850 = vst.msk [vmem:[#allocation3 + $0x70] sm:$0xff] %vm322, %v2564
        %2851 = vst.msk [vmem:[#allocation3 + $0x98] sm:$0xff] %vm322, %v2565
        %2852 = vst.msk [vmem:[#allocation3 + $0xc0] sm:$0xff] %vm322, %v2566
        %2853 = vst.msk [vmem:[#allocation3 + $0xe8] sm:$0xff] %vm322, %v2567
        %2854 = vst.msk [vmem:[#allocation3 + $0x110] sm:$0xff] %vm322, %v2568
        %2855 = vst.msk [vmem:[#allocation3 + $0x138] sm:$0xff] %vm322, %v2569
        %2856 = vst.msk [vmem:[#allocation3 + $0x160] sm:$0xff] %vm322, %v2570
        %2857 = vst.msk [vmem:[#allocation3 + $0x188] sm:$0xff] %vm322, %v2571
        %2858 = vst.msk [vmem:[#allocation3 + $0x1b0] sm:$0xff] %vm322, %v2572
        %2859 = vst.msk [vmem:[#allocation3 + $0x1d8] sm:$0xff] %vm322, %v2573
        %2860 = vst.msk [vmem:[#allocation3 + $0x200] sm:$0xff] %vm322, %v2574
        %2861 = vst.msk [vmem:[#allocation3 + $0x228] sm:$0xff] %vm322, %v2575
        %2862 = vst.msk [vmem:[#allocation3 + $0x250] sm:$0xff] %vm322, %v2707
        %2863 = vst.msk [vmem:[#allocation3 + $0x278] sm:$0xff] %vm322, %v2847
        %v2864 = vld [vmem:[#allocation3] sm:$0xff]
        %v2865 = vld [vmem:[#allocation3 + $0x8] sm:$0xff]
        %v2866 = vld [vmem:[#allocation3 + $0x10] sm:$0xff]
        %v2867 = vld [vmem:[#allocation3 + $0x18] sm:$0xff]
        %v2868 = vld [vmem:[#allocation3 + $0x20] sm:$0xff]
        %v2869 = vld [vmem:[#allocation3 + $0x28] sm:$0xff]
        %v2870 = vld [vmem:[#allocation3 + $0x30] sm:$0xff]
        %v2871 = vld [vmem:[#allocation3 + $0x38] sm:$0xff]
        %v2872 = vld [vmem:[#allocation3 + $0x40] sm:$0xff]
        %v2873 = vld [vmem:[#allocation3 + $0x48] sm:$0xff]
        %v2874 = vld [vmem:[#allocation3 + $0x50] sm:$0xff]
        %v2875 = vld [vmem:[#allocation3 + $0x58] sm:$0xff]
        %v2876 = vld [vmem:[#allocation3 + $0x60] sm:$0xff]
        %v2877 = vld [vmem:[#allocation3 + $0x68] sm:$0xff]
        %v2878 = vld [vmem:[#allocation3 + $0x70] sm:$0xff]
        %v2879 = vld [vmem:[#allocation3 + $0x78] sm:$0xff]
        %v2880 = vld [vmem:[#allocation3 + $0x80] sm:$0xff]
        %v2881 = vld [vmem:[#allocation3 + $0x88] sm:$0xff]
        %v2882 = vld [vmem:[#allocation3 + $0x90] sm:$0xff]
        %v2883 = vld [vmem:[#allocation3 + $0x98] sm:$0xff]
        %v2884 = vld [vmem:[#allocation3 + $0xa0] sm:$0xff]
        %v2885 = vld [vmem:[#allocation3 + $0xa8] sm:$0xff]
        %v2886 = vld [vmem:[#allocation3 + $0xb0] sm:$0xff]
        %v2887 = vld [vmem:[#allocation3 + $0xb8] sm:$0xff]
        %v2888 = vld [vmem:[#allocation3 + $0xc0] sm:$0xff]
        %v2889 = vld [vmem:[#allocation3 + $0xc8] sm:$0xff]
        %v2890 = vld [vmem:[#allocation3 + $0xd0] sm:$0xff]
        %v2891 = vld [vmem:[#allocation3 + $0xd8] sm:$0xff]
        %v2892 = vld [vmem:[#allocation3 + $0xe0] sm:$0xff]
        %v2893 = vld [vmem:[#allocation3 + $0xe8] sm:$0xff]
        %v2894 = vld [vmem:[#allocation3 + $0xf0] sm:$0xff]
        %v2895 = vld [vmem:[#allocation3 + $0xf8] sm:$0xff]
        %v2896 = vld [vmem:[#allocation3 + $0x100] sm:$0xff]
        %v2897 = vld [vmem:[#allocation3 + $0x108] sm:$0xff]
        %v2898 = vld [vmem:[#allocation3 + $0x110] sm:$0xff]
        %v2899 = vld [vmem:[#allocation3 + $0x118] sm:$0xff]
        %v2900 = vld [vmem:[#allocation3 + $0x120] sm:$0xff]
        %v2901 = vld [vmem:[#allocation3 + $0x128] sm:$0xff]
        %v2902 = vld [vmem:[#allocation3 + $0x130] sm:$0xff]
        %v2903 = vld [vmem:[#allocation3 + $0x138] sm:$0xff]
        %v2904 = vld [vmem:[#allocation3 + $0x140] sm:$0xff]
        %v2905 = vld [vmem:[#allocation3 + $0x148] sm:$0xff]
        %v2906 = vld [vmem:[#allocation3 + $0x150] sm:$0xff]
        %v2907 = vld [vmem:[#allocation3 + $0x158] sm:$0xff]
        %v2908 = vld [vmem:[#allocation3 + $0x160] sm:$0xff]
        %v2909 = vld [vmem:[#allocation3 + $0x168] sm:$0xff]
        %v2910 = vld [vmem:[#allocation3 + $0x170] sm:$0xff]
        %v2911 = vld [vmem:[#allocation3 + $0x178] sm:$0xff]
        %v2912 = vld [vmem:[#allocation3 + $0x180] sm:$0xff]
        %v2913 = vld [vmem:[#allocation3 + $0x188] sm:$0xff]
        %v2914 = vld [vmem:[#allocation3 + $0x190] sm:$0xff]
        %v2915 = vld [vmem:[#allocation3 + $0x198] sm:$0xff]
        %v2916 = vld [vmem:[#allocation3 + $0x1a0] sm:$0xff]
        %v2917 = vld [vmem:[#allocation3 + $0x1a8] sm:$0xff]
        %v2918 = vld [vmem:[#allocation3 + $0x1b0] sm:$0xff]
        %v2919 = vld [vmem:[#allocation3 + $0x1b8] sm:$0xff]
        %v2920 = vld [vmem:[#allocation3 + $0x1c0] sm:$0xff]
        %v2921 = vld [vmem:[#allocation3 + $0x1c8] sm:$0xff]
        %v2922 = vld [vmem:[#allocation3 + $0x1d0] sm:$0xff]
        %v2923 = vld [vmem:[#allocation3 + $0x1d8] sm:$0xff]
        %v2924 = vld [vmem:[#allocation3 + $0x1e0] sm:$0xff]
        %v2925 = vld [vmem:[#allocation3 + $0x1e8] sm:$0xff]
        %v2926 = vld [vmem:[#allocation3 + $0x1f0] sm:$0xff]
        %v2927 = vld [vmem:[#allocation3 + $0x1f8] sm:$0xff]
        %v2928 = vld [vmem:[#allocation3 + $0x200] sm:$0xff]
        %v2929 = vld [vmem:[#allocation3 + $0x208] sm:$0xff]
        %v2930 = vld [vmem:[#allocation3 + $0x210] sm:$0xff]
        %v2931 = vld [vmem:[#allocation3 + $0x218] sm:$0xff]
        %v2932 = vld [vmem:[#allocation3 + $0x220] sm:$0xff]
        %v2933 = vld [vmem:[#allocation3 + $0x228] sm:$0xff]
        %v2934 = vld [vmem:[#allocation3 + $0x230] sm:$0xff]
        %v2935 = vld [vmem:[#allocation3 + $0x238] sm:$0xff]
        %v2936 = vld [vmem:[#allocation3 + $0x240] sm:$0xff]
        %v2937 = vld [vmem:[#allocation3 + $0x248] sm:$0xff]
        %v2938 = vld [vmem:[#allocation3 + $0x250] sm:$0xff]
        %v2939 = vld [vmem:[#allocation3 + $0x258] sm:$0xff]
        %v2940 = vld [vmem:[#allocation3 + $0x260] sm:$0xff]
        %v2941 = vld [vmem:[#allocation3 + $0x268] sm:$0xff]
        %v2942 = vld [vmem:[#allocation3 + $0x270] sm:$0xff]
        %v2943 = vld [vmem:[#allocation3 + $0x278] sm:$0xff]
        %v2944 = vld [vmem:[%s4] sm:$0xf]
        %v2945 = vld [vmem:[%s4 + $0x4] sm:$0xf]
        %v2946 = vld [vmem:[%s4 + $0x8] sm:$0xf]
        %v2947 = vld [vmem:[%s4 + $0xc] sm:$0xf]
        %v2948 = vld [vmem:[%s4 + $0x10] sm:$0xf]
        %v2949 = vld [vmem:[%s4 + $0x14] sm:$0xf]
        %v2950 = vld [vmem:[%s4 + $0x18] sm:$0xf]
        %v2951 = vld [vmem:[%s4 + $0x1c] sm:$0xf]
        %v2952 = vld [vmem:[%s4 + $0x20] sm:$0xf]
        %v2953 = vld [vmem:[%s4 + $0x24] sm:$0xf]
        %v2954 = vld [vmem:[%s4 + $0x28] sm:$0xf]
        %v2955 = vld [vmem:[%s4 + $0x2c] sm:$0xf]
        %v2956 = vld [vmem:[%s4 + $0x30] sm:$0xf]
        %v2957 = vld [vmem:[%s4 + $0x34] sm:$0xf]
        %v2958 = vld [vmem:[%s4 + $0x38] sm:$0xf]
        %v2959 = vld [vmem:[%s4 + $0x3c] sm:$0xf]
        %v2960 = vld [vmem:[%s4 + $0x40] sm:$0xf]
        %v2961 = vld [vmem:[%s4 + $0x44] sm:$0xf]
        %v2962 = vld [vmem:[%s4 + $0x48] sm:$0xf]
        %v2963 = vld [vmem:[%s4 + $0x4c] sm:$0xf]
        %v2964 = vld [vmem:[%s4 + $0x50] sm:$0xf]
        %v2965 = vld [vmem:[%s4 + $0x54] sm:$0xf]
        %v2966 = vld [vmem:[%s4 + $0x58] sm:$0xf]
        %v2967 = vld [vmem:[%s4 + $0x5c] sm:$0xf]
        %v2968 = vld [vmem:[%s4 + $0x60] sm:$0xf]
        %v2969 = vld [vmem:[%s4 + $0x64] sm:$0xf]
        %v2970 = vld [vmem:[%s4 + $0x68] sm:$0xf]
        %v2971 = vld [vmem:[%s4 + $0x6c] sm:$0xf]
        %v2972 = vld [vmem:[%s4 + $0x70] sm:$0xf]
        %v2973 = vld [vmem:[%s4 + $0x74] sm:$0xf]
        %v2974 = vld [vmem:[%s4 + $0x78] sm:$0xf]
        %v2975 = vld [vmem:[%s4 + $0x7c] sm:$0xf]
        %v2976 = vld [vmem:[%s4 + $0x80] sm:$0xf]
        %v2977 = vld [vmem:[%s4 + $0x84] sm:$0xf]
        %v2978 = vld [vmem:[%s4 + $0x88] sm:$0xf]
        %v2979 = vld [vmem:[%s4 + $0x8c] sm:$0xf]
        %v2980 = vld [vmem:[%s4 + $0x90] sm:$0xf]
        %v2981 = vld [vmem:[%s4 + $0x94] sm:$0xf]
        %v2982 = vld [vmem:[%s4 + $0x98] sm:$0xf]
        %v2983 = vld [vmem:[%s4 + $0x9c] sm:$0xf]
        %v2984 = vld [vmem:[%s4 + $0xa0] sm:$0xf]
        %v2985 = vld [vmem:[%s4 + $0xa4] sm:$0xf]
        %v2986 = vld [vmem:[%s4 + $0xa8] sm:$0xf]
        %v2987 = vld [vmem:[%s4 + $0xac] sm:$0xf]
        %v2988 = vld [vmem:[%s4 + $0xb0] sm:$0xf]
        %v2989 = vld [vmem:[%s4 + $0xb4] sm:$0xf]
        %v2990 = vld [vmem:[%s4 + $0xb8] sm:$0xf]
        %v2991 = vld [vmem:[%s4 + $0xbc] sm:$0xf]
        %v2992 = vld [vmem:[%s4 + $0xc0] sm:$0xf]
        %v2993 = vld [vmem:[%s4 + $0xc4] sm:$0xf]
        %v2994 = vld [vmem:[%s4 + $0xc8] sm:$0xf]
        %v2995 = vld [vmem:[%s4 + $0xcc] sm:$0xf]
        %v2996 = vld [vmem:[%s4 + $0xd0] sm:$0xf]
        %v2997 = vld [vmem:[%s4 + $0xd4] sm:$0xf]
        %v2998 = vld [vmem:[%s4 + $0xd8] sm:$0xf]
        %v2999 = vld [vmem:[%s4 + $0xdc] sm:$0xf]
        %v3000 = vld [vmem:[%s4 + $0xe0] sm:$0xf]
        %v3001 = vld [vmem:[%s4 + $0xe4] sm:$0xf]
        %v3002 = vld [vmem:[%s4 + $0xe8] sm:$0xf]
        %v3003 = vld [vmem:[%s4 + $0xec] sm:$0xf]
        %v3004 = vld [vmem:[%s4 + $0xf0] sm:$0xf]
        %v3005 = vld [vmem:[%s4 + $0xf4] sm:$0xf]
        %v3006 = vld [vmem:[%s4 + $0xf8] sm:$0xf]
        %v3007 = vld [vmem:[%s4 + $0xfc] sm:$0xf]
        %v3008 = vld [vmem:[%s4 + $0x100] sm:$0xf]
        %v3009 = vld [vmem:[%s4 + $0x104] sm:$0xf]
        %v3010 = vld [vmem:[%s4 + $0x108] sm:$0xf]
        %v3011 = vld [vmem:[%s4 + $0x10c] sm:$0xf]
        %v3012 = vld [vmem:[%s4 + $0x110] sm:$0xf]
        %v3013 = vld [vmem:[%s4 + $0x114] sm:$0xf]
        %v3014 = vld [vmem:[%s4 + $0x118] sm:$0xf]
        %v3015 = vld [vmem:[%s4 + $0x11c] sm:$0xf]
        %v3016 = vld [vmem:[%s5] sm:$0x1]
        %v3018 = vlaneseq
        %v3019 = vshrl.u32 %v3018, 7
        %v3020 = vsub.s32 0, %v3019
        %v3021 = vrot.slane %v3016, %v3020
        %v3095 = vunpack.c.l.b16 %v2944
        %v3096 = vunpack.c.l.b16 %v2945
        %v3097 = vunpack.c.l.b16 %v2946
        %v3098 = vunpack.c.l.b16 %v2947
        %v3099 = vunpack.c.l.b16 %v2948
        %v3100 = vunpack.c.l.b16 %v2949
        %v3101 = vunpack.c.l.b16 %v2950
        %v3102 = vunpack.c.l.b16 %v2951
        %v3103 = vunpack.c.l.b16 %v2952
        %v3104 = vunpack.c.l.b16 %v2953
        %v3105 = vunpack.c.l.b16 %v2954
        %v3106 = vunpack.c.l.b16 %v2955
        %v3107 = vunpack.c.l.b16 %v2956
        %v3108 = vunpack.c.l.b16 %v2957
        %v3109 = vunpack.c.l.b16 %v2958
        %v3110 = vunpack.c.l.b16 %v2959
        %v3111 = vunpack.c.l.b16 %v2960
        %v3112 = vunpack.c.l.b16 %v2961
        %v3113 = vunpack.c.l.b16 %v2962
        %v3114 = vunpack.c.l.b16 %v2963
        %v3115 = vunpack.c.l.b16 %v2964
        %v3116 = vunpack.c.l.b16 %v2965
        %v3117 = vunpack.c.l.b16 %v2966
        %v3118 = vunpack.c.l.b16 %v2967
        %v3119 = vunpack.c.l.b16 %v2968
        %v3120 = vunpack.c.l.b16 %v2969
        %v3121 = vunpack.c.l.b16 %v2970
        %v3122 = vunpack.c.l.b16 %v2971
        %v3123 = vunpack.c.l.b16 %v2972
        %v3124 = vunpack.c.l.b16 %v2973
        %v3125 = vunpack.c.l.b16 %v2974
        %v3126 = vunpack.c.l.b16 %v2975
        %v3127 = vunpack.c.l.b16 %v2976
        %v3128 = vunpack.c.l.b16 %v2977
        %v3129 = vunpack.c.l.b16 %v2978
        %v3130 = vunpack.c.l.b16 %v2979
        %v3131 = vunpack.c.l.b16 %v2980
        %v3132 = vunpack.c.l.b16 %v2981
        %v3133 = vunpack.c.l.b16 %v2982
        %v3134 = vunpack.c.l.b16 %v2983
        %v3135 = vunpack.c.l.b16 %v2984
        %v3136 = vunpack.c.l.b16 %v2985
        %v3137 = vunpack.c.l.b16 %v2986
        %v3138 = vunpack.c.l.b16 %v2987
        %v3139 = vunpack.c.l.b16 %v2988
        %v3140 = vunpack.c.l.b16 %v2989
        %v3141 = vunpack.c.l.b16 %v2990
        %v3142 = vunpack.c.l.b16 %v2991
        %v3143 = vunpack.c.l.b16 %v2992
        %v3144 = vunpack.c.l.b16 %v2993
        %v3145 = vunpack.c.l.b16 %v2994
        %v3146 = vunpack.c.l.b16 %v2995
        %v3147 = vunpack.c.l.b16 %v2996
        %v3148 = vunpack.c.l.b16 %v2997
        %v3149 = vunpack.c.l.b16 %v2998
        %v3150 = vunpack.c.l.b16 %v2999
        %v3151 = vunpack.c.l.b16 %v3000
        %v3152 = vunpack.c.l.b16 %v3001
        %v3153 = vunpack.c.l.b16 %v3002
        %v3154 = vunpack.c.l.b16 %v3003
        %v3155 = vunpack.c.l.b16 %v3004
        %v3156 = vunpack.c.l.b16 %v3005
        %v3157 = vunpack.c.l.b16 %v3006
        %v3158 = vunpack.c.l.b16 %v3007
        %v3159 = vunpack.c.l.b16 %v3008
        %v3160 = vunpack.c.l.b16 %v3009
        %v3161 = vunpack.c.l.b16 %v3010
        %v3162 = vunpack.c.l.b16 %v3011
        %v3163 = vunpack.c.l.b16 %v3012
        %v3164 = vunpack.c.l.b16 %v3013
        %v3165 = vunpack.c.l.b16 %v3014
        %v3166 = vunpack.c.l.b16 %v3015
        %v3167 = vpack.c.b16 %v3096, %v3095
        %v3168 = vpack.c.b16 %v3098, %v3097
        %v3169 = vpack.c.b16 %v3100, %v3099
        %v3170 = vpack.c.b16 %v3102, %v3101
        %v3171 = vpack.c.b16 %v3104, %v3103
        %v3172 = vpack.c.b16 %v3106, %v3105
        %v3173 = vpack.c.b16 %v3108, %v3107
        %v3174 = vpack.c.b16 %v3110, %v3109
        %v3175 = vpack.c.b16 %v3112, %v3111
        %v3176 = vpack.c.b16 %v3114, %v3113
        %v3177 = vpack.c.b16 %v3116, %v3115
        %v3178 = vpack.c.b16 %v3118, %v3117
        %v3179 = vpack.c.b16 %v3120, %v3119
        %v3180 = vpack.c.b16 %v3122, %v3121
        %v3181 = vpack.c.b16 %v3124, %v3123
        %v3182 = vpack.c.b16 %v3126, %v3125
        %v3183 = vpack.c.b16 %v3128, %v3127
        %v3184 = vpack.c.b16 %v3130, %v3129
        %v3185 = vpack.c.b16 %v3132, %v3131
        %v3186 = vpack.c.b16 %v3134, %v3133
        %v3187 = vpack.c.b16 %v3136, %v3135
        %v3188 = vpack.c.b16 %v3138, %v3137
        %v3189 = vpack.c.b16 %v3140, %v3139
        %v3190 = vpack.c.b16 %v3142, %v3141
        %v3191 = vpack.c.b16 %v3144, %v3143
        %v3192 = vpack.c.b16 %v3146, %v3145
        %v3193 = vpack.c.b16 %v3148, %v3147
        %v3194 = vpack.c.b16 %v3150, %v3149
        %v3195 = vpack.c.b16 %v3152, %v3151
        %v3196 = vpack.c.b16 %v3154, %v3153
        %v3197 = vpack.c.b16 %v3156, %v3155
        %v3198 = vpack.c.b16 %v3158, %v3157
        %v3199 = vpack.c.b16 %v3160, %v3159
        %v3200 = vpack.c.b16 %v3162, %v3161
        %v3201 = vpack.c.b16 %v3164, %v3163
        %v3202 = vpack.c.b16 %v3166, %v3165
        %v3240 = vsel %vm322, %v2868, 0
        %v3243 = vsel %vm322, %v2873, 0
        %v3246 = vsel %vm322, %v2878, 0
        %v3249 = vsel %vm322, %v2883, 0
        %v3252 = vsel %vm322, %v2888, 0
        %v3255 = vsel %vm322, %v2893, 0
        %v3258 = vsel %vm322, %v2898, 0
        %v3261 = vsel %vm322, %v2903, 0
        %v3264 = vsel %vm322, %v2908, 0
        %v3267 = vsel %vm322, %v2913, 0
        %v3270 = vsel %vm322, %v2918, 0
        %v3273 = vsel %vm322, %v2923, 0
        %v3276 = vsel %vm322, %v2928, 0
        %v3279 = vsel %vm322, %v2933, 0
        %v3282 = vsel %vm322, %v2938, 0
        %v3285 = vsel %vm322, %v2943, 0
        %3287 = vmatprep.subr.bf16.mxu0 0
        %3288 = vmatpush1.bf16.msra.mxu0 %v3167
        %3289 = vmatprep.subr.bf16.mxu0 0
        %3290 = vmatpush1.bf16.msra.mxu0 %v3168
        %3291 = vmatprep.subr.bf16.mxu0 0
        %3292 = vmatpush1.bf16.msra.mxu0 %v3169
        %3293 = vmatprep.subr.bf16.mxu0 0
        %3294 = vmatpush1.bf16.msra.mxu0 %v3170
        %3295 = vmatprep.subr.bf16.mxu0 0
        %3296 = vmatpush1.bf16.msra.mxu0 %v3171
        %3297 = vmatprep.subr.bf16.mxu0 0
        %3298 = vmatpush1.bf16.msra.mxu0 %v3172
        %3299 = vmatprep.subr.bf16.mxu0 0
        %3300 = vmatpush1.bf16.msra.mxu0 %v3173
        %3301 = vmatprep.subr.bf16.mxu0 0
        %3302 = vmatpush1.bf16.msra.mxu0 %v3174
        %3303 = vmatprep.subr.bf16.mxu0 0
        %3304 = vmatpush1.bf16.msra.mxu0 %v3175
        %3305 = vmatprep.subr.bf16.mxu0 0
        %3306 = vmatpush1.bf16.msra.mxu0 %v3176
        %3307 = vmatprep.subr.bf16.mxu0 0
        %3308 = vmatpush1.bf16.msra.mxu0 %v3177
        %3309 = vmatprep.subr.bf16.mxu0 0
        %3310 = vmatpush1.bf16.msra.mxu0 %v3178
        %3311 = vmatprep.subr.bf16.mxu0 0
        %3312 = vmatpush1.bf16.msra.mxu0 %v3179
        %3313 = vmatprep.subr.bf16.mxu0 0
        %3314 = vmatpush1.bf16.msra.mxu0 %v3180
        %3315 = vmatprep.subr.bf16.mxu0 0
        %3316 = vmatpush1.bf16.msra.mxu0 %v3181
        %3317 = vmatprep.subr.bf16.mxu0 0
        %3318 = vmatpush1.bf16.msra.mxu0 %v3182
        %3319 = vmatprep.mubr.bf16.mxu0 %v2865
        %3320 = vmatmul.mubr.bf16.gmra.mrb[0].mxu0 %v2864
        %v3321 = vpop.f32.mrb[0].mxu0
        %v3322 = vadd.f32 %v3021, %v3321
        %v3323 = vpop.f32.mrb[0].mxu0
        %v3324 = vpop.f32.mrb[0].mxu0
        %v3325 = vadd.f32 %v3021, %v3324
        %v3326 = vpop.f32.mrb[0].mxu0
        %3327 = vmatprep.mubr.bf16.mxu0 %v2870
        %3328 = vmatmul.mubr.bf16.gmra.mrb[0].mxu0 %v2869
        %v3329 = vpop.f32.mrb[0].mxu0
        %v3330 = vadd.f32 %v3021, %v3329
        %v3331 = vpop.f32.mrb[0].mxu0
        %v3332 = vpop.f32.mrb[0].mxu0
        %v3333 = vadd.f32 %v3021, %v3332
        %v3334 = vpop.f32.mrb[0].mxu0
        %3335 = vmatprep.mubr.bf16.mxu0 %v2875
        %3336 = vmatmul.mubr.bf16.gmra.mrb[0].mxu0 %v2874
        %v3337 = vpop.f32.mrb[0].mxu0
        %v3338 = vadd.f32 %v3021, %v3337
        %v3339 = vpop.f32.mrb[0].mxu0
        %v3340 = vpop.f32.mrb[0].mxu0
        %v3341 = vadd.f32 %v3021, %v3340
        %v3342 = vpop.f32.mrb[0].mxu0
        %3343 = vmatprep.mubr.bf16.mxu0 %v2880
        %3344 = vmatmul.mubr.bf16.gmra.mrb[0].mxu0 %v2879
        %v3345 = vpop.f32.mrb[0].mxu0
        %v3346 = vadd.f32 %v3021, %v3345
        %v3347 = vpop.f32.mrb[0].mxu0
        %v3348 = vpop.f32.mrb[0].mxu0
        %v3349 = vadd.f32 %v3021, %v3348
        %v3350 = vpop.f32.mrb[0].mxu0
        %3351 = vmatprep.mubr.bf16.mxu0 %v2885
        %3352 = vmatmul.mubr.bf16.gmra.mrb[0].mxu0 %v2884
        %v3353 = vpop.f32.mrb[0].mxu0
        %v3354 = vadd.f32 %v3021, %v3353
        %v3355 = vpop.f32.mrb[0].mxu0
        %v3356 = vpop.f32.mrb[0].mxu0
        %v3357 = vadd.f32 %v3021, %v3356
        %v3358 = vpop.f32.mrb[0].mxu0
        %3359 = vmatprep.mubr.bf16.mxu0 %v2890
        %3360 = vmatmul.mubr.bf16.gmra.mrb[0].mxu0 %v2889
        %v3361 = vpop.f32.mrb[0].mxu0
        %v3362 = vadd.f32 %v3021, %v3361
        %v3363 = vpop.f32.mrb[0].mxu0
        %v3364 = vpop.f32.mrb[0].mxu0
        %v3365 = vadd.f32 %v3021, %v3364
        %v3366 = vpop.f32.mrb[0].mxu0
        %3367 = vmatprep.mubr.bf16.mxu0 %v2895
        %3368 = vmatmul.mubr.bf16.gmra.mrb[0].mxu0 %v2894
        %v3369 = vpop.f32.mrb[0].mxu0
        %v3370 = vadd.f32 %v3021, %v3369
        %v3371 = vpop.f32.mrb[0].mxu0
        %v3372 = vpop.f32.mrb[0].mxu0
        %v3373 = vadd.f32 %v3021, %v3372
        %v3374 = vpop.f32.mrb[0].mxu0
        %3375 = vmatprep.mubr.bf16.mxu0 %v2900
        %3376 = vmatmul.mubr.bf16.gmra.mrb[0].mxu0 %v2899
        %v3377 = vpop.f32.mrb[0].mxu0
        %v3378 = vadd.f32 %v3021, %v3377
        %v3379 = vpop.f32.mrb[0].mxu0
        %v3380 = vpop.f32.mrb[0].mxu0
        %v3381 = vadd.f32 %v3021, %v3380
        %v3382 = vpop.f32.mrb[0].mxu0
        %3383 = vmatprep.mubr.bf16.mxu0 %v2905
        %3384 = vmatmul.mubr.bf16.gmra.mrb[0].mxu0 %v2904
        %v3385 = vpop.f32.mrb[0].mxu0
        %v3386 = vadd.f32 %v3021, %v3385
        %v3387 = vpop.f32.mrb[0].mxu0
        %v3388 = vpop.f32.mrb[0].mxu0
        %v3389 = vadd.f32 %v3021, %v3388
        %v3390 = vpop.f32.mrb[0].mxu0
        %3391 = vmatprep.mubr.bf16.mxu0 %v2910
        %3392 = vmatmul.mubr.bf16.gmra.mrb[0].mxu0 %v2909
        %v3393 = vpop.f32.mrb[0].mxu0
        %v3394 = vadd.f32 %v3021, %v3393
        %v3395 = vpop.f32.mrb[0].mxu0
        %v3396 = vpop.f32.mrb[0].mxu0
        %v3397 = vadd.f32 %v3021, %v3396
        %v3398 = vpop.f32.mrb[0].mxu0
        %3399 = vmatprep.mubr.bf16.mxu0 %v2915
        %3400 = vmatmul.mubr.bf16.gmra.mrb[0].mxu0 %v2914
        %v3401 = vpop.f32.mrb[0].mxu0
        %v3402 = vadd.f32 %v3021, %v3401
        %v3403 = vpop.f32.mrb[0].mxu0
        %v3404 = vpop.f32.mrb[0].mxu0
        %v3405 = vadd.f32 %v3021, %v3404
        %v3406 = vpop.f32.mrb[0].mxu0
        %3407 = vmatprep.mubr.bf16.mxu0 %v2920
        %3408 = vmatmul.mubr.bf16.gmra.mrb[0].mxu0 %v2919
        %v3409 = vpop.f32.mrb[0].mxu0
        %v3410 = vadd.f32 %v3021, %v3409
        %v3411 = vpop.f32.mrb[0].mxu0
        %v3412 = vpop.f32.mrb[0].mxu0
        %v3413 = vadd.f32 %v3021, %v3412
        %v3414 = vpop.f32.mrb[0].mxu0
        %3415 = vmatprep.mubr.bf16.mxu0 %v2925
        %3416 = vmatmul.mubr.bf16.gmra.mrb[0].mxu0 %v2924
        %v3417 = vpop.f32.mrb[0].mxu0
        %v3418 = vadd.f32 %v3021, %v3417
        %v3419 = vpop.f32.mrb[0].mxu0
        %v3420 = vpop.f32.mrb[0].mxu0
        %v3421 = vadd.f32 %v3021, %v3420
        %v3422 = vpop.f32.mrb[0].mxu0
        %3423 = vmatprep.mubr.bf16.mxu0 %v2930
        %3424 = vmatmul.mubr.bf16.gmra.mrb[0].mxu0 %v2929
        %v3425 = vpop.f32.mrb[0].mxu0
        %v3426 = vadd.f32 %v3021, %v3425
        %v3427 = vpop.f32.mrb[0].mxu0
        %v3428 = vpop.f32.mrb[0].mxu0
        %v3429 = vadd.f32 %v3021, %v3428
        %v3430 = vpop.f32.mrb[0].mxu0
        %3431 = vmatprep.mubr.bf16.mxu0 %v2935
        %3432 = vmatmul.mubr.bf16.gmra.mrb[0].mxu0 %v2934
        %v3433 = vpop.f32.mrb[0].mxu0
        %v3434 = vadd.f32 %v3021, %v3433
        %v3435 = vpop.f32.mrb[0].mxu0
        %v3436 = vpop.f32.mrb[0].mxu0
        %v3437 = vadd.f32 %v3021, %v3436
        %v3438 = vpop.f32.mrb[0].mxu0
        %3439 = vmatprep.mubr.bf16.mxu0 %v2940
        %3440 = vmatmul.mubr.bf16.gmra.mrb[0].mxu0 %v2939
        %v3441 = vpop.f32.mrb[0].mxu0
        %v3442 = vadd.f32 %v3021, %v3441
        %v3443 = vpop.f32.mrb[0].mxu0
        %v3444 = vpop.f32.mrb[0].mxu0
        %v3445 = vadd.f32 %v3021, %v3444
        %v3446 = vpop.f32.mrb[0].mxu0
        %3447 = vdwg.mxu0
        %3448 = vmatprep.subr.bf16.mxu0 0
        %3449 = vmatpush1.bf16.msra.mxu0 %v3183
        %3450 = vmatprep.subr.bf16.mxu0 0
        %3451 = vmatpush1.bf16.msra.mxu0 %v3184
        %3452 = vmatprep.subr.bf16.mxu0 0
        %3453 = vmatpush1.bf16.msra.mxu0 %v3185
        %3454 = vmatprep.subr.bf16.mxu0 0
        %3455 = vmatpush1.bf16.msra.mxu0 %v3186
        %3456 = vmatprep.subr.bf16.mxu0 0
        %3457 = vmatpush1.bf16.msra.mxu0 %v3187
        %3458 = vmatprep.subr.bf16.mxu0 0
        %3459 = vmatpush1.bf16.msra.mxu0 %v3188
        %3460 = vmatprep.subr.bf16.mxu0 0
        %3461 = vmatpush1.bf16.msra.mxu0 %v3189
        %3462 = vmatprep.subr.bf16.mxu0 0
        %3463 = vmatpush1.bf16.msra.mxu0 %v3190
        %3464 = vmatprep.subr.bf16.mxu0 0
        %3465 = vmatpush1.bf16.msra.mxu0 %v3191
        %3466 = vmatprep.subr.bf16.mxu0 0
        %3467 = vmatpush1.bf16.msra.mxu0 %v3192
        %3468 = vmatprep.subr.bf16.mxu0 0
        %3469 = vmatpush1.bf16.msra.mxu0 %v3193
        %3470 = vmatprep.subr.bf16.mxu0 0
        %3471 = vmatpush1.bf16.msra.mxu0 %v3194
        %3472 = vmatprep.subr.bf16.mxu0 0
        %3473 = vmatpush1.bf16.msra.mxu0 %v3195
        %3474 = vmatprep.subr.bf16.mxu0 0
        %3475 = vmatpush1.bf16.msra.mxu0 %v3196
        %3476 = vmatprep.subr.bf16.mxu0 0
        %3477 = vmatpush1.bf16.msra.mxu0 %v3197
        %3478 = vmatprep.subr.bf16.mxu0 0
        %3479 = vmatpush1.bf16.msra.mxu0 %v3198
        %3480 = vmatprep.mubr.bf16.mxu0 %v2867
        %3481 = vmatmul.mubr.bf16.gmra.mrb[0].mxu0 %v2866
        %v3482 = vpop.f32.mrb[0].mxu0
        %v3483 = vadd.f32 %v3322, %v3482
        %v3484 = vpop.f32.mrb[0].mxu0
        %v3485 = vpop.f32.mrb[0].mxu0
        %v3486 = vadd.f32 %v3325, %v3485
        %v3487 = vpop.f32.mrb[0].mxu0
        %3488 = vmatprep.mubr.bf16.mxu0 %v2872
        %3489 = vmatmul.mubr.bf16.gmra.mrb[0].mxu0 %v2871
        %v3490 = vpop.f32.mrb[0].mxu0
        %v3491 = vadd.f32 %v3330, %v3490
        %v3492 = vpop.f32.mrb[0].mxu0
        %v3493 = vpop.f32.mrb[0].mxu0
        %v3494 = vadd.f32 %v3333, %v3493
        %v3495 = vpop.f32.mrb[0].mxu0
        %3496 = vmatprep.mubr.bf16.mxu0 %v2877
        %3497 = vmatmul.mubr.bf16.gmra.mrb[0].mxu0 %v2876
        %v3498 = vpop.f32.mrb[0].mxu0
        %v3499 = vadd.f32 %v3338, %v3498
        %v3500 = vpop.f32.mrb[0].mxu0
        %v3501 = vpop.f32.mrb[0].mxu0
        %v3502 = vadd.f32 %v3341, %v3501
        %v3503 = vpop.f32.mrb[0].mxu0
        %3504 = vmatprep.mubr.bf16.mxu0 %v2882
        %3505 = vmatmul.mubr.bf16.gmra.mrb[0].mxu0 %v2881
        %v3506 = vpop.f32.mrb[0].mxu0
        %v3507 = vadd.f32 %v3346, %v3506
        %v3508 = vpop.f32.mrb[0].mxu0
        %v3509 = vpop.f32.mrb[0].mxu0
        %v3510 = vadd.f32 %v3349, %v3509
        %v3511 = vpop.f32.mrb[0].mxu0
        %3512 = vmatprep.mubr.bf16.mxu0 %v2887
        %3513 = vmatmul.mubr.bf16.gmra.mrb[0].mxu0 %v2886
        %v3514 = vpop.f32.mrb[0].mxu0
        %v3515 = vadd.f32 %v3354, %v3514
        %v3516 = vpop.f32.mrb[0].mxu0
        %v3517 = vpop.f32.mrb[0].mxu0
        %v3518 = vadd.f32 %v3357, %v3517
        %v3519 = vpop.f32.mrb[0].mxu0
        %3520 = vmatprep.mubr.bf16.mxu0 %v2892
        %3521 = vmatmul.mubr.bf16.gmra.mrb[0].mxu0 %v2891
        %v3522 = vpop.f32.mrb[0].mxu0
        %v3523 = vadd.f32 %v3362, %v3522
        %v3524 = vpop.f32.mrb[0].mxu0
        %v3525 = vpop.f32.mrb[0].mxu0
        %v3526 = vadd.f32 %v3365, %v3525
        %v3527 = vpop.f32.mrb[0].mxu0
        %3528 = vmatprep.mubr.bf16.mxu0 %v2897
        %3529 = vmatmul.mubr.bf16.gmra.mrb[0].mxu0 %v2896
        %v3530 = vpop.f32.mrb[0].mxu0
        %v3531 = vadd.f32 %v3370, %v3530
        %v3532 = vpop.f32.mrb[0].mxu0
        %v3533 = vpop.f32.mrb[0].mxu0
        %v3534 = vadd.f32 %v3373, %v3533
        %v3535 = vpop.f32.mrb[0].mxu0
        %3536 = vmatprep.mubr.bf16.mxu0 %v2902
        %3537 = vmatmul.mubr.bf16.gmra.mrb[0].mxu0 %v2901
        %v3538 = vpop.f32.mrb[0].mxu0
        %v3539 = vadd.f32 %v3378, %v3538
        %v3540 = vpop.f32.mrb[0].mxu0
        %v3541 = vpop.f32.mrb[0].mxu0
        %v3542 = vadd.f32 %v3381, %v3541
        %v3543 = vpop.f32.mrb[0].mxu0
        %3544 = vmatprep.mubr.bf16.mxu0 %v2907
        %3545 = vmatmul.mubr.bf16.gmra.mrb[0].mxu0 %v2906
        %v3546 = vpop.f32.mrb[0].mxu0
        %v3547 = vadd.f32 %v3386, %v3546
        %v3548 = vpop.f32.mrb[0].mxu0
        %v3549 = vpop.f32.mrb[0].mxu0
        %v3550 = vadd.f32 %v3389, %v3549
        %v3551 = vpop.f32.mrb[0].mxu0
        %3552 = vmatprep.mubr.bf16.mxu0 %v2912
        %3553 = vmatmul.mubr.bf16.gmra.mrb[0].mxu0 %v2911
        %v3554 = vpop.f32.mrb[0].mxu0
        %v3555 = vadd.f32 %v3394, %v3554
        %v3556 = vpop.f32.mrb[0].mxu0
        %v3557 = vpop.f32.mrb[0].mxu0
        %v3558 = vadd.f32 %v3397, %v3557
        %v3559 = vpop.f32.mrb[0].mxu0
        %3560 = vmatprep.mubr.bf16.mxu0 %v2917
        %3561 = vmatmul.mubr.bf16.gmra.mrb[0].mxu0 %v2916
        %v3562 = vpop.f32.mrb[0].mxu0
        %v3563 = vadd.f32 %v3402, %v3562
        %v3564 = vpop.f32.mrb[0].mxu0
        %v3565 = vpop.f32.mrb[0].mxu0
        %v3566 = vadd.f32 %v3405, %v3565
        %v3567 = vpop.f32.mrb[0].mxu0
        %3568 = vmatprep.mubr.bf16.mxu0 %v2922
        %3569 = vmatmul.mubr.bf16.gmra.mrb[0].mxu0 %v2921
        %v3570 = vpop.f32.mrb[0].mxu0
        %v3571 = vadd.f32 %v3410, %v3570
        %v3572 = vpop.f32.mrb[0].mxu0
        %v3573 = vpop.f32.mrb[0].mxu0
        %v3574 = vadd.f32 %v3413, %v3573
        %v3575 = vpop.f32.mrb[0].mxu0
        %3576 = vmatprep.mubr.bf16.mxu0 %v2927
        %3577 = vmatmul.mubr.bf16.gmra.mrb[0].mxu0 %v2926
        %v3578 = vpop.f32.mrb[0].mxu0
        %v3579 = vadd.f32 %v3418, %v3578
        %v3580 = vpop.f32.mrb[0].mxu0
        %v3581 = vpop.f32.mrb[0].mxu0
        %v3582 = vadd.f32 %v3421, %v3581
        %v3583 = vpop.f32.mrb[0].mxu0
        %3584 = vmatprep.mubr.bf16.mxu0 %v2932
        %3585 = vmatmul.mubr.bf16.gmra.mrb[0].mxu0 %v2931
        %v3586 = vpop.f32.mrb[0].mxu0
        %v3587 = vadd.f32 %v3426, %v3586
        %v3588 = vpop.f32.mrb[0].mxu0
        %v3589 = vpop.f32.mrb[0].mxu0
        %v3590 = vadd.f32 %v3429, %v3589
        %v3591 = vpop.f32.mrb[0].mxu0
        %3592 = vmatprep.mubr.bf16.mxu0 %v2937
        %3593 = vmatmul.mubr.bf16.gmra.mrb[0].mxu0 %v2936
        %v3594 = vpop.f32.mrb[0].mxu0
        %v3595 = vadd.f32 %v3434, %v3594
        %v3596 = vpop.f32.mrb[0].mxu0
        %v3597 = vpop.f32.mrb[0].mxu0
        %v3598 = vadd.f32 %v3437, %v3597
        %v3599 = vpop.f32.mrb[0].mxu0
        %3600 = vmatprep.mubr.bf16.mxu0 %v2942
        %3601 = vmatmul.mubr.bf16.gmra.mrb[0].mxu0 %v2941
        %v3602 = vpop.f32.mrb[0].mxu0
        %v3603 = vadd.f32 %v3442, %v3602
        %v3604 = vpop.f32.mrb[0].mxu0
        %v3605 = vpop.f32.mrb[0].mxu0
        %v3606 = vadd.f32 %v3445, %v3605
        %v3607 = vpop.f32.mrb[0].mxu0
        %3608 = vdwg.mxu0
        %3609 = vmatprep.subr.bf16.mxu0 0
        %3610 = vmatpush1.bf16.msra.mxu0 %v3199
        %3611 = vmatprep.subr.bf16.mxu0 0
        %3612 = vmatpush1.bf16.msra.mxu0 %v3200
        %3613 = vmatprep.subr.bf16.mxu0 0
        %3614 = vmatpush1.bf16.msra.mxu0 %v3201
        %3615 = vmatprep.subr.bf16.mxu0 0
        %3616 = vmatpush1.bf16.msra.mxu0 %v3202
        %3617 = vmatprep.subr.bf16.mxu0 0
        %3618 = vmatpush1.bf16.msra.mxu0 0
        %3619 = vmatprep.subr.bf16.mxu0 0
        %3620 = vmatpush1.bf16.msra.mxu0 0
        %3621 = vmatprep.subr.bf16.mxu0 0
        %3622 = vmatpush1.bf16.msra.mxu0 0
        %3623 = vmatprep.subr.bf16.mxu0 0
        %3624 = vmatpush1.bf16.msra.mxu0 0
        %3625 = vmatprep.subr.bf16.mxu0 0
        %3626 = vmatpush1.bf16.msra.mxu0 0
        %3627 = vmatprep.subr.bf16.mxu0 0
        %3628 = vmatpush1.bf16.msra.mxu0 0
        %3629 = vmatprep.subr.bf16.mxu0 0
        %3630 = vmatpush1.bf16.msra.mxu0 0
        %3631 = vmatprep.subr.bf16.mxu0 0
        %3632 = vmatpush1.bf16.msra.mxu0 0
        %3633 = vmatprep.subr.bf16.mxu0 0
        %3634 = vmatpush1.bf16.msra.mxu0 0
        %3635 = vmatprep.subr.bf16.mxu0 0
        %3636 = vmatpush1.bf16.msra.mxu0 0
        %3637 = vmatprep.subr.bf16.mxu0 0
        %3638 = vmatpush1.bf16.msra.mxu0 0
        %3639 = vmatprep.subr.bf16.mxu0 0
        %3640 = vmatpush1.bf16.msra.mxu0 0
        %3641 = vmatprep.mubr.bf16.mxu0 0
        %3642 = vmatmul.mubr.bf16.gmra.mrb[0].mxu0 %v3240
        %v3643 = vpop.f32.mrb[0].mxu0
        %v3644 = vadd.f32 %v3483, %v3643
        %v3645 = vpop.f32.mrb[0].mxu0
        %v3646 = vpop.f32.mrb[0].mxu0
        %v3647 = vadd.f32 %v3486, %v3646
        %v3648 = vpop.f32.mrb[0].mxu0
        %3649 = vmatprep.mubr.bf16.mxu0 0
        %3650 = vmatmul.mubr.bf16.gmra.mrb[0].mxu0 %v3243
        %v3651 = vpop.f32.mrb[0].mxu0
        %v3652 = vadd.f32 %v3491, %v3651
        %v3653 = vpop.f32.mrb[0].mxu0
        %v3654 = vpop.f32.mrb[0].mxu0
        %v3655 = vadd.f32 %v3494, %v3654
        %v3656 = vpop.f32.mrb[0].mxu0
        %3657 = vmatprep.mubr.bf16.mxu0 0
        %3658 = vmatmul.mubr.bf16.gmra.mrb[0].mxu0 %v3246
        %v3659 = vpop.f32.mrb[0].mxu0
        %v3660 = vadd.f32 %v3499, %v3659
        %v3661 = vpop.f32.mrb[0].mxu0
        %v3662 = vpop.f32.mrb[0].mxu0
        %v3663 = vadd.f32 %v3502, %v3662
        %v3664 = vpop.f32.mrb[0].mxu0
        %3665 = vmatprep.mubr.bf16.mxu0 0
        %3666 = vmatmul.mubr.bf16.gmra.mrb[0].mxu0 %v3249
        %v3667 = vpop.f32.mrb[0].mxu0
        %v3668 = vadd.f32 %v3507, %v3667
        %v3669 = vpop.f32.mrb[0].mxu0
        %v3670 = vpop.f32.mrb[0].mxu0
        %v3671 = vadd.f32 %v3510, %v3670
        %v3672 = vpop.f32.mrb[0].mxu0
        %3673 = vmatprep.mubr.bf16.mxu0 0
        %3674 = vmatmul.mubr.bf16.gmra.mrb[0].mxu0 %v3252
        %v3675 = vpop.f32.mrb[0].mxu0
        %v3676 = vadd.f32 %v3515, %v3675
        %v3677 = vpop.f32.mrb[0].mxu0
        %v3678 = vpop.f32.mrb[0].mxu0
        %v3679 = vadd.f32 %v3518, %v3678
        %v3680 = vpop.f32.mrb[0].mxu0
        %3681 = vmatprep.mubr.bf16.mxu0 0
        %3682 = vmatmul.mubr.bf16.gmra.mrb[0].mxu0 %v3255
        %v3683 = vpop.f32.mrb[0].mxu0
        %v3684 = vadd.f32 %v3523, %v3683
        %v3685 = vpop.f32.mrb[0].mxu0
        %v3686 = vpop.f32.mrb[0].mxu0
        %v3687 = vadd.f32 %v3526, %v3686
        %v3688 = vpop.f32.mrb[0].mxu0
        %3689 = vmatprep.mubr.bf16.mxu0 0
        %3690 = vmatmul.mubr.bf16.gmra.mrb[0].mxu0 %v3258
        %v3691 = vpop.f32.mrb[0].mxu0
        %v3692 = vadd.f32 %v3531, %v3691
        %v3693 = vpop.f32.mrb[0].mxu0
        %v3694 = vpop.f32.mrb[0].mxu0
        %v3695 = vadd.f32 %v3534, %v3694
        %v3696 = vpop.f32.mrb[0].mxu0
        %3697 = vmatprep.mubr.bf16.mxu0 0
        %3698 = vmatmul.mubr.bf16.gmra.mrb[0].mxu0 %v3261
        %v3699 = vpop.f32.mrb[0].mxu0
        %v3700 = vadd.f32 %v3539, %v3699
        %v3701 = vpop.f32.mrb[0].mxu0
        %v3702 = vpop.f32.mrb[0].mxu0
        %v3703 = vadd.f32 %v3542, %v3702
        %v3704 = vpop.f32.mrb[0].mxu0
        %3705 = vmatprep.mubr.bf16.mxu0 0
        %3706 = vmatmul.mubr.bf16.gmra.mrb[0].mxu0 %v3264
        %v3707 = vpop.f32.mrb[0].mxu0
        %v3708 = vadd.f32 %v3547, %v3707
        %v3709 = vpop.f32.mrb[0].mxu0
        %v3710 = vpop.f32.mrb[0].mxu0
        %v3711 = vadd.f32 %v3550, %v3710
        %v3712 = vpop.f32.mrb[0].mxu0
        %3713 = vmatprep.mubr.bf16.mxu0 0
        %3714 = vmatmul.mubr.bf16.gmra.mrb[0].mxu0 %v3267
        %v3715 = vpop.f32.mrb[0].mxu0
        %v3716 = vadd.f32 %v3555, %v3715
        %v3717 = vpop.f32.mrb[0].mxu0
        %v3718 = vpop.f32.mrb[0].mxu0
        %v3719 = vadd.f32 %v3558, %v3718
        %v3720 = vpop.f32.mrb[0].mxu0
        %3721 = vmatprep.mubr.bf16.mxu0 0
        %3722 = vmatmul.mubr.bf16.gmra.mrb[0].mxu0 %v3270
        %v3723 = vpop.f32.mrb[0].mxu0
        %v3724 = vadd.f32 %v3563, %v3723
        %v3725 = vpop.f32.mrb[0].mxu0
        %v3726 = vpop.f32.mrb[0].mxu0
        %v3727 = vadd.f32 %v3566, %v3726
        %v3728 = vpop.f32.mrb[0].mxu0
        %3729 = vmatprep.mubr.bf16.mxu0 0
        %3730 = vmatmul.mubr.bf16.gmra.mrb[0].mxu0 %v3273
        %v3731 = vpop.f32.mrb[0].mxu0
        %v3732 = vadd.f32 %v3571, %v3731
        %v3733 = vpop.f32.mrb[0].mxu0
        %v3734 = vpop.f32.mrb[0].mxu0
        %v3735 = vadd.f32 %v3574, %v3734
        %v3736 = vpop.f32.mrb[0].mxu0
        %3737 = vmatprep.mubr.bf16.mxu0 0
        %3738 = vmatmul.mubr.bf16.gmra.mrb[0].mxu0 %v3276
        %v3739 = vpop.f32.mrb[0].mxu0
        %v3740 = vadd.f32 %v3579, %v3739
        %v3741 = vpop.f32.mrb[0].mxu0
        %v3742 = vpop.f32.mrb[0].mxu0
        %v3743 = vadd.f32 %v3582, %v3742
        %v3744 = vpop.f32.mrb[0].mxu0
        %3745 = vmatprep.mubr.bf16.mxu0 0
        %3746 = vmatmul.mubr.bf16.gmra.mrb[0].mxu0 %v3279
        %v3747 = vpop.f32.mrb[0].mxu0
        %v3748 = vadd.f32 %v3587, %v3747
        %v3749 = vpop.f32.mrb[0].mxu0
        %v3750 = vpop.f32.mrb[0].mxu0
        %v3751 = vadd.f32 %v3590, %v3750
        %v3752 = vpop.f32.mrb[0].mxu0
        %3753 = vmatprep.mubr.bf16.mxu0 0
        %3754 = vmatmul.mubr.bf16.gmra.mrb[0].mxu0 %v3282
        %v3755 = vpop.f32.mrb[0].mxu0
        %v3756 = vadd.f32 %v3595, %v3755
        %v3757 = vpop.f32.mrb[0].mxu0
        %v3758 = vpop.f32.mrb[0].mxu0
        %v3759 = vadd.f32 %v3598, %v3758
        %v3760 = vpop.f32.mrb[0].mxu0
        %3761 = vmatprep.mubr.bf16.mxu0 0
        %3762 = vmatmul.mubr.bf16.gmra.mrb[0].mxu0 %v3285
        %v3763 = vpop.f32.mrb[0].mxu0
        %v3764 = vadd.f32 %v3603, %v3763
        %v3765 = vpop.f32.mrb[0].mxu0
        %v3766 = vpop.f32.mrb[0].mxu0
        %v3767 = vadd.f32 %v3606, %v3766
        %v3768 = vpop.f32.mrb[0].mxu0
        %3769 = vdwg.mxu0
        %s3770 = scalar_lea.vmem %s250, 24
        %v3771 = vld [vmem:[%s3770 + $0x1] sm:$0xff]
        %v3772 = vld [vmem:[%s3770 + $0x9] sm:$0xff]
        %v3773 = vld [vmem:[%s3770 + $0x19] sm:$0xff]
        %v3774 = vld [vmem:[%s3770 + $0x21] sm:$0xff]
        %v3775 = vld [vmem:[%s3770 + $0x31] sm:$0xff]
        %v3776 = vld [vmem:[%s3770 + $0x39] sm:$0xff]
        %v3777 = vld [vmem:[%s3770 + $0x49] sm:$0xff]
        %v3778 = vld [vmem:[%s3770 + $0x51] sm:$0xff]
        %v3779 = vld [vmem:[%s3770 + $0x61] sm:$0xff]
        %v3780 = vld [vmem:[%s3770 + $0x69] sm:$0xff]
        %v3781 = vld [vmem:[%s3770 + $0x79] sm:$0xff]
        %v3782 = vld [vmem:[%s3770 + $0x81] sm:$0xff]
        %v3783 = vld [vmem:[%s3770 + $0x91] sm:$0xff]
        %v3784 = vld [vmem:[%s3770 + $0x99] sm:$0xff]
        %v3785 = vld [vmem:[%s3770 + $0xa9] sm:$0xff]
        %v3786 = vld [vmem:[%s3770 + $0xb1] sm:$0xff]
        %v3787 = vld [vmem:[%s3770 + $0xc1] sm:$0xff]
        %v3788 = vld [vmem:[%s3770 + $0xc9] sm:$0xff]
        %v3789 = vld [vmem:[%s3770 + $0xd9] sm:$0xff]
        %v3790 = vld [vmem:[%s3770 + $0xe1] sm:$0xff]
        %v3791 = vld [vmem:[%s3770 + $0xf1] sm:$0xff]
        %v3792 = vld [vmem:[%s3770 + $0xf9] sm:$0xff]
        %v3793 = vld [vmem:[%s3770 + $0x109] sm:$0xff]
        %v3794 = vld [vmem:[%s3770 + $0x111] sm:$0xff]
        %v3795 = vld [vmem:[%s3770 + $0x121] sm:$0xff]
        %v3796 = vld [vmem:[%s3770 + $0x129] sm:$0xff]
        %v3797 = vld [vmem:[%s3770 + $0x139] sm:$0xff]
        %v3798 = vld [vmem:[%s3770 + $0x141] sm:$0xff]
        %v3799 = vld [vmem:[%s3770 + $0x151] sm:$0xff]
        %v3800 = vld [vmem:[%s3770 + $0x159] sm:$0xff]
        %v3801 = vld [vmem:[%s3770 + $0x169] sm:$0xff]
        %v3802 = vld [vmem:[%s3770 + $0x171] sm:$0xff]
        %v3803 = vadd.f32 %v3644, %v3771
        %v3804 = vadd.f32 %v3647, %v3772
        %v3805 = vadd.f32 %v3652, %v3773
        %v3806 = vadd.f32 %v3655, %v3774
        %v3807 = vadd.f32 %v3660, %v3775
        %v3808 = vadd.f32 %v3663, %v3776
        %v3809 = vadd.f32 %v3668, %v3777
        %v3810 = vadd.f32 %v3671, %v3778
        %v3811 = vadd.f32 %v3676, %v3779
        %v3812 = vadd.f32 %v3679, %v3780
        %v3813 = vadd.f32 %v3684, %v3781
        %v3814 = vadd.f32 %v3687, %v3782
        %v3815 = vadd.f32 %v3692, %v3783
        %v3816 = vadd.f32 %v3695, %v3784
        %v3817 = vadd.f32 %v3700, %v3785
        %v3818 = vadd.f32 %v3703, %v3786
        %v3819 = vadd.f32 %v3708, %v3787
        %v3820 = vadd.f32 %v3711, %v3788
        %v3821 = vadd.f32 %v3716, %v3789
        %v3822 = vadd.f32 %v3719, %v3790
        %v3823 = vadd.f32 %v3724, %v3791
        %v3824 = vadd.f32 %v3727, %v3792
        %v3825 = vadd.f32 %v3732, %v3793
        %v3826 = vadd.f32 %v3735, %v3794
        %v3827 = vadd.f32 %v3740, %v3795
        %v3828 = vadd.f32 %v3743, %v3796
        %v3829 = vadd.f32 %v3748, %v3797
        %v3830 = vadd.f32 %v3751, %v3798
        %v3831 = vadd.f32 %v3756, %v3799
        %v3832 = vadd.f32 %v3759, %v3800
        %v3833 = vadd.f32 %v3764, %v3801
        %v3834 = vadd.f32 %v3767, %v3802
        %3835 = vst.msk [vmem:[%s245] sm:$0xff] %vm322, %v3803
        %3836 = vst.msk [vmem:[%s245 + $0x8] sm:$0xff] %vm322, %v3804
        %3837 = vst.msk [vmem:[%s245 + $0x10] sm:$0xff] %vm322, %v3805
        %3838 = vst.msk [vmem:[%s245 + $0x18] sm:$0xff] %vm322, %v3806
        %3839 = vst.msk [vmem:[%s245 + $0x20] sm:$0xff] %vm322, %v3807
        %3840 = vst.msk [vmem:[%s245 + $0x28] sm:$0xff] %vm322, %v3808
        %3841 = vst.msk [vmem:[%s245 + $0x30] sm:$0xff] %vm322, %v3809
        %3842 = vst.msk [vmem:[%s245 + $0x38] sm:$0xff] %vm322, %v3810
        %3843 = vst.msk [vmem:[%s245 + $0x40] sm:$0xff] %vm322, %v3811
        %3844 = vst.msk [vmem:[%s245 + $0x48] sm:$0xff] %vm322, %v3812
        %3845 = vst.msk [vmem:[%s245 + $0x50] sm:$0xff] %vm322, %v3813
        %3846 = vst.msk [vmem:[%s245 + $0x58] sm:$0xff] %vm322, %v3814
        %3847 = vst.msk [vmem:[%s245 + $0x60] sm:$0xff] %vm322, %v3815
        %3848 = vst.msk [vmem:[%s245 + $0x68] sm:$0xff] %vm322, %v3816
        %3849 = vst.msk [vmem:[%s245 + $0x70] sm:$0xff] %vm322, %v3817
        %3850 = vst.msk [vmem:[%s245 + $0x78] sm:$0xff] %vm322, %v3818
        %3851 = vst.msk [vmem:[%s245 + $0x80] sm:$0xff] %vm322, %v3819
        %3852 = vst.msk [vmem:[%s245 + $0x88] sm:$0xff] %vm322, %v3820
        %3853 = vst.msk [vmem:[%s245 + $0x90] sm:$0xff] %vm322, %v3821
        %3854 = vst.msk [vmem:[%s245 + $0x98] sm:$0xff] %vm322, %v3822
        %3855 = vst.msk [vmem:[%s245 + $0xa0] sm:$0xff] %vm322, %v3823
        %3856 = vst.msk [vmem:[%s245 + $0xa8] sm:$0xff] %vm322, %v3824
        %3857 = vst.msk [vmem:[%s245 + $0xb0] sm:$0xff] %vm322, %v3825
        %3858 = vst.msk [vmem:[%s245 + $0xb8] sm:$0xff] %vm322, %v3826
        %3859 = vst.msk [vmem:[%s245 + $0xc0] sm:$0xff] %vm322, %v3827
        %3860 = vst.msk [vmem:[%s245 + $0xc8] sm:$0xff] %vm322, %v3828
        %3861 = vst.msk [vmem:[%s245 + $0xd0] sm:$0xff] %vm322, %v3829
        %3862 = vst.msk [vmem:[%s245 + $0xd8] sm:$0xff] %vm322, %v3830
        %3863 = vst.msk [vmem:[%s245 + $0xe0] sm:$0xff] %vm322, %v3831
        %3864 = vst.msk [vmem:[%s245 + $0xe8] sm:$0xff] %vm322, %v3832
        %3865 = vst.msk [vmem:[%s245 + $0xf0] sm:$0xff] %vm322, %v3833
        %3866 = vst.msk [vmem:[%s245 + $0xf8] sm:$0xff] %vm322, %v3834
        %s3867 = sand.u32 %s160, 1
        %s3868 = scalar_lea.sflag [#allocation6], %s3867
        %s3869 = sand.u32 %s160, 1
        %s3870 = smul.addr %s3869, 256
        %s3871 = scalar_lea.vmem [#allocation5], %s3870
        // Predicated region
        $region45: #{tpu_custom_call.1} parent=43 // pred_check
          %p3872 = pneg %p170
        $region46: #{tpu_custom_call.1} parent=43 // pred_check_branch
          %3874 = sbr.rel (%p3872) target = $region48
        $region47: #{tpu_custom_call.1} parent=43 // pred_region
          %s3876 = ssub.s32 4096, 4096
          %3877 = vsyncadd %s3868, %s3876
          %s3878 = smul.addr %s21, 32
          %s3879 = smul.addr %s3878, 128
          %s3880 = scalar_lea.hbm %s6, %s3879
          %s3881 = sshll.u32 %s3871, 4
          %s3882 = int_to_ptr.vmem [resolvable:$true] %s3881
          %3887 = dma.vmem_to_hbm [thread:$0]  %s3882, 4096, %s3880, %s3868, 128, 128, 8
        $region48: #{tpu_custom_call.1} parent=43 // pred_fallthru
          _
      $region44: #{tpu_custom_call.1} parent=5 // pred_fallthru
        _
      %p3888 = scmp.le.s32.totalorder 2, %s16
      // Predicated region
      $region49: #{tpu_custom_call.1} parent=5 // pred_check
        %p3889 = pneg %p3888
      $region50: #{tpu_custom_call.1} parent=5 // pred_check_branch
        %3891 = sbr.rel (%p3889) target = $region52
      $region51: #{tpu_custom_call.1} parent=5 // pred_region
        %s3892 = ssub.s32 %s16, 2
        // Predicated region
        $region53: #{tpu_custom_call.1} parent=51 // pred_check
          %p3893 = pneg %p176
        $region54: #{tpu_custom_call.1} parent=51 // pred_check_branch
          %3895 = sbr.rel (%p3893) target = $region56
        $region55: #{tpu_custom_call.1} parent=51 // pred_region
          %s3896 = sand.u32 %s161, 1
          %s3897 = scalar_lea.sflag [#allocation6], %s3896
          %s3898 = sand.u32 %s161, 1
          %s3899 = smul.addr %s3898, 256
          %s3900 = scalar_lea.vmem [#allocation5], %s3899
          %3901 = dma.done %s3897, 4096
        $region56: #{tpu_custom_call.1} parent=51 // pred_fallthru
          _
      $region52: #{tpu_custom_call.1} parent=5 // pred_fallthru
        _
    $region6: #{tpu_custom_call.1} parent=1 // loop_footer
      %s20 = sadd.s32 1, %s16
    $region7: #{tpu_custom_call.1} parent=1 // loop_footer_branch
      %15 = sbr.rel target = $region3
    $region8: #{tpu_custom_call.1} parent=1 // loop_exit
      _
    %3902 = vsyncpa [#allocation6], 1
    %s3903 = scalar_lea.sflag [#allocation6], 1
    %3904 = vsyncpa %s3903, 1

</llo_original>
